<compile_context>
chip_gen: v6e
topology: v6e:2x2x1
jax: 0.10.0
libtpu: 0.0.40
codegen_flags: <defaults>
</compile_context>

<pallas_src>
import functools

import jax
import jax.numpy as jnp
from jax.experimental import pallas as pl
from jax.experimental.pallas import tpu as pltpu


def _round_up(v, m):
    return (v + m - 1) // m * m


# ----------------------------------------------------------------------------
# Fused C3 kernel body (one grid step == one batch image)
# ----------------------------------------------------------------------------
def _c3_fused_kernel(
        x_ref,
        w1_ref, s1_ref, b1_ref,
        w2_ref, s2_ref, b2_ref,
        wb1_ref, sb1_ref, bb1_ref,
        wb2_ref, sb2_ref, bb2_ref,
        w3h_ref, w3y_ref, s3_ref, b3_ref,
        o_ref,
        tpad_ref,
        *, n, H, W, pad_rows, shortcut):
    f32 = jnp.float32
    bf16 = jnp.bfloat16
    HW = H * W
    c_ = w1_ref.shape[-1]

    def bn_silu(acc, s, b):           # f32 epilogue (v5e-safe), sigmoid on EUP
        y = acc * s + b
        return y * jax.nn.sigmoid(y)

    x = x_ref[0].astype(bf16)                                     # (HW, C1)

    # cv1 / cv2: a single read of x feeds both 1x1 convs.
    y1 = bn_silu(jnp.dot(x, w1_ref[...], preferred_element_type=f32),
                 s1_ref[...], b1_ref[...])                        # (HW, c_) f32
    # y2 only feeds the final cv3 matmul -> keep it live in bf16.
    y2 = bn_silu(jnp.dot(x, w2_ref[...], preferred_element_type=f32),
                 s2_ref[...], b2_ref[...]).astype(bf16)           # (HW, c_) bf16

    # Column-validity masks for the 3x3 taps in the flat row-major layout.
    col = jax.lax.broadcasted_iota(jnp.int32, (HW, 1), 0) % W
    mask_l = (col > 0).astype(f32)          # taps with dw == 0
    mask_r = (col < W - 1).astype(f32)      # taps with dw == 2

    # Zero only the halo rows; the interior is rewritten for every bottleneck.
    zeros_halo = jnp.zeros((pad_rows, c_), f32)
    tpad_ref[pl.ds(0, pad_rows), :] = zeros_halo
    tpad_ref[pl.ds(pad_rows + HW, pad_rows), :] = zeros_halo

    h = y1
    for i in range(n):
        # Bottleneck cv1 (1x1).
        t = bn_silu(jnp.dot(h.astype(bf16), wb1_ref[i],
                            preferred_element_type=f32),
                    sb1_ref[i], bb1_ref[i])                       # (HW, c_)

        # Bottleneck cv2 (3x3, stride 1, pad 1): 9 shifted matmuls against a
        # flat zero-padded VMEM slab -- the im2col tensor never hits HBM.
        # The column mask only depends on dw, so accumulate per dw-group and
        # mask each group once (2 masked multiplies per bottleneck, not 6).
        tpad_ref[pl.ds(pad_rows, HW), :] = t
        acc = jnp.zeros((HW, c_), f32)
        for dw in range(3):
            part = jnp.zeros((HW, c_), f32)
            for dh in range(3):
                start = pad_rows - (W + 1) + dh * W + dw          # static
                tap = tpad_ref[pl.ds(start, HW), :].astype(bf16)
                part = part + jnp.dot(tap, wb2_ref[9 * i + 3 * dh + dw],
                                      preferred_element_type=f32)
            if dw == 0:
                part = part * mask_l
            elif dw == 2:
                part = part * mask_r
            acc = acc + part
        y = bn_silu(acc, sb2_ref[i], bb2_ref[i])
        h = (h + y) if shortcut else y

    # cv3 on concat([h, y2]) as a split-K matmul (no concat materialized).
    out = bn_silu(jnp.dot(h.astype(bf16), w3h_ref[...],
                          preferred_element_type=f32)
                  + jnp.dot(y2, w3y_ref[...],
                            preferred_element_type=f32),
                  s3_ref[...], b3_ref[...])
    o_ref[0] = out.astype(o_ref.dtype)


# ----------------------------------------------------------------------------
# Parameter prep: fold BN, reshape to matmul form, cast weights to bf16
# ----------------------------------------------------------------------------
def _prep_weights(params):
    w1, s1, b1 = params["cv1"]
    w2, s2, b2 = params["cv2"]
    w3, s3, b3 = params["cv3"]
    c_ = w1.shape[-1]
    c2 = w3.shape[-1]
    bf16 = jnp.bfloat16

    w3m = w3.reshape(-1, c2)                    # (2*c_, c2)
    prep = {
        "w1": w1.reshape(-1, c_).astype(bf16),
        "s1": s1.reshape(1, c_), "b1": b1.reshape(1, c_),
        "w2": w2.reshape(-1, c_).astype(bf16),
        "s2": s2.reshape(1, c_), "b2": b2.reshape(1, c_),
        "wb1": jnp.stack([bp["cv1"][0].reshape(c_, c_)
                          for bp in params["m"]]).astype(bf16),          # (n,c_,c_)
        "sb1": jnp.stack([bp["cv1"][1].reshape(1, c_) for bp in params["m"]]),
        "bb1": jnp.stack([bp["cv1"][2].reshape(1, c_) for bp in params["m"]]),
        "wb2": jnp.concatenate([bp["cv2"][0].reshape(9, c_, c_)
                                for bp in params["m"]], axis=0).astype(bf16),  # (9n,c_,c_)
        "sb2": jnp.stack([bp["cv2"][1].reshape(1, c_) for bp in params["m"]]),
        "bb2": jnp.stack([bp["cv2"][2].reshape(1, c_) for bp in params["m"]]),
        "w3h": w3m[:c_].astype(bf16),           # multiplies h  (first half of concat)
        "w3y": w3m[c_:].astype(bf16),           # multiplies y2 (second half of concat)
        "s3": s3.reshape(1, c2), "b3": b3.reshape(1, c2),
    }
    return prep, c_, c2, len(params["m"])


_ARG_ORDER = ("w1", "s1", "b1", "w2", "s2", "b2",
              "wb1", "sb1", "bb1", "wb2", "sb2", "bb2",
              "w3h", "w3y", "s3", "b3")

_CONST_INDEX_MAPS = {2: lambda b: (0, 0), 3: lambda b: (0, 0, 0)}


# ----------------------------------------------------------------------------
# C3 forward (NCHW in / NCHW out, like PyTorch)
# ----------------------------------------------------------------------------
def c3_forward(x_nchw, params, shortcut=True):
    N, C1, H, W = x_nchw.shape
    HW = H * W
    prep, c_, c2, n = _prep_weights(params)
    args = [prep[k] for k in _ARG_ORDER]

    x = jnp.transpose(x_nchw, (0, 2, 3, 1)).reshape(N, HW, C1)
    pad_rows = _round_up(W + 1, 8)              # sublane-aligned interior offset

    in_specs = [pl.BlockSpec((1, HW, C1), lambda b: (b, 0, 0))]
    in_specs += [pl.BlockSpec(a.shape, _CONST_INDEX_MAPS[a.ndim]) for a in args]
    out_spec = pl.BlockSpec((1, HW, c2), lambda b: (b, 0, 0))

    # VMEM budget: double-buffered in/out blocks + weights + scratch + large
    # live activation values.
    est = 2 * (HW * C1 * 4 + HW * c2 * 4
               + sum(int(a.size) * a.dtype.itemsize for a in args))
    est += (HW + 2 * pad_rows) * c_ * 4
    est += 6 * HW * max(c_, c2) * 4
    vmem_limit = int(min(64 * 2**20, max(4 * 2**20, 2 * est)))

    kernel = functools.partial(_c3_fused_kernel, n=n, H=H, W=W,
                               pad_rows=pad_rows, shortcut=shortcut)

    out = pl.pallas_call(
        kernel,
        out_shape=jax.ShapeDtypeStruct((N, HW, c2), x.dtype),
        grid_spec=pltpu.PrefetchScalarGridSpec(
            num_scalar_prefetch=0,
            grid=(N,),
            in_specs=in_specs,
            out_specs=out_spec,
            scratch_shapes=[pltpu.VMEM((HW + 2 * pad_rows, c_), jnp.float32)],
        ),
        compiler_params=pltpu.CompilerParams(
            dimension_semantics=("parallel",),
            vmem_limit_bytes=vmem_limit),
    )(x, *args)

    return jnp.transpose(out.reshape(N, H, W, c2), (0, 3, 1, 2))


# ----------------------------------------------------------------------------
# Deterministic parameter construction (BN folded into scale/bias)
# ----------------------------------------------------------------------------
def _make_conv_params(key, cin, cout, k):
    kw_, kg, kb, km, kv = jax.random.split(key, 5)
    weight = 0.1 * jax.random.normal(kw_, (k, k, cin, cout), jnp.float32)
    gamma = jax.random.uniform(kg, (cout,), jnp.float32, 0.5, 1.5)
    beta = 0.1 * jax.random.normal(kb, (cout,), jnp.float32)
    mean = 0.1 * jax.random.normal(km, (cout,), jnp.float32)
    var = jax.random.uniform(kv, (cout,), jnp.float32, 0.5, 1.5)
    eps = 1e-3  # matches nn.BatchNorm2d(eps=0.001)
    scale = gamma / jnp.sqrt(var + eps)
    bias = beta - mean * scale
    return weight, scale, bias


def make_c3_params(key, c1, c2, n=1, e=0.5):
    c_ = int(c2 * e)
    keys = jax.random.split(key, 3 + 2 * n)
    params = {
        "cv1": _make_conv_params(keys[0], c1, c_, 1),
        "cv2": _make_conv_params(keys[1], c1, c_, 1),
        "cv3": _make_conv_params(keys[2], 2 * c_, c2, 1),
        "m": [],
    }
    for i in range(n):
        params["m"].append({
            # Bottleneck(c_, c_, e=1.0): cv1 is 1x1 c_->c_, cv2 is 3x3 c_->c_
            "cv1": _make_conv_params(keys[3 + 2 * i], c_, c_, 1),
            "cv2": _make_conv_params(keys[4 + 2 * i], c_, c_, 3),
        })
    return params


# ----------------------------------------------------------------------------
# Pure-JAX reference (silent correctness check)
# ----------------------------------------------------------------------------
def _ref_conv_bn_silu(x, w, scale, bias, pad):
    y = jax.lax.conv_general_dilated(
        x, w, window_strides=(1, 1), padding=[(pad, pad), (pad, pad)],
        dimension_numbers=("NHWC", "HWIO", "NHWC"))
    y = y * scale + bias
    return y * jax.nn.sigmoid(y)


def _ref_c3(x_nchw, params, shortcut=True):
    x = jnp.transpose(x_nchw, (0, 2, 3, 1))
    y1 = _ref_conv_bn_silu(x, *params["cv1"], pad=0)
    y2 = _ref_conv_bn_silu(x, *params["cv2"], pad=0)
    h = y1
    for bp in params["m"]:
        t = _ref_conv_bn_silu(h, *bp["cv1"], pad=0)
        y = _ref_conv_bn_silu(t, *bp["cv2"], pad=1)
        h = h + y if shortcut else y
    cat = jnp.concatenate([h, y2], axis=-1)
    out = _ref_conv_bn_silu(cat, *params["cv3"], pad=0)
    return jnp.transpose(out, (0, 3, 1, 2))


if __name__ == "__main__":
    key = jax.random.PRNGKey(0)
    k_x, k_p = jax.random.split(key)

    N, C1, H, W = 2, 4, 16, 16      # small NCHW input, like the PyTorch module
    C2, n_blocks = 8, 1

    x = jax.random.normal(k_x, (N, C1, H, W), jnp.float32)
    params = make_c3_params(k_p, C1, C2, n=n_blocks, e=0.5)

    fwd = jax.jit(c3_forward, static_argnames=("shortcut",))
    out = jax.block_until_ready(fwd(x, params))
    assert out.shape == (N, C2, H, W)

    ref = jax.block_until_ready(_ref_c3(x, params))
    assert jnp.allclose(out, ref, rtol=3e-2, atol=3e-2), "mismatch vs reference"

    print("KERNEL_OK")
</pallas_src>

<mosaic_0001>
module attributes {stable_mosaic.version = 11 : i64} {
  func.func @_c3_fused_kernel(%arg0: i32, %arg1: memref<1x256x4xf32, #tpu.memory_space<vmem>>, %arg2: memref<4x4xbf16, #tpu.memory_space<vmem>>, %arg3: memref<1x4xf32, #tpu.memory_space<vmem>>, %arg4: memref<1x4xf32, #tpu.memory_space<vmem>>, %arg5: memref<4x4xbf16, #tpu.memory_space<vmem>>, %arg6: memref<1x4xf32, #tpu.memory_space<vmem>>, %arg7: memref<1x4xf32, #tpu.memory_space<vmem>>, %arg8: memref<1x4x4xbf16, #tpu.memory_space<vmem>>, %arg9: memref<1x1x4xf32, #tpu.memory_space<vmem>>, %arg10: memref<1x1x4xf32, #tpu.memory_space<vmem>>, %arg11: memref<9x4x4xbf16, #tpu.memory_space<vmem>>, %arg12: memref<1x1x4xf32, #tpu.memory_space<vmem>>, %arg13: memref<1x1x4xf32, #tpu.memory_space<vmem>>, %arg14: memref<4x8xbf16, #tpu.memory_space<vmem>>, %arg15: memref<4x8xbf16, #tpu.memory_space<vmem>>, %arg16: memref<1x8xf32, #tpu.memory_space<vmem>>, %arg17: memref<1x8xf32, #tpu.memory_space<vmem>>, %arg18: memref<1x256x8xf32, #tpu.memory_space<vmem>>, %arg19: memref<304x4xf32, #tpu.memory_space<vmem>>) attributes {dimension_semantics = [#tpu.dimension_semantics<parallel>], iteration_bounds = array<i64: 2>, scalar_prefetch = 0 : i64, scratch_operands = 1 : i64, tpu.core_type = #tpu.core_type<tc>, window_params = [{transform_indices = @transform_0, window_bounds = array<i64: 1, 256, 4>}, {pipeline_mode = #tpu.pipeline_mode<synchronous>, transform_indices = @transform_1, window_bounds = array<i64: 4, 4>}, {pipeline_mode = #tpu.pipeline_mode<synchronous>, transform_indices = @transform_2, window_bounds = array<i64: 1, 4>}, {pipeline_mode = #tpu.pipeline_mode<synchronous>, transform_indices = @transform_3, window_bounds = array<i64: 1, 4>}, {pipeline_mode = #tpu.pipeline_mode<synchronous>, transform_indices = @transform_4, window_bounds = array<i64: 4, 4>}, {pipeline_mode = #tpu.pipeline_mode<synchronous>, transform_indices = @transform_5, window_bounds = array<i64: 1, 4>}, {pipeline_mode = #tpu.pipeline_mode<synchronous>, transform_indices = @transform_6, window_bounds = array<i64: 1, 4>}, {pipeline_mode = #tpu.pipeline_mode<synchronous>, transform_indices = @transform_7, window_bounds = array<i64: 1, 4, 4>}, {pipeline_mode = #tpu.pipeline_mode<synchronous>, transform_indices = @transform_8, window_bounds = array<i64: 1, 1, 4>}, {pipeline_mode = #tpu.pipeline_mode<synchronous>, transform_indices = @transform_9, window_bounds = array<i64: 1, 1, 4>}, {pipeline_mode = #tpu.pipeline_mode<synchronous>, transform_indices = @transform_10, window_bounds = array<i64: 9, 4, 4>}, {pipeline_mode = #tpu.pipeline_mode<synchronous>, transform_indices = @transform_11, window_bounds = array<i64: 1, 1, 4>}, {pipeline_mode = #tpu.pipeline_mode<synchronous>, transform_indices = @transform_12, window_bounds = array<i64: 1, 1, 4>}, {pipeline_mode = #tpu.pipeline_mode<synchronous>, transform_indices = @transform_13, window_bounds = array<i64: 4, 8>}, {pipeline_mode = #tpu.pipeline_mode<synchronous>, transform_indices = @transform_14, window_bounds = array<i64: 4, 8>}, {pipeline_mode = #tpu.pipeline_mode<synchronous>, transform_indices = @transform_15, window_bounds = array<i64: 1, 8>}, {pipeline_mode = #tpu.pipeline_mode<synchronous>, transform_indices = @transform_16, window_bounds = array<i64: 1, 8>}, {transform_indices = @transform_17, window_bounds = array<i64: 1, 256, 8>}]} {
    %c0 = arith.constant 0 : index
    %c0_0 = arith.constant 0 : index
    %c0_1 = arith.constant 0 : index
    %0 = vector.load %arg1[%c0, %c0_0, %c0_1] : memref<1x256x4xf32, #tpu.memory_space<vmem>>, vector<1x256x4xf32>
    %1 = vector.shape_cast %0 : vector<1x256x4xf32> to vector<256x4xf32>
    %2 = arith.truncf %1 : vector<256x4xf32> to vector<256x4xbf16>
    %c0_2 = arith.constant 0 : index
    %c0_3 = arith.constant 0 : index
    %3 = vector.load %arg2[%c0_2, %c0_3] : memref<4x4xbf16, #tpu.memory_space<vmem>>, vector<4x4xbf16>
    %cst = arith.constant dense<0.000000e+00> : vector<256x4xf32>
    %4 = tpu.matmul %2, %3, %cst {dimension_numbers = #tpu.dot_dimension_numbers<[1], [0], [0], [1], [0, 0, 1, 1], [], []>} : vector<256x4xbf16>, vector<4x4xbf16>, vector<256x4xf32> -> vector<256x4xf32>
    %c0_4 = arith.constant 0 : index
    %c0_5 = arith.constant 0 : index
    %5 = vector.load %arg3[%c0_4, %c0_5] : memref<1x4xf32, #tpu.memory_space<vmem>>, vector<1x4xf32>
    %c0_6 = arith.constant 0 : index
    %c0_7 = arith.constant 0 : index
    %6 = vector.load %arg4[%c0_6, %c0_7] : memref<1x4xf32, #tpu.memory_space<vmem>>, vector<1x4xf32>
    %7 = vector.broadcast %5 : vector<1x4xf32> to vector<256x4xf32>
    %8 = arith.mulf %4, %7 : vector<256x4xf32>
    %9 = vector.broadcast %6 : vector<1x4xf32> to vector<256x4xf32>
    %10 = arith.addf %8, %9 : vector<256x4xf32>
    %11 = arith.negf %10 : vector<256x4xf32>
    %12 = math.exp %11 : vector<256x4xf32>
    %cst_8 = arith.constant 1.000000e+00 : f32
    %13 = vector.broadcast %cst_8 : f32 to vector<256x4xf32>
    %14 = arith.addf %13, %12 : vector<256x4xf32>
    %15 = arith.divf %13, %14 : vector<256x4xf32>
    %16 = arith.mulf %10, %15 : vector<256x4xf32>
    %c0_9 = arith.constant 0 : index
    %c0_10 = arith.constant 0 : index
    %17 = vector.load %arg5[%c0_9, %c0_10] : memref<4x4xbf16, #tpu.memory_space<vmem>>, vector<4x4xbf16>
    %cst_11 = arith.constant dense<0.000000e+00> : vector<256x4xf32>
    %18 = tpu.matmul %2, %17, %cst_11 {dimension_numbers = #tpu.dot_dimension_numbers<[1], [0], [0], [1], [0, 0, 1, 1], [], []>} : vector<256x4xbf16>, vector<4x4xbf16>, vector<256x4xf32> -> vector<256x4xf32>
    %c0_12 = arith.constant 0 : index
    %c0_13 = arith.constant 0 : index
    %19 = vector.load %arg6[%c0_12, %c0_13] : memref<1x4xf32, #tpu.memory_space<vmem>>, vector<1x4xf32>
    %c0_14 = arith.constant 0 : index
    %c0_15 = arith.constant 0 : index
    %20 = vector.load %arg7[%c0_14, %c0_15] : memref<1x4xf32, #tpu.memory_space<vmem>>, vector<1x4xf32>
    %21 = vector.broadcast %19 : vector<1x4xf32> to vector<256x4xf32>
    %22 = arith.mulf %18, %21 : vector<256x4xf32>
    %23 = vector.broadcast %20 : vector<1x4xf32> to vector<256x4xf32>
    %24 = arith.addf %22, %23 : vector<256x4xf32>
    %25 = arith.negf %24 : vector<256x4xf32>
    %26 = math.exp %25 : vector<256x4xf32>
    %cst_16 = arith.constant 1.000000e+00 : f32
    %27 = vector.broadcast %cst_16 : f32 to vector<256x4xf32>
    %28 = arith.addf %27, %26 : vector<256x4xf32>
    %29 = arith.divf %27, %28 : vector<256x4xf32>
    %30 = arith.mulf %24, %29 : vector<256x4xf32>
    %31 = arith.truncf %30 : vector<256x4xf32> to vector<256x4xbf16>
    %32 = tpu.iota {dimensions = array<i32: 0>} : vector<256x1xi32>
    %c16_i32 = arith.constant 16 : i32
    %c0_i32 = arith.constant 0 : i32
    %33 = arith.cmpi eq, %c16_i32, %c0_i32 : i32
    %c1_i32 = arith.constant 1 : i32
    %34 = arith.select %33, %c1_i32, %c16_i32 : i32
    %35 = vector.broadcast %34 : i32 to vector<256x1xi32>
    %36 = arith.remsi %32, %35 : vector<256x1xi32>
    %c0_i32_17 = arith.constant 0 : i32
    %37 = vector.broadcast %c0_i32_17 : i32 to vector<256x1xi32>
    %38 = arith.cmpi ne, %36, %37 : vector<256x1xi32>
    %c0_i32_18 = arith.constant 0 : i32
    %39 = vector.broadcast %c0_i32_18 : i32 to vector<256x1xi32>
    %40 = arith.cmpi slt, %36, %39 : vector<256x1xi32>
    %c0_i32_19 = arith.constant 0 : i32
    %41 = arith.cmpi slt, %34, %c0_i32_19 : i32
    %42 = vector.broadcast %41 : i1 to vector<256x1xi1>
    %43 = vector.broadcast %42 : vector<256x1xi1> to vector<256x1xi1>
    %44 = arith.xori %40, %43 : vector<256x1xi1>
    %45 = arith.andi %44, %38 : vector<256x1xi1>
    %46 = vector.broadcast %34 : i32 to vector<256x1xi32>
    %47 = arith.addi %36, %46 : vector<256x1xi32>
    %48 = arith.select %45, %47, %36 : vector<256x1xi1>, vector<256x1xi32>
    %c0_i32_20 = arith.constant 0 : i32
    %49 = vector.broadcast %c0_i32_20 : i32 to vector<256x1xi32>
    %50 = arith.cmpi sgt, %48, %49 : vector<256x1xi32>
    %51 = arith.extui %50 : vector<256x1xi1> to vector<256x1xi32>
    %52 = arith.sitofp %51 : vector<256x1xi32> to vector<256x1xf32>
    %c15_i32 = arith.constant 15 : i32
    %53 = vector.broadcast %c15_i32 : i32 to vector<256x1xi32>
    %54 = arith.cmpi slt, %48, %53 : vector<256x1xi32>
    %55 = arith.extui %54 : vector<256x1xi1> to vector<256x1xi32>
    %56 = arith.sitofp %55 : vector<256x1xi32> to vector<256x1xf32>
    %cst_21 = arith.constant 0.000000e+00 : f32
    %57 = vector.broadcast %cst_21 : f32 to vector<24x4xf32>
    %c0_22 = arith.constant 0 : index
    %c0_23 = arith.constant 0 : index
    %58 = vector.load %arg19[%c0_22, %c0_23] : memref<304x4xf32, #tpu.memory_space<vmem>>, vector<24x4xf32>
    tpu.vector_store %arg19[%c0_22, %c0_23], %57 {strides = array<i32>} : memref<304x4xf32, #tpu.memory_space<vmem>>, vector<24x4xf32>,
    %c280 = arith.constant 280 : index
    %c0_24 = arith.constant 0 : index
    %59 = vector.load %arg19[%c280, %c0_24] : memref<304x4xf32, #tpu.memory_space<vmem>>, vector<24x4xf32>
    tpu.vector_store %arg19[%c280, %c0_24], %57 {strides = array<i32>} : memref<304x4xf32, #tpu.memory_space<vmem>>, vector<24x4xf32>,
    %60 = arith.truncf %16 : vector<256x4xf32> to vector<256x4xbf16>
    %c0_25 = arith.constant 0 : index
    %c0_26 = arith.constant 0 : index
    %c0_27 = arith.constant 0 : index
    %61 = vector.load %arg8[%c0_25, %c0_26, %c0_27] : memref<1x4x4xbf16, #tpu.memory_space<vmem>>, vector<1x4x4xbf16>
    %62 = vector.shape_cast %61 : vector<1x4x4xbf16> to vector<4x4xbf16>
    %cst_28 = arith.constant dense<0.000000e+00> : vector<256x4xf32>
    %63 = tpu.matmul %60, %62, %cst_28 {dimension_numbers = #tpu.dot_dimension_numbers<[1], [0], [0], [1], [0, 0, 1, 1], [], []>} : vector<256x4xbf16>, vector<4x4xbf16>, vector<256x4xf32> -> vector<256x4xf32>
    %c0_29 = arith.constant 0 : index
    %c0_30 = arith.constant 0 : index
    %c0_31 = arith.constant 0 : index
    %64 = vector.load %arg9[%c0_29, %c0_30, %c0_31] : memref<1x1x4xf32, #tpu.memory_space<vmem>>, vector<1x1x4xf32>
    %65 = vector.shape_cast %64 : vector<1x1x4xf32> to vector<1x4xf32>
    %c0_32 = arith.constant 0 : index
    %c0_33 = arith.constant 0 : index
    %c0_34 = arith.constant 0 : index
    %66 = vector.load %arg10[%c0_32, %c0_33, %c0_34] : memref<1x1x4xf32, #tpu.memory_space<vmem>>, vector<1x1x4xf32>
    %67 = vector.shape_cast %66 : vector<1x1x4xf32> to vector<1x4xf32>
    %68 = vector.broadcast %65 : vector<1x4xf32> to vector<256x4xf32>
    %69 = arith.mulf %63, %68 : vector<256x4xf32>
    %70 = vector.broadcast %67 : vector<1x4xf32> to vector<256x4xf32>
    %71 = arith.addf %69, %70 : vector<256x4xf32>
    %72 = arith.negf %71 : vector<256x4xf32>
    %73 = math.exp %72 : vector<256x4xf32>
    %cst_35 = arith.constant 1.000000e+00 : f32
    %74 = vector.broadcast %cst_35 : f32 to vector<256x4xf32>
    %75 = arith.addf %74, %73 : vector<256x4xf32>
    %76 = arith.divf %74, %75 : vector<256x4xf32>
    %77 = arith.mulf %71, %76 : vector<256x4xf32>
    %c24 = arith.constant 24 : index
    %c0_36 = arith.constant 0 : index
    %78 = vector.load %arg19[%c24, %c0_36] : memref<304x4xf32, #tpu.memory_space<vmem>>, vector<256x4xf32>
    tpu.vector_store %arg19[%c24, %c0_36], %77 {strides = array<i32>} : memref<304x4xf32, #tpu.memory_space<vmem>>, vector<256x4xf32>,
    %cst_37 = arith.constant 0.000000e+00 : f32
    %79 = vector.broadcast %cst_37 : f32 to vector<256x4xf32>
    %cst_38 = arith.constant 0.000000e+00 : f32
    %80 = vector.broadcast %cst_38 : f32 to vector<256x4xf32>
    %c7 = arith.constant 7 : index
    %c0_39 = arith.constant 0 : index
    %81 = vector.load %arg19[%c7, %c0_39] : memref<304x4xf32, #tpu.memory_space<vmem>>, vector<256x4xf32>
    %82 = arith.truncf %81 : vector<256x4xf32> to vector<256x4xbf16>
    %c0_40 = arith.constant 0 : index
    %c0_41 = arith.constant 0 : index
    %c0_42 = arith.constant 0 : index
    %83 = vector.load %arg11[%c0_40, %c0_41, %c0_42] : memref<9x4x4xbf16, #tpu.memory_space<vmem>>, vector<1x4x4xbf16>
    %84 = vector.shape_cast %83 : vector<1x4x4xbf16> to vector<4x4xbf16>
    %cst_43 = arith.constant dense<0.000000e+00> : vector<256x4xf32>
    %85 = tpu.matmul %82, %84, %cst_43 {dimension_numbers = #tpu.dot_dimension_numbers<[1], [0], [0], [1], [0, 0, 1, 1], [], []>} : vector<256x4xbf16>, vector<4x4xbf16>, vector<256x4xf32> -> vector<256x4xf32>
    %86 = arith.addf %80, %85 : vector<256x4xf32>
    %c23 = arith.constant 23 : index
    %c0_44 = arith.constant 0 : index
    %87 = vector.load %arg19[%c23, %c0_44] : memref<304x4xf32, #tpu.memory_space<vmem>>, vector<256x4xf32>
    %88 = arith.truncf %87 : vector<256x4xf32> to vector<256x4xbf16>
    %c3 = arith.constant 3 : index
    %c0_45 = arith.constant 0 : index
    %c0_46 = arith.constant 0 : index
    %89 = vector.load %arg11[%c3, %c0_45, %c0_46] : memref<9x4x4xbf16, #tpu.memory_space<vmem>>, vector<1x4x4xbf16>
    %90 = vector.shape_cast %89 : vector<1x4x4xbf16> to vector<4x4xbf16>
    %cst_47 = arith.constant dense<0.000000e+00> : vector<256x4xf32>
    %91 = tpu.matmul %88, %90, %cst_47 {dimension_numbers = #tpu.dot_dimension_numbers<[1], [0], [0], [1], [0, 0, 1, 1], [], []>} : vector<256x4xbf16>, vector<4x4xbf16>, vector<256x4xf32> -> vector<256x4xf32>
    %92 = arith.addf %86, %91 : vector<256x4xf32>
    %c39 = arith.constant 39 : index
    %c0_48 = arith.constant 0 : index
    %93 = vector.load %arg19[%c39, %c0_48] : memref<304x4xf32, #tpu.memory_space<vmem>>, vector<256x4xf32>
    %94 = arith.truncf %93 : vector<256x4xf32> to vector<256x4xbf16>
    %c6 = arith.constant 6 : index
    %c0_49 = arith.constant 0 : index
    %c0_50 = arith.constant 0 : index
    %95 = vector.load %arg11[%c6, %c0_49, %c0_50] : memref<9x4x4xbf16, #tpu.memory_space<vmem>>, vector<1x4x4xbf16>
    %96 = vector.shape_cast %95 : vector<1x4x4xbf16> to vector<4x4xbf16>
    %cst_51 = arith.constant dense<0.000000e+00> : vector<256x4xf32>
    %97 = tpu.matmul %94, %96, %cst_51 {dimension_numbers = #tpu.dot_dimension_numbers<[1], [0], [0], [1], [0, 0, 1, 1], [], []>} : vector<256x4xbf16>, vector<4x4xbf16>, vector<256x4xf32> -> vector<256x4xf32>
    %98 = arith.addf %92, %97 : vector<256x4xf32>
    %99 = vector.broadcast %52 : vector<256x1xf32> to vector<256x4xf32>
    %100 = arith.mulf %98, %99 : vector<256x4xf32>
    %101 = arith.addf %79, %100 : vector<256x4xf32>
    %cst_52 = arith.constant 0.000000e+00 : f32
    %102 = vector.broadcast %cst_52 : f32 to vector<256x4xf32>
    %c8 = arith.constant 8 : index
    %c0_53 = arith.constant 0 : index
    %103 = vector.load %arg19[%c8, %c0_53] : memref<304x4xf32, #tpu.memory_space<vmem>>, vector<256x4xf32>
    %104 = arith.truncf %103 : vector<256x4xf32> to vector<256x4xbf16>
    %c1 = arith.constant 1 : index
    %c0_54 = arith.constant 0 : index
    %c0_55 = arith.constant 0 : index
    %105 = vector.load %arg11[%c1, %c0_54, %c0_55] : memref<9x4x4xbf16, #tpu.memory_space<vmem>>, vector<1x4x4xbf16>
    %106 = vector.shape_cast %105 : vector<1x4x4xbf16> to vector<4x4xbf16>
    %cst_56 = arith.constant dense<0.000000e+00> : vector<256x4xf32>
    %107 = tpu.matmul %104, %106, %cst_56 {dimension_numbers = #tpu.dot_dimension_numbers<[1], [0], [0], [1], [0, 0, 1, 1], [], []>} : vector<256x4xbf16>, vector<4x4xbf16>, vector<256x4xf32> -> vector<256x4xf32>
    %108 = arith.addf %102, %107 : vector<256x4xf32>
    %c24_57 = arith.constant 24 : index
    %c0_58 = arith.constant 0 : index
    %109 = vector.load %arg19[%c24_57, %c0_58] : memref<304x4xf32, #tpu.memory_space<vmem>>, vector<256x4xf32>
    %110 = arith.truncf %109 : vector<256x4xf32> to vector<256x4xbf16>
    %c4 = arith.constant 4 : index
    %c0_59 = arith.constant 0 : index
    %c0_60 = arith.constant 0 : index
    %111 = vector.load %arg11[%c4, %c0_59, %c0_60] : memref<9x4x4xbf16, #tpu.memory_space<vmem>>, vector<1x4x4xbf16>
    %112 = vector.shape_cast %111 : vector<1x4x4xbf16> to vector<4x4xbf16>
    %cst_61 = arith.constant dense<0.000000e+00> : vector<256x4xf32>
    %113 = tpu.matmul %110, %112, %cst_61 {dimension_numbers = #tpu.dot_dimension_numbers<[1], [0], [0], [1], [0, 0, 1, 1], [], []>} : vector<256x4xbf16>, vector<4x4xbf16>, vector<256x4xf32> -> vector<256x4xf32>
    %114 = arith.addf %108, %113 : vector<256x4xf32>
    %c40 = arith.constant 40 : index
    %c0_62 = arith.constant 0 : index
    %115 = vector.load %arg19[%c40, %c0_62] : memref<304x4xf32, #tpu.memory_space<vmem>>, vector<256x4xf32>
    %116 = arith.truncf %115 : vector<256x4xf32> to vector<256x4xbf16>
    %c7_63 = arith.constant 7 : index
    %c0_64 = arith.constant 0 : index
    %c0_65 = arith.constant 0 : index
    %117 = vector.load %arg11[%c7_63, %c0_64, %c0_65] : memref<9x4x4xbf16, #tpu.memory_space<vmem>>, vector<1x4x4xbf16>
    %118 = vector.shape_cast %117 : vector<1x4x4xbf16> to vector<4x4xbf16>
    %cst_66 = arith.constant dense<0.000000e+00> : vector<256x4xf32>
    %119 = tpu.matmul %116, %118, %cst_66 {dimension_numbers = #tpu.dot_dimension_numbers<[1], [0], [0], [1], [0, 0, 1, 1], [], []>} : vector<256x4xbf16>, vector<4x4xbf16>, vector<256x4xf32> -> vector<256x4xf32>
    %120 = arith.addf %114, %119 : vector<256x4xf32>
    %121 = arith.addf %101, %120 : vector<256x4xf32>
    %cst_67 = arith.constant 0.000000e+00 : f32
    %122 = vector.broadcast %cst_67 : f32 to vector<256x4xf32>
    %c9 = arith.constant 9 : index
    %c0_68 = arith.constant 0 : index
    %123 = vector.load %arg19[%c9, %c0_68] : memref<304x4xf32, #tpu.memory_space<vmem>>, vector<256x4xf32>
    %124 = arith.truncf %123 : vector<256x4xf32> to vector<256x4xbf16>
    %c2 = arith.constant 2 : index
    %c0_69 = arith.constant 0 : index
    %c0_70 = arith.constant 0 : index
    %125 = vector.load %arg11[%c2, %c0_69, %c0_70] : memref<9x4x4xbf16, #tpu.memory_space<vmem>>, vector<1x4x4xbf16>
    %126 = vector.shape_cast %125 : vector<1x4x4xbf16> to vector<4x4xbf16>
    %cst_71 = arith.constant dense<0.000000e+00> : vector<256x4xf32>
    %127 = tpu.matmul %124, %126, %cst_71 {dimension_numbers = #tpu.dot_dimension_numbers<[1], [0], [0], [1], [0, 0, 1, 1], [], []>} : vector<256x4xbf16>, vector<4x4xbf16>, vector<256x4xf32> -> vector<256x4xf32>
    %128 = arith.addf %122, %127 : vector<256x4xf32>
    %c25 = arith.constant 25 : index
    %c0_72 = arith.constant 0 : index
    %129 = vector.load %arg19[%c25, %c0_72] : memref<304x4xf32, #tpu.memory_space<vmem>>, vector<256x4xf32>
    %130 = arith.truncf %129 : vector<256x4xf32> to vector<256x4xbf16>
    %c5 = arith.constant 5 : index
    %c0_73 = arith.constant 0 : index
    %c0_74 = arith.constant 0 : index
    %131 = vector.load %arg11[%c5, %c0_73, %c0_74] : memref<9x4x4xbf16, #tpu.memory_space<vmem>>, vector<1x4x4xbf16>
    %132 = vector.shape_cast %131 : vector<1x4x4xbf16> to vector<4x4xbf16>
    %cst_75 = arith.constant dense<0.000000e+00> : vector<256x4xf32>
    %133 = tpu.matmul %130, %132, %cst_75 {dimension_numbers = #tpu.dot_dimension_numbers<[1], [0], [0], [1], [0, 0, 1, 1], [], []>} : vector<256x4xbf16>, vector<4x4xbf16>, vector<256x4xf32> -> vector<256x4xf32>
    %134 = arith.addf %128, %133 : vector<256x4xf32>
    %c41 = arith.constant 41 : index
    %c0_76 = arith.constant 0 : index
    %135 = vector.load %arg19[%c41, %c0_76] : memref<304x4xf32, #tpu.memory_space<vmem>>, vector<256x4xf32>
    %136 = arith.truncf %135 : vector<256x4xf32> to vector<256x4xbf16>
    %c8_77 = arith.constant 8 : index
    %c0_78 = arith.constant 0 : index
    %c0_79 = arith.constant 0 : index
    %137 = vector.load %arg11[%c8_77, %c0_78, %c0_79] : memref<9x4x4xbf16, #tpu.memory_space<vmem>>, vector<1x4x4xbf16>
    %138 = vector.shape_cast %137 : vector<1x4x4xbf16> to vector<4x4xbf16>
    %cst_80 = arith.constant dense<0.000000e+00> : vector<256x4xf32>
    %139 = tpu.matmul %136, %138, %cst_80 {dimension_numbers = #tpu.dot_dimension_numbers<[1], [0], [0], [1], [0, 0, 1, 1], [], []>} : vector<256x4xbf16>, vector<4x4xbf16>, vector<256x4xf32> -> vector<256x4xf32>
    %140 = arith.addf %134, %139 : vector<256x4xf32>
    %141 = vector.broadcast %56 : vector<256x1xf32> to vector<256x4xf32>
    %142 = arith.mulf %140, %141 : vector<256x4xf32>
    %143 = arith.addf %121, %142 : vector<256x4xf32>
    %c0_81 = arith.constant 0 : index
    %c0_82 = arith.constant 0 : index
    %c0_83 = arith.constant 0 : index
    %144 = vector.load %arg12[%c0_81, %c0_82, %c0_83] : memref<1x1x4xf32, #tpu.memory_space<vmem>>, vector<1x1x4xf32>
    %145 = vector.shape_cast %144 : vector<1x1x4xf32> to vector<1x4xf32>
    %c0_84 = arith.constant 0 : index
    %c0_85 = arith.constant 0 : index
    %c0_86 = arith.constant 0 : index
    %146 = vector.load %arg13[%c0_84, %c0_85, %c0_86] : memref<1x1x4xf32, #tpu.memory_space<vmem>>, vector<1x1x4xf32>
    %147 = vector.shape_cast %146 : vector<1x1x4xf32> to vector<1x4xf32>
    %148 = vector.broadcast %145 : vector<1x4xf32> to vector<256x4xf32>
    %149 = arith.mulf %143, %148 : vector<256x4xf32>
    %150 = vector.broadcast %147 : vector<1x4xf32> to vector<256x4xf32>
    %151 = arith.addf %149, %150 : vector<256x4xf32>
    %152 = arith.negf %151 : vector<256x4xf32>
    %153 = math.exp %152 : vector<256x4xf32>
    %cst_87 = arith.constant 1.000000e+00 : f32
    %154 = vector.broadcast %cst_87 : f32 to vector<256x4xf32>
    %155 = arith.addf %154, %153 : vector<256x4xf32>
    %156 = arith.divf %154, %155 : vector<256x4xf32>
    %157 = arith.mulf %151, %156 : vector<256x4xf32>
    %158 = arith.addf %16, %157 : vector<256x4xf32>
    %159 = arith.truncf %158 : vector<256x4xf32> to vector<256x4xbf16>
    %c0_88 = arith.constant 0 : index
    %c0_89 = arith.constant 0 : index
    %160 = vector.load %arg14[%c0_88, %c0_89] : memref<4x8xbf16, #tpu.memory_space<vmem>>, vector<4x8xbf16>
    %cst_90 = arith.constant dense<0.000000e+00> : vector<256x8xf32>
    %161 = tpu.matmul %159, %160, %cst_90 {dimension_numbers = #tpu.dot_dimension_numbers<[1], [0], [0], [1], [0, 0, 1, 1], [], []>} : vector<256x4xbf16>, vector<4x8xbf16>, vector<256x8xf32> -> vector<256x8xf32>
    %c0_91 = arith.constant 0 : index
    %c0_92 = arith.constant 0 : index
    %162 = vector.load %arg15[%c0_91, %c0_92] : memref<4x8xbf16, #tpu.memory_space<vmem>>, vector<4x8xbf16>
    %cst_93 = arith.constant dense<0.000000e+00> : vector<256x8xf32>
    %163 = tpu.matmul %31, %162, %cst_93 {dimension_numbers = #tpu.dot_dimension_numbers<[1], [0], [0], [1], [0, 0, 1, 1], [], []>} : vector<256x4xbf16>, vector<4x8xbf16>, vector<256x8xf32> -> vector<256x8xf32>
    %164 = arith.addf %161, %163 : vector<256x8xf32>
    %c0_94 = arith.constant 0 : index
    %c0_95 = arith.constant 0 : index
    %165 = vector.load %arg16[%c0_94, %c0_95] : memref<1x8xf32, #tpu.memory_space<vmem>>, vector<1x8xf32>
    %c0_96 = arith.constant 0 : index
    %c0_97 = arith.constant 0 : index
    %166 = vector.load %arg17[%c0_96, %c0_97] : memref<1x8xf32, #tpu.memory_space<vmem>>, vector<1x8xf32>
    %167 = vector.broadcast %165 : vector<1x8xf32> to vector<256x8xf32>
    %168 = arith.mulf %164, %167 : vector<256x8xf32>
    %169 = vector.broadcast %166 : vector<1x8xf32> to vector<256x8xf32>
    %170 = arith.addf %168, %169 : vector<256x8xf32>
    %171 = arith.negf %170 : vector<256x8xf32>
    %172 = math.exp %171 : vector<256x8xf32>
    %cst_98 = arith.constant 1.000000e+00 : f32
    %173 = vector.broadcast %cst_98 : f32 to vector<256x8xf32>
    %174 = arith.addf %173, %172 : vector<256x8xf32>
    %175 = arith.divf %173, %174 : vector<256x8xf32>
    %176 = arith.mulf %170, %175 : vector<256x8xf32>
    %c0_99 = arith.constant 0 : index
    %c0_100 = arith.constant 0 : index
    %c0_101 = arith.constant 0 : index
    %177 = vector.load %arg18[%c0_99, %c0_100, %c0_101] : memref<1x256x8xf32, #tpu.memory_space<vmem>>, vector<1x256x8xf32>
    %178 = vector.shape_cast %177 : vector<1x256x8xf32> to vector<256x8xf32>
    %179 = vector.shape_cast %176 : vector<256x8xf32> to vector<1x256x8xf32>
    tpu.vector_store %arg18[%c0_99, %c0_100, %c0_101], %179 {strides = array<i32>} : memref<1x256x8xf32, #tpu.memory_space<vmem>>, vector<1x256x8xf32>,
    return
  }
  func.func @transform_0(%arg0: i32) -> (i32, i32, i32) {
    %c0_i32 = arith.constant 0 : i32
    %c0_i32_0 = arith.constant 0 : i32
    %c0_i32_1 = arith.constant 0 : i32
    return %arg0, %c0_i32, %c0_i32_0 : i32, i32, i32
  }
  func.func @transform_1(%arg0: i32) -> (i32, i32) {
    %c0_i32 = arith.constant 0 : i32
    %c0_i32_0 = arith.constant 0 : i32
    %c0_i32_1 = arith.constant 0 : i32
    return %c0_i32, %c0_i32_0 : i32, i32
  }
  func.func @transform_2(%arg0: i32) -> (i32, i32) {
    %c0_i32 = arith.constant 0 : i32
    %c0_i32_0 = arith.constant 0 : i32
    %c0_i32_1 = arith.constant 0 : i32
    return %c0_i32, %c0_i32_0 : i32, i32
  }
  func.func @transform_3(%arg0: i32) -> (i32, i32) {
    %c0_i32 = arith.constant 0 : i32
    %c0_i32_0 = arith.constant 0 : i32
    %c0_i32_1 = arith.constant 0 : i32
    return %c0_i32, %c0_i32_0 : i32, i32
  }
  func.func @transform_4(%arg0: i32) -> (i32, i32) {
    %c0_i32 = arith.constant 0 : i32
    %c0_i32_0 = arith.constant 0 : i32
    %c0_i32_1 = arith.constant 0 : i32
    return %c0_i32, %c0_i32_0 : i32, i32
  }
  func.func @transform_5(%arg0: i32) -> (i32, i32) {
    %c0_i32 = arith.constant 0 : i32
    %c0_i32_0 = arith.constant 0 : i32
    %c0_i32_1 = arith.constant 0 : i32
    return %c0_i32, %c0_i32_0 : i32, i32
  }
  func.func @transform_6(%arg0: i32) -> (i32, i32) {
    %c0_i32 = arith.constant 0 : i32
    %c0_i32_0 = arith.constant 0 : i32
    %c0_i32_1 = arith.constant 0 : i32
    return %c0_i32, %c0_i32_0 : i32, i32
  }
  func.func @transform_7(%arg0: i32) -> (i32, i32, i32) {
    %c0_i32 = arith.constant 0 : i32
    %c0_i32_0 = arith.constant 0 : i32
    %c0_i32_1 = arith.constant 0 : i32
    %c0_i32_2 = arith.constant 0 : i32
    return %c0_i32, %c0_i32_0, %c0_i32_1 : i32, i32, i32
  }
  func.func @transform_8(%arg0: i32) -> (i32, i32, i32) {
    %c0_i32 = arith.constant 0 : i32
    %c0_i32_0 = arith.constant 0 : i32
    %c0_i32_1 = arith.constant 0 : i32
    %c0_i32_2 = arith.constant 0 : i32
    return %c0_i32, %c0_i32_0, %c0_i32_1 : i32, i32, i32
  }
  func.func @transform_9(%arg0: i32) -> (i32, i32, i32) {
    %c0_i32 = arith.constant 0 : i32
    %c0_i32_0 = arith.constant 0 : i32
    %c0_i32_1 = arith.constant 0 : i32
    %c0_i32_2 = arith.constant 0 : i32
    return %c0_i32, %c0_i32_0, %c0_i32_1 : i32, i32, i32
  }
  func.func @transform_10(%arg0: i32) -> (i32, i32, i32) {
    %c0_i32 = arith.constant 0 : i32
    %c0_i32_0 = arith.constant 0 : i32
    %c0_i32_1 = arith.constant 0 : i32
    %c0_i32_2 = arith.constant 0 : i32
    return %c0_i32, %c0_i32_0, %c0_i32_1 : i32, i32, i32
  }
  func.func @transform_11(%arg0: i32) -> (i32, i32, i32) {
    %c0_i32 = arith.constant 0 : i32
    %c0_i32_0 = arith.constant 0 : i32
    %c0_i32_1 = arith.constant 0 : i32
    %c0_i32_2 = arith.constant 0 : i32
    return %c0_i32, %c0_i32_0, %c0_i32_1 : i32, i32, i32
  }
  func.func @transform_12(%arg0: i32) -> (i32, i32, i32) {
    %c0_i32 = arith.constant 0 : i32
    %c0_i32_0 = arith.constant 0 : i32
    %c0_i32_1 = arith.constant 0 : i32
    %c0_i32_2 = arith.constant 0 : i32
    return %c0_i32, %c0_i32_0, %c0_i32_1 : i32, i32, i32
  }
  func.func @transform_13(%arg0: i32) -> (i32, i32) {
    %c0_i32 = arith.constant 0 : i32
    %c0_i32_0 = arith.constant 0 : i32
    %c0_i32_1 = arith.constant 0 : i32
    return %c0_i32, %c0_i32_0 : i32, i32
  }
  func.func @transform_14(%arg0: i32) -> (i32, i32) {
    %c0_i32 = arith.constant 0 : i32
    %c0_i32_0 = arith.constant 0 : i32
    %c0_i32_1 = arith.constant 0 : i32
    return %c0_i32, %c0_i32_0 : i32, i32
  }
  func.func @transform_15(%arg0: i32) -> (i32, i32) {
    %c0_i32 = arith.constant 0 : i32
    %c0_i32_0 = arith.constant 0 : i32
    %c0_i32_1 = arith.constant 0 : i32
    return %c0_i32, %c0_i32_0 : i32, i32
  }
  func.func @transform_16(%arg0: i32) -> (i32, i32) {
    %c0_i32 = arith.constant 0 : i32
    %c0_i32_0 = arith.constant 0 : i32
    %c0_i32_1 = arith.constant 0 : i32
    return %c0_i32, %c0_i32_0 : i32, i32
  }
  func.func @transform_17(%arg0: i32) -> (i32, i32, i32) {
    %c0_i32 = arith.constant 0 : i32
    %c0_i32_0 = arith.constant 0 : i32
    %c0_i32_1 = arith.constant 0 : i32
    return %arg0, %c0_i32, %c0_i32_0 : i32, i32, i32
  }
}

</mosaic_0001>

<llo_original>
// kernel: c3_forward.1
$region0: #{c3_forward.1}
  #allocation0 [shape = 'u32[]', space=smem, size = 0x4, offset = 0x4, fixed_abs, tag = 'smem constant byte address 0x4 - core index']
  #allocation1 [shape = 'u32[144,128]{1,0:T(1,128)}', space=vmem, size = 0x12000, scoped, tag = 'internal scratch']
  #allocation2 [shape = 'f32[304,4]{1,0:T(8,128)}', space=vmem, size = 0x26000, scoped, tag = 'scratch operand']
  %s0 = inlined_call_operand.vmem [shape: f32[2,256,4], index: 0, kind: input, shape index: {}]
  %s1 = inlined_call_operand.vmem [shape: bf16[4,4], index: 1, kind: input, shape index: {}]
  %s2 = inlined_call_operand.vmem [shape: f32[1,4], index: 2, kind: input, shape index: {}]
  %s3 = inlined_call_operand.vmem [shape: f32[1,4], index: 3, kind: input, shape index: {}]
  %s4 = inlined_call_operand.vmem [shape: bf16[4,4], index: 4, kind: input, shape index: {}]
  %s5 = inlined_call_operand.vmem [shape: f32[1,4], index: 5, kind: input, shape index: {}]
  %s6 = inlined_call_operand.vmem [shape: f32[1,4], index: 6, kind: input, shape index: {}]
  %s7 = inlined_call_operand.vmem [shape: bf16[1,4,4], index: 7, kind: input, shape index: {}]
  %s8 = inlined_call_operand.vmem [shape: f32[1,1,4], index: 8, kind: input, shape index: {}]
  %s9 = inlined_call_operand.vmem [shape: f32[1,1,4], index: 9, kind: input, shape index: {}]
  %s10 = inlined_call_operand.vmem [shape: bf16[9,4,4], index: 10, kind: input, shape index: {}]
  %s11 = inlined_call_operand.vmem [shape: f32[1,1,4], index: 11, kind: input, shape index: {}]
  %s12 = inlined_call_operand.vmem [shape: f32[1,1,4], index: 12, kind: input, shape index: {}]
  %s13 = inlined_call_operand.vmem [shape: bf16[4,8], index: 13, kind: input, shape index: {}]
  %s14 = inlined_call_operand.vmem [shape: bf16[4,8], index: 14, kind: input, shape index: {}]
  %s15 = inlined_call_operand.vmem [shape: f32[1,8], index: 15, kind: input, shape index: {}]
  %s16 = inlined_call_operand.vmem [shape: f32[1,8], index: 16, kind: input, shape index: {}]
  %s17 = inlined_call_operand.vmem [shape: f32[2,256,8], index: 17, kind: output, shape index: {}]
  %s18 = sld [smem:[#allocation0]]
  $region101: #{c3_forward.1} parent=0
    _
  %s20 = ssub.s32 1, %s18
  %s21 = scalar_select 0, %s20, %s18
  loop: start=0, step=1, limit=4
  $region2: #{c3_forward.1} parent=0 // loop_pre_header
    _
  $region3: #{c3_forward.1} parent=0 // loop_header
    %s23 = sphi 0, %s27
    %p24 = scmp.ge.s32.totalorder %s23, 4
    %s33 = sphi 0, %s35
    %s36 = sphi 0, %s33
    %s37 = sphi 0, %s36
    %s53 = sphi 0, %s37
    %s57 = sphi 0, %s57
    %s59 = sphi 0, %s57
    %s60 = sphi 0, %s59
    %s74 = sphi 0, %s60
    %s78 = sphi 0, %s78
    %s80 = sphi 0, %s78
    %s81 = sphi 0, %s80
    %s95 = sphi 0, %s81
    %s99 = sphi 0, %s99
    %s101 = sphi 0, %s99
    %s102 = sphi 0, %s101
    %s116 = sphi 0, %s102
    %s120 = sphi 0, %s120
    %s122 = sphi 0, %s120
    %s123 = sphi 0, %s122
    %s137 = sphi 0, %s123
    %s141 = sphi 0, %s141
    %s143 = sphi 0, %s141
    %s144 = sphi 0, %s143
    %s158 = sphi 0, %s144
    %s162 = sphi 0, %s162
    %s164 = sphi 0, %s162
    %s165 = sphi 0, %s164
    %s179 = sphi 0, %s165
    %s183 = sphi 0, %s183
    %s185 = sphi 0, %s183
    %s186 = sphi 0, %s185
    %s200 = sphi 0, %s186
    %s204 = sphi 0, %s204
    %s206 = sphi 0, %s204
    %s207 = sphi 0, %s206
    %s221 = sphi 0, %s207
    %s225 = sphi 0, %s225
    %s227 = sphi 0, %s225
    %s228 = sphi 0, %s227
    %s242 = sphi 0, %s228
    %s246 = sphi 0, %s246
    %s248 = sphi 0, %s246
    %s249 = sphi 0, %s248
    %s263 = sphi 0, %s249
    %s267 = sphi 0, %s267
    %s269 = sphi 0, %s267
    %s270 = sphi 0, %s269
    %s284 = sphi 0, %s270
    %s288 = sphi 0, %s288
    %s290 = sphi 0, %s288
    %s291 = sphi 0, %s290
    %s305 = sphi 0, %s291
    %s309 = sphi 0, %s309
    %s311 = sphi 0, %s309
    %s312 = sphi 0, %s311
    %s326 = sphi 0, %s312
    %s330 = sphi 0, %s330
    %s332 = sphi 0, %s330
    %s333 = sphi 0, %s332
    %s347 = sphi 0, %s333
    %s351 = sphi 0, %s351
    %s353 = sphi 0, %s351
    %s354 = sphi 0, %s353
    %s368 = sphi 0, %s354
    %s372 = sphi 0, %s372
    %s374 = sphi 0, %s372
    %s375 = sphi 0, %s374
    %s389 = sphi 0, %s375
    %s395 = sphi 0, %s397
    %s398 = sphi 0, %s395
    %s399 = sphi 0, %s398
    %s415 = sphi 0, %s399
  $region4: #{c3_forward.1} parent=0 // loop_header_branch
    %26 = sbr.rel (%p24) target = $region8
  $region5: #{c3_forward.1} parent=0 // loop_body
    %s28 = ssub.s32 %s23, 1
    %s29 = ssub.s32 %s23, 2
    %s30 = sadd.s32 %s23, 1
    %s31 = ssub.s32 %s23, %s30
    %p32 = scmp.eq.s32.totalorder %s31, 0
    %s34 = sadd.s32 %s33, 1
    %s35 = scalar_select %p32, %s33, %s34
    %p38 = pneg %p32
    %p39 = scmp.eq.s32.totalorder %s23, 1
    %p40 = por %p38, %p39
    %p41 = scmp.ne.s32.totalorder %s33, %s36
    %p42 = scmp.eq.s32.totalorder %s23, 0
    %p43 = por %p41, %p42
    %p44 = scmp.ne.s32.totalorder %s33, %s36
    %p45 = scmp.eq.s32.totalorder %s28, 1
    %p46 = por %p44, %p45
    %p47 = scmp.ne.s32.totalorder %s36, %s37
    %p48 = scmp.eq.s32.totalorder %s28, 0
    %p49 = por %p47, %p48
    %p50 = scmp.ne.s32.totalorder %s36, %s37
    %p51 = scmp.eq.s32.totalorder %s29, 1
    %p52 = por %p50, %p51
    %p54 = scmp.ne.s32.totalorder %s37, %s53
    %p55 = scmp.eq.s32.totalorder %s29, 0
    %p56 = por %p54, %p55
    %s58 = sadd.s32 %s57, 1
    %p61 = scmp.eq.s32.totalorder %s23, 1
    %p62 = scmp.ne.s32.totalorder %s57, %s59
    %p63 = scmp.eq.s32.totalorder %s23, 0
    %p64 = por %p62, %p63
    %p65 = scmp.ne.s32.totalorder %s57, %s59
    %p66 = scmp.eq.s32.totalorder %s28, 1
    %p67 = por %p65, %p66
    %p68 = scmp.ne.s32.totalorder %s59, %s60
    %p69 = scmp.eq.s32.totalorder %s28, 0
    %p70 = por %p68, %p69
    %p71 = scmp.ne.s32.totalorder %s59, %s60
    %p72 = scmp.eq.s32.totalorder %s29, 1
    %p73 = por %p71, %p72
    %p75 = scmp.ne.s32.totalorder %s60, %s74
    %p76 = scmp.eq.s32.totalorder %s29, 0
    %p77 = por %p75, %p76
    %s79 = sadd.s32 %s78, 1
    %p82 = scmp.eq.s32.totalorder %s23, 1
    %p83 = scmp.ne.s32.totalorder %s78, %s80
    %p84 = scmp.eq.s32.totalorder %s23, 0
    %p85 = por %p83, %p84
    %p86 = scmp.ne.s32.totalorder %s78, %s80
    %p87 = scmp.eq.s32.totalorder %s28, 1
    %p88 = por %p86, %p87
    %p89 = scmp.ne.s32.totalorder %s80, %s81
    %p90 = scmp.eq.s32.totalorder %s28, 0
    %p91 = por %p89, %p90
    %p92 = scmp.ne.s32.totalorder %s80, %s81
    %p93 = scmp.eq.s32.totalorder %s29, 1
    %p94 = por %p92, %p93
    %p96 = scmp.ne.s32.totalorder %s81, %s95
    %p97 = scmp.eq.s32.totalorder %s29, 0
    %p98 = por %p96, %p97
    %s100 = sadd.s32 %s99, 1
    %p103 = scmp.eq.s32.totalorder %s23, 1
    %p104 = scmp.ne.s32.totalorder %s99, %s101
    %p105 = scmp.eq.s32.totalorder %s23, 0
    %p106 = por %p104, %p105
    %p107 = scmp.ne.s32.totalorder %s99, %s101
    %p108 = scmp.eq.s32.totalorder %s28, 1
    %p109 = por %p107, %p108
    %p110 = scmp.ne.s32.totalorder %s101, %s102
    %p111 = scmp.eq.s32.totalorder %s28, 0
    %p112 = por %p110, %p111
    %p113 = scmp.ne.s32.totalorder %s101, %s102
    %p114 = scmp.eq.s32.totalorder %s29, 1
    %p115 = por %p113, %p114
    %p117 = scmp.ne.s32.totalorder %s102, %s116
    %p118 = scmp.eq.s32.totalorder %s29, 0
    %p119 = por %p117, %p118
    %s121 = sadd.s32 %s120, 1
    %p124 = scmp.eq.s32.totalorder %s23, 1
    %p125 = scmp.ne.s32.totalorder %s120, %s122
    %p126 = scmp.eq.s32.totalorder %s23, 0
    %p127 = por %p125, %p126
    %p128 = scmp.ne.s32.totalorder %s120, %s122
    %p129 = scmp.eq.s32.totalorder %s28, 1
    %p130 = por %p128, %p129
    %p131 = scmp.ne.s32.totalorder %s122, %s123
    %p132 = scmp.eq.s32.totalorder %s28, 0
    %p133 = por %p131, %p132
    %p134 = scmp.ne.s32.totalorder %s122, %s123
    %p135 = scmp.eq.s32.totalorder %s29, 1
    %p136 = por %p134, %p135
    %p138 = scmp.ne.s32.totalorder %s123, %s137
    %p139 = scmp.eq.s32.totalorder %s29, 0
    %p140 = por %p138, %p139
    %s142 = sadd.s32 %s141, 1
    %p145 = scmp.eq.s32.totalorder %s23, 1
    %p146 = scmp.ne.s32.totalorder %s141, %s143
    %p147 = scmp.eq.s32.totalorder %s23, 0
    %p148 = por %p146, %p147
    %p149 = scmp.ne.s32.totalorder %s141, %s143
    %p150 = scmp.eq.s32.totalorder %s28, 1
    %p151 = por %p149, %p150
    %p152 = scmp.ne.s32.totalorder %s143, %s144
    %p153 = scmp.eq.s32.totalorder %s28, 0
    %p154 = por %p152, %p153
    %p155 = scmp.ne.s32.totalorder %s143, %s144
    %p156 = scmp.eq.s32.totalorder %s29, 1
    %p157 = por %p155, %p156
    %p159 = scmp.ne.s32.totalorder %s144, %s158
    %p160 = scmp.eq.s32.totalorder %s29, 0
    %p161 = por %p159, %p160
    %s163 = sadd.s32 %s162, 1
    %p166 = scmp.eq.s32.totalorder %s23, 1
    %p167 = scmp.ne.s32.totalorder %s162, %s164
    %p168 = scmp.eq.s32.totalorder %s23, 0
    %p169 = por %p167, %p168
    %p170 = scmp.ne.s32.totalorder %s162, %s164
    %p171 = scmp.eq.s32.totalorder %s28, 1
    %p172 = por %p170, %p171
    %p173 = scmp.ne.s32.totalorder %s164, %s165
    %p174 = scmp.eq.s32.totalorder %s28, 0
    %p175 = por %p173, %p174
    %p176 = scmp.ne.s32.totalorder %s164, %s165
    %p177 = scmp.eq.s32.totalorder %s29, 1
    %p178 = por %p176, %p177
    %p180 = scmp.ne.s32.totalorder %s165, %s179
    %p181 = scmp.eq.s32.totalorder %s29, 0
    %p182 = por %p180, %p181
    %s184 = sadd.s32 %s183, 1
    %p187 = scmp.eq.s32.totalorder %s23, 1
    %p188 = scmp.ne.s32.totalorder %s183, %s185
    %p189 = scmp.eq.s32.totalorder %s23, 0
    %p190 = por %p188, %p189
    %p191 = scmp.ne.s32.totalorder %s183, %s185
    %p192 = scmp.eq.s32.totalorder %s28, 1
    %p193 = por %p191, %p192
    %p194 = scmp.ne.s32.totalorder %s185, %s186
    %p195 = scmp.eq.s32.totalorder %s28, 0
    %p196 = por %p194, %p195
    %p197 = scmp.ne.s32.totalorder %s185, %s186
    %p198 = scmp.eq.s32.totalorder %s29, 1
    %p199 = por %p197, %p198
    %p201 = scmp.ne.s32.totalorder %s186, %s200
    %p202 = scmp.eq.s32.totalorder %s29, 0
    %p203 = por %p201, %p202
    %s205 = sadd.s32 %s204, 1
    %p208 = scmp.eq.s32.totalorder %s23, 1
    %p209 = scmp.ne.s32.totalorder %s204, %s206
    %p210 = scmp.eq.s32.totalorder %s23, 0
    %p211 = por %p209, %p210
    %p212 = scmp.ne.s32.totalorder %s204, %s206
    %p213 = scmp.eq.s32.totalorder %s28, 1
    %p214 = por %p212, %p213
    %p215 = scmp.ne.s32.totalorder %s206, %s207
    %p216 = scmp.eq.s32.totalorder %s28, 0
    %p217 = por %p215, %p216
    %p218 = scmp.ne.s32.totalorder %s206, %s207
    %p219 = scmp.eq.s32.totalorder %s29, 1
    %p220 = por %p218, %p219
    %p222 = scmp.ne.s32.totalorder %s207, %s221
    %p223 = scmp.eq.s32.totalorder %s29, 0
    %p224 = por %p222, %p223
    %s226 = sadd.s32 %s225, 1
    %p229 = scmp.eq.s32.totalorder %s23, 1
    %p230 = scmp.ne.s32.totalorder %s225, %s227
    %p231 = scmp.eq.s32.totalorder %s23, 0
    %p232 = por %p230, %p231
    %p233 = scmp.ne.s32.totalorder %s225, %s227
    %p234 = scmp.eq.s32.totalorder %s28, 1
    %p235 = por %p233, %p234
    %p236 = scmp.ne.s32.totalorder %s227, %s228
    %p237 = scmp.eq.s32.totalorder %s28, 0
    %p238 = por %p236, %p237
    %p239 = scmp.ne.s32.totalorder %s227, %s228
    %p240 = scmp.eq.s32.totalorder %s29, 1
    %p241 = por %p239, %p240
    %p243 = scmp.ne.s32.totalorder %s228, %s242
    %p244 = scmp.eq.s32.totalorder %s29, 0
    %p245 = por %p243, %p244
    %s247 = sadd.s32 %s246, 1
    %p250 = scmp.eq.s32.totalorder %s23, 1
    %p251 = scmp.ne.s32.totalorder %s246, %s248
    %p252 = scmp.eq.s32.totalorder %s23, 0
    %p253 = por %p251, %p252
    %p254 = scmp.ne.s32.totalorder %s246, %s248
    %p255 = scmp.eq.s32.totalorder %s28, 1
    %p256 = por %p254, %p255
    %p257 = scmp.ne.s32.totalorder %s248, %s249
    %p258 = scmp.eq.s32.totalorder %s28, 0
    %p259 = por %p257, %p258
    %p260 = scmp.ne.s32.totalorder %s248, %s249
    %p261 = scmp.eq.s32.totalorder %s29, 1
    %p262 = por %p260, %p261
    %p264 = scmp.ne.s32.totalorder %s249, %s263
    %p265 = scmp.eq.s32.totalorder %s29, 0
    %p266 = por %p264, %p265
    %s268 = sadd.s32 %s267, 1
    %p271 = scmp.eq.s32.totalorder %s23, 1
    %p272 = scmp.ne.s32.totalorder %s267, %s269
    %p273 = scmp.eq.s32.totalorder %s23, 0
    %p274 = por %p272, %p273
    %p275 = scmp.ne.s32.totalorder %s267, %s269
    %p276 = scmp.eq.s32.totalorder %s28, 1
    %p277 = por %p275, %p276
    %p278 = scmp.ne.s32.totalorder %s269, %s270
    %p279 = scmp.eq.s32.totalorder %s28, 0
    %p280 = por %p278, %p279
    %p281 = scmp.ne.s32.totalorder %s269, %s270
    %p282 = scmp.eq.s32.totalorder %s29, 1
    %p283 = por %p281, %p282
    %p285 = scmp.ne.s32.totalorder %s270, %s284
    %p286 = scmp.eq.s32.totalorder %s29, 0
    %p287 = por %p285, %p286
    %s289 = sadd.s32 %s288, 1
    %p292 = scmp.eq.s32.totalorder %s23, 1
    %p293 = scmp.ne.s32.totalorder %s288, %s290
    %p294 = scmp.eq.s32.totalorder %s23, 0
    %p295 = por %p293, %p294
    %p296 = scmp.ne.s32.totalorder %s288, %s290
    %p297 = scmp.eq.s32.totalorder %s28, 1
    %p298 = por %p296, %p297
    %p299 = scmp.ne.s32.totalorder %s290, %s291
    %p300 = scmp.eq.s32.totalorder %s28, 0
    %p301 = por %p299, %p300
    %p302 = scmp.ne.s32.totalorder %s290, %s291
    %p303 = scmp.eq.s32.totalorder %s29, 1
    %p304 = por %p302, %p303
    %p306 = scmp.ne.s32.totalorder %s291, %s305
    %p307 = scmp.eq.s32.totalorder %s29, 0
    %p308 = por %p306, %p307
    %s310 = sadd.s32 %s309, 1
    %p313 = scmp.eq.s32.totalorder %s23, 1
    %p314 = scmp.ne.s32.totalorder %s309, %s311
    %p315 = scmp.eq.s32.totalorder %s23, 0
    %p316 = por %p314, %p315
    %p317 = scmp.ne.s32.totalorder %s309, %s311
    %p318 = scmp.eq.s32.totalorder %s28, 1
    %p319 = por %p317, %p318
    %p320 = scmp.ne.s32.totalorder %s311, %s312
    %p321 = scmp.eq.s32.totalorder %s28, 0
    %p322 = por %p320, %p321
    %p323 = scmp.ne.s32.totalorder %s311, %s312
    %p324 = scmp.eq.s32.totalorder %s29, 1
    %p325 = por %p323, %p324
    %p327 = scmp.ne.s32.totalorder %s312, %s326
    %p328 = scmp.eq.s32.totalorder %s29, 0
    %p329 = por %p327, %p328
    %s331 = sadd.s32 %s330, 1
    %p334 = scmp.eq.s32.totalorder %s23, 1
    %p335 = scmp.ne.s32.totalorder %s330, %s332
    %p336 = scmp.eq.s32.totalorder %s23, 0
    %p337 = por %p335, %p336
    %p338 = scmp.ne.s32.totalorder %s330, %s332
    %p339 = scmp.eq.s32.totalorder %s28, 1
    %p340 = por %p338, %p339
    %p341 = scmp.ne.s32.totalorder %s332, %s333
    %p342 = scmp.eq.s32.totalorder %s28, 0
    %p343 = por %p341, %p342
    %p344 = scmp.ne.s32.totalorder %s332, %s333
    %p345 = scmp.eq.s32.totalorder %s29, 1
    %p346 = por %p344, %p345
    %p348 = scmp.ne.s32.totalorder %s333, %s347
    %p349 = scmp.eq.s32.totalorder %s29, 0
    %p350 = por %p348, %p349
    %s352 = sadd.s32 %s351, 1
    %p355 = scmp.eq.s32.totalorder %s23, 1
    %p356 = scmp.ne.s32.totalorder %s351, %s353
    %p357 = scmp.eq.s32.totalorder %s23, 0
    %p358 = por %p356, %p357
    %p359 = scmp.ne.s32.totalorder %s351, %s353
    %p360 = scmp.eq.s32.totalorder %s28, 1
    %p361 = por %p359, %p360
    %p362 = scmp.ne.s32.totalorder %s353, %s354
    %p363 = scmp.eq.s32.totalorder %s28, 0
    %p364 = por %p362, %p363
    %p365 = scmp.ne.s32.totalorder %s353, %s354
    %p366 = scmp.eq.s32.totalorder %s29, 1
    %p367 = por %p365, %p366
    %p369 = scmp.ne.s32.totalorder %s354, %s368
    %p370 = scmp.eq.s32.totalorder %s29, 0
    %p371 = por %p369, %p370
    %s373 = sadd.s32 %s372, 1
    %p376 = scmp.eq.s32.totalorder %s23, 1
    %p377 = scmp.ne.s32.totalorder %s372, %s374
    %p378 = scmp.eq.s32.totalorder %s23, 0
    %p379 = por %p377, %p378
    %p380 = scmp.ne.s32.totalorder %s372, %s374
    %p381 = scmp.eq.s32.totalorder %s28, 1
    %p382 = por %p380, %p381
    %p383 = scmp.ne.s32.totalorder %s374, %s375
    %p384 = scmp.eq.s32.totalorder %s28, 0
    %p385 = por %p383, %p384
    %p386 = scmp.ne.s32.totalorder %s374, %s375
    %p387 = scmp.eq.s32.totalorder %s29, 1
    %p388 = por %p386, %p387
    %p390 = scmp.ne.s32.totalorder %s375, %s389
    %p391 = scmp.eq.s32.totalorder %s29, 0
    %p392 = por %p390, %p391
    %s393 = ssub.s32 %s23, %s30
    %p394 = scmp.eq.s32.totalorder %s393, 0
    %s396 = sadd.s32 %s395, 1
    %s397 = scalar_select %p394, %s395, %s396
    %p400 = pneg %p394
    %p401 = scmp.eq.s32.totalorder %s23, 1
    %p402 = por %p400, %p401
    %p403 = scmp.ne.s32.totalorder %s395, %s398
    %p404 = scmp.eq.s32.totalorder %s23, 0
    %p405 = por %p403, %p404
    %p406 = scmp.ne.s32.totalorder %s395, %s398
    %p407 = scmp.eq.s32.totalorder %s28, 1
    %p408 = por %p406, %p407
    %p409 = scmp.ne.s32.totalorder %s398, %s399
    %p410 = scmp.eq.s32.totalorder %s28, 0
    %p411 = por %p409, %p410
    %p412 = scmp.ne.s32.totalorder %s398, %s399
    %p413 = scmp.eq.s32.totalorder %s29, 1
    %p414 = por %p412, %p413
    %p416 = scmp.ne.s32.totalorder %s399, %s415
    %p417 = scmp.eq.s32.totalorder %s29, 0
    %p418 = por %p416, %p417
    %p419 = scmp.le.s32.totalorder 1, %s23
    %p420 = scmp.lt.s32.totalorder %s23, 3
    %p421 = pnand %p419, %p420
    %p422 = pneg %p421
    // Predicated region
    $region9: #{c3_forward.1} parent=5 // pred_check
      _
    $region10: #{c3_forward.1} parent=5 // pred_check_branch
      %424 = sbr.rel (%p421) target = $region12
    $region11: #{c3_forward.1} parent=5 // pred_region
      %s425 = ssub.s32 %s23, 1
      // Predicated region
      $region13: #{c3_forward.1} parent=11 // pred_check
        %p426 = pneg %p70
      $region14: #{c3_forward.1} parent=11 // pred_check_branch
        %428 = sbr.rel (%p426) target = $region16
      $region15: #{c3_forward.1} parent=11 // pred_region
        _
      $region16: #{c3_forward.1} parent=11 // pred_fallthru
        _
      // Predicated region
      $region17: #{c3_forward.1} parent=11 // pred_check
        %p429 = pneg %p91
      $region18: #{c3_forward.1} parent=11 // pred_check_branch
        %431 = sbr.rel (%p429) target = $region20
      $region19: #{c3_forward.1} parent=11 // pred_region
        _
      $region20: #{c3_forward.1} parent=11 // pred_fallthru
        _
      // Predicated region
      $region21: #{c3_forward.1} parent=11 // pred_check
        %p432 = pneg %p112
      $region22: #{c3_forward.1} parent=11 // pred_check_branch
        %434 = sbr.rel (%p432) target = $region24
      $region23: #{c3_forward.1} parent=11 // pred_region
        _
      $region24: #{c3_forward.1} parent=11 // pred_fallthru
        _
      // Predicated region
      $region25: #{c3_forward.1} parent=11 // pred_check
        %p435 = pneg %p133
      $region26: #{c3_forward.1} parent=11 // pred_check_branch
        %437 = sbr.rel (%p435) target = $region28
      $region27: #{c3_forward.1} parent=11 // pred_region
        _
      $region28: #{c3_forward.1} parent=11 // pred_fallthru
        _
      // Predicated region
      $region29: #{c3_forward.1} parent=11 // pred_check
        %p438 = pneg %p154
      $region30: #{c3_forward.1} parent=11 // pred_check_branch
        %440 = sbr.rel (%p438) target = $region32
      $region31: #{c3_forward.1} parent=11 // pred_region
        _
      $region32: #{c3_forward.1} parent=11 // pred_fallthru
        _
      // Predicated region
      $region33: #{c3_forward.1} parent=11 // pred_check
        %p441 = pneg %p175
      $region34: #{c3_forward.1} parent=11 // pred_check_branch
        %443 = sbr.rel (%p441) target = $region36
      $region35: #{c3_forward.1} parent=11 // pred_region
        _
      $region36: #{c3_forward.1} parent=11 // pred_fallthru
        _
      // Predicated region
      $region37: #{c3_forward.1} parent=11 // pred_check
        %p444 = pneg %p196
      $region38: #{c3_forward.1} parent=11 // pred_check_branch
        %446 = sbr.rel (%p444) target = $region40
      $region39: #{c3_forward.1} parent=11 // pred_region
        _
      $region40: #{c3_forward.1} parent=11 // pred_fallthru
        _
      // Predicated region
      $region41: #{c3_forward.1} parent=11 // pred_check
        %p447 = pneg %p217
      $region42: #{c3_forward.1} parent=11 // pred_check_branch
        %449 = sbr.rel (%p447) target = $region44
      $region43: #{c3_forward.1} parent=11 // pred_region
        _
      $region44: #{c3_forward.1} parent=11 // pred_fallthru
        _
      // Predicated region
      $region45: #{c3_forward.1} parent=11 // pred_check
        %p450 = pneg %p238
      $region46: #{c3_forward.1} parent=11 // pred_check_branch
        %452 = sbr.rel (%p450) target = $region48
      $region47: #{c3_forward.1} parent=11 // pred_region
        _
      $region48: #{c3_forward.1} parent=11 // pred_fallthru
        _
      // Predicated region
      $region49: #{c3_forward.1} parent=11 // pred_check
        %p453 = pneg %p259
      $region50: #{c3_forward.1} parent=11 // pred_check_branch
        %455 = sbr.rel (%p453) target = $region52
      $region51: #{c3_forward.1} parent=11 // pred_region
        _
      $region52: #{c3_forward.1} parent=11 // pred_fallthru
        _
      // Predicated region
      $region53: #{c3_forward.1} parent=11 // pred_check
        %p456 = pneg %p280
      $region54: #{c3_forward.1} parent=11 // pred_check_branch
        %458 = sbr.rel (%p456) target = $region56
      $region55: #{c3_forward.1} parent=11 // pred_region
        _
      $region56: #{c3_forward.1} parent=11 // pred_fallthru
        _
      // Predicated region
      $region57: #{c3_forward.1} parent=11 // pred_check
        %p459 = pneg %p301
      $region58: #{c3_forward.1} parent=11 // pred_check_branch
        %461 = sbr.rel (%p459) target = $region60
      $region59: #{c3_forward.1} parent=11 // pred_region
        _
      $region60: #{c3_forward.1} parent=11 // pred_fallthru
        _
      // Predicated region
      $region61: #{c3_forward.1} parent=11 // pred_check
        %p462 = pneg %p322
      $region62: #{c3_forward.1} parent=11 // pred_check_branch
        %464 = sbr.rel (%p462) target = $region64
      $region63: #{c3_forward.1} parent=11 // pred_region
        _
      $region64: #{c3_forward.1} parent=11 // pred_fallthru
        _
      // Predicated region
      $region65: #{c3_forward.1} parent=11 // pred_check
        %p465 = pneg %p343
      $region66: #{c3_forward.1} parent=11 // pred_check_branch
        %467 = sbr.rel (%p465) target = $region68
      $region67: #{c3_forward.1} parent=11 // pred_region
        _
      $region68: #{c3_forward.1} parent=11 // pred_fallthru
        _
      // Predicated region
      $region69: #{c3_forward.1} parent=11 // pred_check
        %p468 = pneg %p364
      $region70: #{c3_forward.1} parent=11 // pred_check_branch
        %470 = sbr.rel (%p468) target = $region72
      $region71: #{c3_forward.1} parent=11 // pred_region
        _
      $region72: #{c3_forward.1} parent=11 // pred_fallthru
        _
      // Predicated region
      $region73: #{c3_forward.1} parent=11 // pred_check
        %p471 = pneg %p385
      $region74: #{c3_forward.1} parent=11 // pred_check_branch
        %473 = sbr.rel (%p471) target = $region76
      $region75: #{c3_forward.1} parent=11 // pred_region
        _
      $region76: #{c3_forward.1} parent=11 // pred_fallthru
        _
    $region12: #{c3_forward.1} parent=5 // pred_fallthru
      _
    %p474 = scmp.lt.s32.totalorder %s23, 2
    // Predicated region
    $region77: #{c3_forward.1} parent=5 // pred_check
      %p475 = pneg %p474
    $region78: #{c3_forward.1} parent=5 // pred_check_branch
      %477 = sbr.rel (%p475) target = $region80
    $region79: #{c3_forward.1} parent=5 // pred_region
      // Predicated region
      $region81: #{c3_forward.1} parent=79 // pred_check
        %p478 = pneg %p43
      $region82: #{c3_forward.1} parent=79 // pred_check_branch
        %480 = sbr.rel (%p478) target = $region84
      $region83: #{c3_forward.1} parent=79 // pred_region
        %p481 = scmp.lt.s32.totalorder %s23, 1
        %s482 = scalar_select %p481, %s23, 1
        %s483 = smul.addr %s482, 32
        %s484 = smul.addr %s483, 8
        %s485 = scalar_lea.vmem %s0, %s484
      $region84: #{c3_forward.1} parent=79 // pred_fallthru
        _
    $region80: #{c3_forward.1} parent=5 // pred_fallthru
      _
    %p486 = scmp.le.s32.totalorder 1, %s23
    %p487 = scmp.lt.s32.totalorder %s23, 3
    %p488 = pnand %p486, %p487
    %p489 = pneg %p488
    // Predicated region
    $region85: #{c3_forward.1} parent=5 // pred_check
      _
    $region86: #{c3_forward.1} parent=5 // pred_check_branch
      %491 = sbr.rel (%p488) target = $region88
    $region87: #{c3_forward.1} parent=5 // pred_region
      %s492 = ssub.s32 %s23, 1
      %p493 = scmp.lt.s32.totalorder %s28, 1
      %s494 = scalar_select %p493, %s28, 1
      %s495 = smul.addr %s494, 32
      %s496 = smul.addr %s495, 8
      %s497 = scalar_lea.vmem %s0, %s496
      %p498 = pneg %p49
      %p499 = pneg %p46
      %p500 = pneg %p70
      %p501 = pneg %p67
      %p502 = pneg %p91
      %p503 = pneg %p88
      %p504 = pneg %p112
      %p505 = pneg %p109
      %p506 = pneg %p133
      %p507 = pneg %p130
      %p508 = pneg %p154
      %p509 = pneg %p151
      %p510 = pneg %p175
      %p511 = pneg %p172
      %p512 = pneg %p196
      %p513 = pneg %p193
      %p514 = pneg %p217
      %p515 = pneg %p214
      %p516 = pneg %p238
      %p517 = pneg %p235
      %p518 = pneg %p259
      %p519 = pneg %p256
      %p520 = pneg %p280
      %p521 = pneg %p277
      %p522 = pneg %p301
      %p523 = pneg %p298
      %p524 = pneg %p322
      %p525 = pneg %p319
      %p526 = pneg %p343
      %p527 = pneg %p340
      %p528 = pneg %p364
      %p529 = pneg %p361
      %p530 = pneg %p385
      %p531 = pneg %p382
      %p532 = pneg %p411
      %p533 = pneg %p408
      %p534 = scmp.lt.s32.totalorder %s28, 1
      %s535 = scalar_select %p534, %s28, 1
      %s536 = smul.addr %s535, 32
      %s537 = smul.addr %s536, 8
      %s538 = scalar_lea.vmem %s17, %s537
      %p539 = scmp.lt.s32.totalorder %s28, 1
      %s540 = scalar_select %p539, %s28, 1
      %s541 = smul.addr %s540, 32
      %s542 = smul.addr %s541, 8
      %s543 = scalar_lea.vmem %s0, %s542
      %p544 = scmp.lt.s32.totalorder %s28, 1
      %s545 = scalar_select %p544, %s28, 1
      %s546 = smul.addr %s545, 32
      %s547 = smul.addr %s546, 8
      %s548 = scalar_lea.vmem %s17, %s547
      %v550 = vld [vmem:[%s543] sm:$0xff]
      %v551 = vld [vmem:[%s543 + $0x8] sm:$0xff]
      %v552 = vld [vmem:[%s543 + $0x10] sm:$0xff]
      %v553 = vld [vmem:[%s543 + $0x18] sm:$0xff]
      %v554 = vld [vmem:[%s543 + $0x20] sm:$0xff]
      %v555 = vld [vmem:[%s543 + $0x28] sm:$0xff]
      %v556 = vld [vmem:[%s543 + $0x30] sm:$0xff]
      %v557 = vld [vmem:[%s543 + $0x38] sm:$0xff]
      %v558 = vld [vmem:[%s543 + $0x40] sm:$0xff]
      %v559 = vld [vmem:[%s543 + $0x48] sm:$0xff]
      %v560 = vld [vmem:[%s543 + $0x50] sm:$0xff]
      %v561 = vld [vmem:[%s543 + $0x58] sm:$0xff]
      %v562 = vld [vmem:[%s543 + $0x60] sm:$0xff]
      %v563 = vld [vmem:[%s543 + $0x68] sm:$0xff]
      %v564 = vld [vmem:[%s543 + $0x70] sm:$0xff]
      %v565 = vld [vmem:[%s543 + $0x78] sm:$0xff]
      %v566 = vld [vmem:[%s543 + $0x80] sm:$0xff]
      %v567 = vld [vmem:[%s543 + $0x88] sm:$0xff]
      %v568 = vld [vmem:[%s543 + $0x90] sm:$0xff]
      %v569 = vld [vmem:[%s543 + $0x98] sm:$0xff]
      %v570 = vld [vmem:[%s543 + $0xa0] sm:$0xff]
      %v571 = vld [vmem:[%s543 + $0xa8] sm:$0xff]
      %v572 = vld [vmem:[%s543 + $0xb0] sm:$0xff]
      %v573 = vld [vmem:[%s543 + $0xb8] sm:$0xff]
      %v574 = vld [vmem:[%s543 + $0xc0] sm:$0xff]
      %v575 = vld [vmem:[%s543 + $0xc8] sm:$0xff]
      %v576 = vld [vmem:[%s543 + $0xd0] sm:$0xff]
      %v577 = vld [vmem:[%s543 + $0xd8] sm:$0xff]
      %v578 = vld [vmem:[%s543 + $0xe0] sm:$0xff]
      %v579 = vld [vmem:[%s543 + $0xe8] sm:$0xff]
      %v580 = vld [vmem:[%s543 + $0xf0] sm:$0xff]
      %v581 = vld [vmem:[%s543 + $0xf8] sm:$0xff]
      %v582 = vpack.c.bf16 %v551, %v550
      %v583 = vpack.c.bf16 %v553, %v552
      %v584 = vpack.c.bf16 %v555, %v554
      %v585 = vpack.c.bf16 %v557, %v556
      %v586 = vpack.c.bf16 %v559, %v558
      %v587 = vpack.c.bf16 %v561, %v560
      %v588 = vpack.c.bf16 %v563, %v562
      %v589 = vpack.c.bf16 %v565, %v564
      %v590 = vpack.c.bf16 %v567, %v566
      %v591 = vpack.c.bf16 %v569, %v568
      %v592 = vpack.c.bf16 %v571, %v570
      %v593 = vpack.c.bf16 %v573, %v572
      %v594 = vpack.c.bf16 %v575, %v574
      %v595 = vpack.c.bf16 %v577, %v576
      %v596 = vpack.c.bf16 %v579, %v578
      %v597 = vpack.c.bf16 %v581, %v580
      %v598 = vld [vmem:[%s1] sm:$0x3]
      %vm599 = vcmask 31744
      %v601 = vsel %vm599, %v582, 0
      %v604 = vsel %vm599, %v583, 0
      %v607 = vsel %vm599, %v584, 0
      %v610 = vsel %vm599, %v585, 0
      %v613 = vsel %vm599, %v586, 0
      %v616 = vsel %vm599, %v587, 0
      %v619 = vsel %vm599, %v588, 0
      %v622 = vsel %vm599, %v589, 0
      %v625 = vsel %vm599, %v590, 0
      %v628 = vsel %vm599, %v591, 0
      %v631 = vsel %vm599, %v592, 0
      %v634 = vsel %vm599, %v593, 0
      %v637 = vsel %vm599, %v594, 0
      %v640 = vsel %vm599, %v595, 0
      %v643 = vsel %vm599, %v596, 0
      %v646 = vsel %vm599, %v597, 0
      %vm648 = vcmask 1041408
      %v650 = vsel %vm648, %v598, 0
      %652 = vmatprep.subr.bf16.mxu0 0
      %653 = vmatpush1.bf16.msra.mxu0 0
      %654 = vmatprep.subr.bf16.mxu0 0
      %655 = vmatpush1.bf16.msra.mxu0 0
      %656 = vmatprep.subr.bf16.mxu0 0
      %657 = vmatpush1.bf16.msra.mxu0 0
      %658 = vmatprep.subr.bf16.mxu0 0
      %659 = vmatpush1.bf16.msra.mxu0 0
      %660 = vmatprep.subr.bf16.mxu0 0
      %661 = vmatpush1.bf16.msra.mxu0 0
      %662 = vmatprep.subr.bf16.mxu0 0
      %663 = vmatpush1.bf16.msra.mxu0 0
      %664 = vmatprep.subr.bf16.mxu0 0
      %665 = vmatpush1.bf16.msra.mxu0 0
      %666 = vmatprep.subr.bf16.mxu0 0
      %667 = vmatpush1.bf16.msra.mxu0 %v650
      %668 = vmatprep.subr.bf16.mxu0 0
      %669 = vmatpush2.bf16.msra.mxu0 0
      %670 = vmatprep.subr.bf16.mxu0 0
      %671 = vmatpush2.bf16.msra.mxu0 0
      %672 = vmatprep.subr.bf16.mxu0 0
      %673 = vmatpush2.bf16.msra.mxu0 0
      %674 = vmatprep.subr.bf16.mxu0 0
      %675 = vmatpush2.bf16.msra.mxu0 0
      %676 = vmatprep.subr.bf16.mxu0 0
      %677 = vmatpush2.bf16.msra.mxu0 0
      %678 = vmatprep.subr.bf16.mxu0 0
      %679 = vmatpush2.bf16.msra.mxu0 0
      %680 = vmatprep.subr.bf16.mxu0 0
      %681 = vmatpush2.bf16.msra.mxu0 0
      %682 = vmatprep.subr.bf16.mxu0 0
      %683 = vmatpush2.bf16.msra.mxu0 0
      %684 = vmatprep.mubr.bf16.mxu0 0
      %685 = vmatmul.mubr.bf16.gmra.mxu0 %v601
      %v686 = vpop.f32.mrf.mxu0
      %v687 = vadd.f32 0.0, %v686
      %v688 = vpop.f32.mrf.mxu0
      %v689 = vpop.f32.mrf.mxu0
      %v690 = vadd.f32 0.0, %v689
      %v691 = vpop.f32.mrf.mxu0
      %692 = vmatprep.mubr.bf16.mxu0 0
      %693 = vmatmul.mubr.bf16.gmra.mxu0 %v604
      %v694 = vpop.f32.mrf.mxu0
      %v695 = vadd.f32 0.0, %v694
      %v696 = vpop.f32.mrf.mxu0
      %v697 = vpop.f32.mrf.mxu0
      %v698 = vadd.f32 0.0, %v697
      %v699 = vpop.f32.mrf.mxu0
      %700 = vmatprep.mubr.bf16.mxu0 0
      %701 = vmatmul.mubr.bf16.gmra.mxu0 %v607
      %v702 = vpop.f32.mrf.mxu0
      %v703 = vadd.f32 0.0, %v702
      %v704 = vpop.f32.mrf.mxu0
      %v705 = vpop.f32.mrf.mxu0
      %v706 = vadd.f32 0.0, %v705
      %v707 = vpop.f32.mrf.mxu0
      %708 = vmatprep.mubr.bf16.mxu0 0
      %709 = vmatmul.mubr.bf16.gmra.mxu0 %v610
      %v710 = vpop.f32.mrf.mxu0
      %v711 = vadd.f32 0.0, %v710
      %v712 = vpop.f32.mrf.mxu0
      %v713 = vpop.f32.mrf.mxu0
      %v714 = vadd.f32 0.0, %v713
      %v715 = vpop.f32.mrf.mxu0
      %716 = vmatprep.mubr.bf16.mxu0 0
      %717 = vmatmul.mubr.bf16.gmra.mxu0 %v613
      %v718 = vpop.f32.mrf.mxu0
      %v719 = vadd.f32 0.0, %v718
      %v720 = vpop.f32.mrf.mxu0
      %v721 = vpop.f32.mrf.mxu0
      %v722 = vadd.f32 0.0, %v721
      %v723 = vpop.f32.mrf.mxu0
      %724 = vmatprep.mubr.bf16.mxu0 0
      %725 = vmatmul.mubr.bf16.gmra.mxu0 %v616
      %v726 = vpop.f32.mrf.mxu0
      %v727 = vadd.f32 0.0, %v726
      %v728 = vpop.f32.mrf.mxu0
      %v729 = vpop.f32.mrf.mxu0
      %v730 = vadd.f32 0.0, %v729
      %v731 = vpop.f32.mrf.mxu0
      %732 = vmatprep.mubr.bf16.mxu0 0
      %733 = vmatmul.mubr.bf16.gmra.mxu0 %v619
      %v734 = vpop.f32.mrf.mxu0
      %v735 = vadd.f32 0.0, %v734
      %v736 = vpop.f32.mrf.mxu0
      %v737 = vpop.f32.mrf.mxu0
      %v738 = vadd.f32 0.0, %v737
      %v739 = vpop.f32.mrf.mxu0
      %740 = vmatprep.mubr.bf16.mxu0 0
      %741 = vmatmul.mubr.bf16.gmra.mxu0 %v622
      %v742 = vpop.f32.mrf.mxu0
      %v743 = vadd.f32 0.0, %v742
      %v744 = vpop.f32.mrf.mxu0
      %v745 = vpop.f32.mrf.mxu0
      %v746 = vadd.f32 0.0, %v745
      %v747 = vpop.f32.mrf.mxu0
      %748 = vmatprep.mubr.bf16.mxu0 0
      %749 = vmatmul.mubr.bf16.gmra.mxu0 %v625
      %v750 = vpop.f32.mrf.mxu0
      %v751 = vadd.f32 0.0, %v750
      %v752 = vpop.f32.mrf.mxu0
      %v753 = vpop.f32.mrf.mxu0
      %v754 = vadd.f32 0.0, %v753
      %v755 = vpop.f32.mrf.mxu0
      %756 = vmatprep.mubr.bf16.mxu0 0
      %757 = vmatmul.mubr.bf16.gmra.mxu0 %v628
      %v758 = vpop.f32.mrf.mxu0
      %v759 = vadd.f32 0.0, %v758
      %v760 = vpop.f32.mrf.mxu0
      %v761 = vpop.f32.mrf.mxu0
      %v762 = vadd.f32 0.0, %v761
      %v763 = vpop.f32.mrf.mxu0
      %764 = vmatprep.mubr.bf16.mxu0 0
      %765 = vmatmul.mubr.bf16.gmra.mxu0 %v631
      %v766 = vpop.f32.mrf.mxu0
      %v767 = vadd.f32 0.0, %v766
      %v768 = vpop.f32.mrf.mxu0
      %v769 = vpop.f32.mrf.mxu0
      %v770 = vadd.f32 0.0, %v769
      %v771 = vpop.f32.mrf.mxu0
      %772 = vmatprep.mubr.bf16.mxu0 0
      %773 = vmatmul.mubr.bf16.gmra.mxu0 %v634
      %v774 = vpop.f32.mrf.mxu0
      %v775 = vadd.f32 0.0, %v774
      %v776 = vpop.f32.mrf.mxu0
      %v777 = vpop.f32.mrf.mxu0
      %v778 = vadd.f32 0.0, %v777
      %v779 = vpop.f32.mrf.mxu0
      %780 = vmatprep.mubr.bf16.mxu0 0
      %781 = vmatmul.mubr.bf16.gmra.mxu0 %v637
      %v782 = vpop.f32.mrf.mxu0
      %v783 = vadd.f32 0.0, %v782
      %v784 = vpop.f32.mrf.mxu0
      %v785 = vpop.f32.mrf.mxu0
      %v786 = vadd.f32 0.0, %v785
      %v787 = vpop.f32.mrf.mxu0
      %788 = vmatprep.mubr.bf16.mxu0 0
      %789 = vmatmul.mubr.bf16.gmra.mxu0 %v640
      %v790 = vpop.f32.mrf.mxu0
      %v791 = vadd.f32 0.0, %v790
      %v792 = vpop.f32.mrf.mxu0
      %v793 = vpop.f32.mrf.mxu0
      %v794 = vadd.f32 0.0, %v793
      %v795 = vpop.f32.mrf.mxu0
      %796 = vmatprep.mubr.bf16.mxu0 0
      %797 = vmatmul.mubr.bf16.gmra.mxu0 %v643
      %v798 = vpop.f32.mrf.mxu0
      %v799 = vadd.f32 0.0, %v798
      %v800 = vpop.f32.mrf.mxu0
      %v801 = vpop.f32.mrf.mxu0
      %v802 = vadd.f32 0.0, %v801
      %v803 = vpop.f32.mrf.mxu0
      %804 = vmatprep.mubr.bf16.mxu0 0
      %805 = vmatmul.mubr.bf16.gmra.mxu0 %v646
      %v806 = vpop.f32.mrf.mxu0
      %v807 = vadd.f32 0.0, %v806
      %v808 = vpop.f32.mrf.mxu0
      %v809 = vpop.f32.mrf.mxu0
      %v810 = vadd.f32 0.0, %v809
      %v811 = vpop.f32.mrf.mxu0
      %812 = vdwg.mxu0
      %v813 = vld [vmem:[%s2] sm:$0x1]
      %v814 = vld [vmem:[%s3] sm:$0x1]
      %v816 = vlaneseq
      %v817 = vshrl.u32 %v816, 7
      %v818 = vsub.s32 0, %v817
      %v819 = vrot.slane %v813, %v818
      %v821 = vmul.f32 %v687, %v819
      %v822 = vmul.f32 %v690, %v819
      %v823 = vmul.f32 %v695, %v819
      %v824 = vmul.f32 %v698, %v819
      %v825 = vmul.f32 %v703, %v819
      %v826 = vmul.f32 %v706, %v819
      %v827 = vmul.f32 %v711, %v819
      %v828 = vmul.f32 %v714, %v819
      %v829 = vmul.f32 %v719, %v819
      %v830 = vmul.f32 %v722, %v819
      %v831 = vmul.f32 %v727, %v819
      %v832 = vmul.f32 %v730, %v819
      %v833 = vmul.f32 %v735, %v819
      %v834 = vmul.f32 %v738, %v819
      %v835 = vmul.f32 %v743, %v819
      %v836 = vmul.f32 %v746, %v819
      %v837 = vmul.f32 %v751, %v819
      %v838 = vmul.f32 %v754, %v819
      %v839 = vmul.f32 %v759, %v819
      %v840 = vmul.f32 %v762, %v819
      %v841 = vmul.f32 %v767, %v819
      %v842 = vmul.f32 %v770, %v819
      %v843 = vmul.f32 %v775, %v819
      %v844 = vmul.f32 %v778, %v819
      %v845 = vmul.f32 %v783, %v819
      %v846 = vmul.f32 %v786, %v819
      %v847 = vmul.f32 %v791, %v819
      %v848 = vmul.f32 %v794, %v819
      %v849 = vmul.f32 %v799, %v819
      %v850 = vmul.f32 %v802, %v819
      %v851 = vmul.f32 %v807, %v819
      %v852 = vmul.f32 %v810, %v819
      %v854 = vlaneseq
      %v855 = vshrl.u32 %v854, 7
      %v856 = vsub.s32 0, %v855
      %v857 = vrot.slane %v814, %v856
      %v859 = vadd.f32 %v821, %v857
      %v860 = vadd.f32 %v822, %v857
      %v861 = vadd.f32 %v823, %v857
      %v862 = vadd.f32 %v824, %v857
      %v863 = vadd.f32 %v825, %v857
      %v864 = vadd.f32 %v826, %v857
      %v865 = vadd.f32 %v827, %v857
      %v866 = vadd.f32 %v828, %v857
      %v867 = vadd.f32 %v829, %v857
      %v868 = vadd.f32 %v830, %v857
      %v869 = vadd.f32 %v831, %v857
      %v870 = vadd.f32 %v832, %v857
      %v871 = vadd.f32 %v833, %v857
      %v872 = vadd.f32 %v834, %v857
      %v873 = vadd.f32 %v835, %v857
      %v874 = vadd.f32 %v836, %v857
      %v875 = vadd.f32 %v837, %v857
      %v876 = vadd.f32 %v838, %v857
      %v877 = vadd.f32 %v839, %v857
      %v878 = vadd.f32 %v840, %v857
      %v879 = vadd.f32 %v841, %v857
      %v880 = vadd.f32 %v842, %v857
      %v881 = vadd.f32 %v843, %v857
      %v882 = vadd.f32 %v844, %v857
      %v883 = vadd.f32 %v845, %v857
      %v884 = vadd.f32 %v846, %v857
      %v885 = vadd.f32 %v847, %v857
      %v886 = vadd.f32 %v848, %v857
      %v887 = vadd.f32 %v849, %v857
      %v888 = vadd.f32 %v850, %v857
      %v889 = vadd.f32 %v851, %v857
      %v890 = vadd.f32 %v852, %v857
      %v891 = vxor.u32 %v859, 2147483648
      %v892 = vxor.u32 %v860, 2147483648
      %v893 = vxor.u32 %v861, 2147483648
      %v894 = vxor.u32 %v862, 2147483648
      %v895 = vxor.u32 %v863, 2147483648
      %v896 = vxor.u32 %v864, 2147483648
      %v897 = vxor.u32 %v865, 2147483648
      %v898 = vxor.u32 %v866, 2147483648
      %v899 = vxor.u32 %v867, 2147483648
      %v900 = vxor.u32 %v868, 2147483648
      %v901 = vxor.u32 %v869, 2147483648
      %v902 = vxor.u32 %v870, 2147483648
      %v903 = vxor.u32 %v871, 2147483648
      %v904 = vxor.u32 %v872, 2147483648
      %v905 = vxor.u32 %v873, 2147483648
      %v906 = vxor.u32 %v874, 2147483648
      %v907 = vxor.u32 %v875, 2147483648
      %v908 = vxor.u32 %v876, 2147483648
      %v909 = vxor.u32 %v877, 2147483648
      %v910 = vxor.u32 %v878, 2147483648
      %v911 = vxor.u32 %v879, 2147483648
      %v912 = vxor.u32 %v880, 2147483648
      %v913 = vxor.u32 %v881, 2147483648
      %v914 = vxor.u32 %v882, 2147483648
      %v915 = vxor.u32 %v883, 2147483648
      %v916 = vxor.u32 %v884, 2147483648
      %v917 = vxor.u32 %v885, 2147483648
      %v918 = vxor.u32 %v886, 2147483648
      %v919 = vxor.u32 %v887, 2147483648
      %v920 = vxor.u32 %v888, 2147483648
      %v921 = vxor.u32 %v889, 2147483648
      %v922 = vxor.u32 %v890, 2147483648
      %v923 = vmul.f32 %v891, 1.442695
      %v924 = vpow.pop %v923
      %v925 = vmul.f32 %v892, 1.442695
      %v926 = vpow.pop %v925
      %v927 = vmul.f32 %v893, 1.442695
      %v928 = vpow.pop %v927
      %v929 = vmul.f32 %v894, 1.442695
      %v930 = vpow.pop %v929
      %v931 = vmul.f32 %v895, 1.442695
      %v932 = vpow.pop %v931
      %v933 = vmul.f32 %v896, 1.442695
      %v934 = vpow.pop %v933
      %v935 = vmul.f32 %v897, 1.442695
      %v936 = vpow.pop %v935
      %v937 = vmul.f32 %v898, 1.442695
      %v938 = vpow.pop %v937
      %v939 = vmul.f32 %v899, 1.442695
      %v940 = vpow.pop %v939
      %v941 = vmul.f32 %v900, 1.442695
      %v942 = vpow.pop %v941
      %v943 = vmul.f32 %v901, 1.442695
      %v944 = vpow.pop %v943
      %v945 = vmul.f32 %v902, 1.442695
      %v946 = vpow.pop %v945
      %v947 = vmul.f32 %v903, 1.442695
      %v948 = vpow.pop %v947
      %v949 = vmul.f32 %v904, 1.442695
      %v950 = vpow.pop %v949
      %v951 = vmul.f32 %v905, 1.442695
      %v952 = vpow.pop %v951
      %v953 = vmul.f32 %v906, 1.442695
      %v954 = vpow.pop %v953
      %v955 = vmul.f32 %v907, 1.442695
      %v956 = vpow.pop %v955
      %v957 = vmul.f32 %v908, 1.442695
      %v958 = vpow.pop %v957
      %v959 = vmul.f32 %v909, 1.442695
      %v960 = vpow.pop %v959
      %v961 = vmul.f32 %v910, 1.442695
      %v962 = vpow.pop %v961
      %v963 = vmul.f32 %v911, 1.442695
      %v964 = vpow.pop %v963
      %v965 = vmul.f32 %v912, 1.442695
      %v966 = vpow.pop %v965
      %v967 = vmul.f32 %v913, 1.442695
      %v968 = vpow.pop %v967
      %v969 = vmul.f32 %v914, 1.442695
      %v970 = vpow.pop %v969
      %v971 = vmul.f32 %v915, 1.442695
      %v972 = vpow.pop %v971
      %v973 = vmul.f32 %v916, 1.442695
      %v974 = vpow.pop %v973
      %v975 = vmul.f32 %v917, 1.442695
      %v976 = vpow.pop %v975
      %v977 = vmul.f32 %v918, 1.442695
      %v978 = vpow.pop %v977
      %v979 = vmul.f32 %v919, 1.442695
      %v980 = vpow.pop %v979
      %v981 = vmul.f32 %v920, 1.442695
      %v982 = vpow.pop %v981
      %v983 = vmul.f32 %v921, 1.442695
      %v984 = vpow.pop %v983
      %v985 = vmul.f32 %v922, 1.442695
      %v986 = vpow.pop %v985
      %v987 = vadd.f32 %v924, 1.0
      %v988 = vadd.f32 %v926, 1.0
      %v989 = vadd.f32 %v928, 1.0
      %v990 = vadd.f32 %v930, 1.0
      %v991 = vadd.f32 %v932, 1.0
      %v992 = vadd.f32 %v934, 1.0
      %v993 = vadd.f32 %v936, 1.0
      %v994 = vadd.f32 %v938, 1.0
      %v995 = vadd.f32 %v940, 1.0
      %v996 = vadd.f32 %v942, 1.0
      %v997 = vadd.f32 %v944, 1.0
      %v998 = vadd.f32 %v946, 1.0
      %v999 = vadd.f32 %v948, 1.0
      %v1000 = vadd.f32 %v950, 1.0
      %v1001 = vadd.f32 %v952, 1.0
      %v1002 = vadd.f32 %v954, 1.0
      %v1003 = vadd.f32 %v956, 1.0
      %v1004 = vadd.f32 %v958, 1.0
      %v1005 = vadd.f32 %v960, 1.0
      %v1006 = vadd.f32 %v962, 1.0
      %v1007 = vadd.f32 %v964, 1.0
      %v1008 = vadd.f32 %v966, 1.0
      %v1009 = vadd.f32 %v968, 1.0
      %v1010 = vadd.f32 %v970, 1.0
      %v1011 = vadd.f32 %v972, 1.0
      %v1012 = vadd.f32 %v974, 1.0
      %v1013 = vadd.f32 %v976, 1.0
      %v1014 = vadd.f32 %v978, 1.0
      %v1015 = vadd.f32 %v980, 1.0
      %v1016 = vadd.f32 %v982, 1.0
      %v1017 = vadd.f32 %v984, 1.0
      %v1018 = vadd.f32 %v986, 1.0
      %v1019 = vrcp.pop %v987
      %v1020 = vmul.f32 1.0, %v1019
      %v1021 = vrcp.pop %v988
      %v1022 = vmul.f32 1.0, %v1021
      %v1023 = vrcp.pop %v989
      %v1024 = vmul.f32 1.0, %v1023
      %v1025 = vrcp.pop %v990
      %v1026 = vmul.f32 1.0, %v1025
      %v1027 = vrcp.pop %v991
      %v1028 = vmul.f32 1.0, %v1027
      %v1029 = vrcp.pop %v992
      %v1030 = vmul.f32 1.0, %v1029
      %v1031 = vrcp.pop %v993
      %v1032 = vmul.f32 1.0, %v1031
      %v1033 = vrcp.pop %v994
      %v1034 = vmul.f32 1.0, %v1033
      %v1035 = vrcp.pop %v995
      %v1036 = vmul.f32 1.0, %v1035
      %v1037 = vrcp.pop %v996
      %v1038 = vmul.f32 1.0, %v1037
      %v1039 = vrcp.pop %v997
      %v1040 = vmul.f32 1.0, %v1039
      %v1041 = vrcp.pop %v998
      %v1042 = vmul.f32 1.0, %v1041
      %v1043 = vrcp.pop %v999
      %v1044 = vmul.f32 1.0, %v1043
      %v1045 = vrcp.pop %v1000
      %v1046 = vmul.f32 1.0, %v1045
      %v1047 = vrcp.pop %v1001
      %v1048 = vmul.f32 1.0, %v1047
      %v1049 = vrcp.pop %v1002
      %v1050 = vmul.f32 1.0, %v1049
      %v1051 = vrcp.pop %v1003
      %v1052 = vmul.f32 1.0, %v1051
      %v1053 = vrcp.pop %v1004
      %v1054 = vmul.f32 1.0, %v1053
      %v1055 = vrcp.pop %v1005
      %v1056 = vmul.f32 1.0, %v1055
      %v1057 = vrcp.pop %v1006
      %v1058 = vmul.f32 1.0, %v1057
      %v1059 = vrcp.pop %v1007
      %v1060 = vmul.f32 1.0, %v1059
      %v1061 = vrcp.pop %v1008
      %v1062 = vmul.f32 1.0, %v1061
      %v1063 = vrcp.pop %v1009
      %v1064 = vmul.f32 1.0, %v1063
      %v1065 = vrcp.pop %v1010
      %v1066 = vmul.f32 1.0, %v1065
      %v1067 = vrcp.pop %v1011
      %v1068 = vmul.f32 1.0, %v1067
      %v1069 = vrcp.pop %v1012
      %v1070 = vmul.f32 1.0, %v1069
      %v1071 = vrcp.pop %v1013
      %v1072 = vmul.f32 1.0, %v1071
      %v1073 = vrcp.pop %v1014
      %v1074 = vmul.f32 1.0, %v1073
      %v1075 = vrcp.pop %v1015
      %v1076 = vmul.f32 1.0, %v1075
      %v1077 = vrcp.pop %v1016
      %v1078 = vmul.f32 1.0, %v1077
      %v1079 = vrcp.pop %v1017
      %v1080 = vmul.f32 1.0, %v1079
      %v1081 = vrcp.pop %v1018
      %v1082 = vmul.f32 1.0, %v1081
      %v1083 = vmul.f32 %v859, %v1020
      %v1084 = vmul.f32 %v860, %v1022
      %v1085 = vmul.f32 %v861, %v1024
      %v1086 = vmul.f32 %v862, %v1026
      %v1087 = vmul.f32 %v863, %v1028
      %v1088 = vmul.f32 %v864, %v1030
      %v1089 = vmul.f32 %v865, %v1032
      %v1090 = vmul.f32 %v866, %v1034
      %v1091 = vmul.f32 %v867, %v1036
      %v1092 = vmul.f32 %v868, %v1038
      %v1093 = vmul.f32 %v869, %v1040
      %v1094 = vmul.f32 %v870, %v1042
      %v1095 = vmul.f32 %v871, %v1044
      %v1096 = vmul.f32 %v872, %v1046
      %v1097 = vmul.f32 %v873, %v1048
      %v1098 = vmul.f32 %v874, %v1050
      %v1099 = vmul.f32 %v875, %v1052
      %v1100 = vmul.f32 %v876, %v1054
      %v1101 = vmul.f32 %v877, %v1056
      %v1102 = vmul.f32 %v878, %v1058
      %v1103 = vmul.f32 %v879, %v1060
      %v1104 = vmul.f32 %v880, %v1062
      %v1105 = vmul.f32 %v881, %v1064
      %v1106 = vmul.f32 %v882, %v1066
      %v1107 = vmul.f32 %v883, %v1068
      %v1108 = vmul.f32 %v884, %v1070
      %v1109 = vmul.f32 %v885, %v1072
      %v1110 = vmul.f32 %v886, %v1074
      %v1111 = vmul.f32 %v887, %v1076
      %v1112 = vmul.f32 %v888, %v1078
      %v1113 = vmul.f32 %v889, %v1080
      %v1114 = vmul.f32 %v890, %v1082
      %v1115 = vld [vmem:[%s4] sm:$0x3]
      %v1117 = vsel %vm648, %v1115, 0
      %1119 = vmatprep.subr.bf16.mxu0 0
      %1120 = vmatpush1.bf16.msra.mxu0 0
      %1121 = vmatprep.subr.bf16.mxu0 0
      %1122 = vmatpush1.bf16.msra.mxu0 0
      %1123 = vmatprep.subr.bf16.mxu0 0
      %1124 = vmatpush1.bf16.msra.mxu0 0
      %1125 = vmatprep.subr.bf16.mxu0 0
      %1126 = vmatpush1.bf16.msra.mxu0 0
      %1127 = vmatprep.subr.bf16.mxu0 0
      %1128 = vmatpush1.bf16.msra.mxu0 0
      %1129 = vmatprep.subr.bf16.mxu0 0
      %1130 = vmatpush1.bf16.msra.mxu0 0
      %1131 = vmatprep.subr.bf16.mxu0 0
      %1132 = vmatpush1.bf16.msra.mxu0 0
      %1133 = vmatprep.subr.bf16.mxu0 0
      %1134 = vmatpush1.bf16.msra.mxu0 %v1117
      %1135 = vmatprep.subr.bf16.mxu0 0
      %1136 = vmatpush2.bf16.msra.mxu0 0
      %1137 = vmatprep.subr.bf16.mxu0 0
      %1138 = vmatpush2.bf16.msra.mxu0 0
      %1139 = vmatprep.subr.bf16.mxu0 0
      %1140 = vmatpush2.bf16.msra.mxu0 0
      %1141 = vmatprep.subr.bf16.mxu0 0
      %1142 = vmatpush2.bf16.msra.mxu0 0
      %1143 = vmatprep.subr.bf16.mxu0 0
      %1144 = vmatpush2.bf16.msra.mxu0 0
      %1145 = vmatprep.subr.bf16.mxu0 0
      %1146 = vmatpush2.bf16.msra.mxu0 0
      %1147 = vmatprep.subr.bf16.mxu0 0
      %1148 = vmatpush2.bf16.msra.mxu0 0
      %1149 = vmatprep.subr.bf16.mxu0 0
      %1150 = vmatpush2.bf16.msra.mxu0 0
      %1151 = vmatprep.mubr.bf16.mxu0 0
      %1152 = vmatmul.mubr.bf16.gmra.mxu0 %v601
      %v1153 = vpop.f32.mrf.mxu0
      %v1154 = vadd.f32 0.0, %v1153
      %v1155 = vpop.f32.mrf.mxu0
      %v1156 = vpop.f32.mrf.mxu0
      %v1157 = vadd.f32 0.0, %v1156
      %v1158 = vpop.f32.mrf.mxu0
      %1159 = vmatprep.mubr.bf16.mxu0 0
      %1160 = vmatmul.mubr.bf16.gmra.mxu0 %v604
      %v1161 = vpop.f32.mrf.mxu0
      %v1162 = vadd.f32 0.0, %v1161
      %v1163 = vpop.f32.mrf.mxu0
      %v1164 = vpop.f32.mrf.mxu0
      %v1165 = vadd.f32 0.0, %v1164
      %v1166 = vpop.f32.mrf.mxu0
      %1167 = vmatprep.mubr.bf16.mxu0 0
      %1168 = vmatmul.mubr.bf16.gmra.mxu0 %v607
      %v1169 = vpop.f32.mrf.mxu0
      %v1170 = vadd.f32 0.0, %v1169
      %v1171 = vpop.f32.mrf.mxu0
      %v1172 = vpop.f32.mrf.mxu0
      %v1173 = vadd.f32 0.0, %v1172
      %v1174 = vpop.f32.mrf.mxu0
      %1175 = vmatprep.mubr.bf16.mxu0 0
      %1176 = vmatmul.mubr.bf16.gmra.mxu0 %v610
      %v1177 = vpop.f32.mrf.mxu0
      %v1178 = vadd.f32 0.0, %v1177
      %v1179 = vpop.f32.mrf.mxu0
      %v1180 = vpop.f32.mrf.mxu0
      %v1181 = vadd.f32 0.0, %v1180
      %v1182 = vpop.f32.mrf.mxu0
      %1183 = vmatprep.mubr.bf16.mxu0 0
      %1184 = vmatmul.mubr.bf16.gmra.mxu0 %v613
      %v1185 = vpop.f32.mrf.mxu0
      %v1186 = vadd.f32 0.0, %v1185
      %v1187 = vpop.f32.mrf.mxu0
      %v1188 = vpop.f32.mrf.mxu0
      %v1189 = vadd.f32 0.0, %v1188
      %v1190 = vpop.f32.mrf.mxu0
      %1191 = vmatprep.mubr.bf16.mxu0 0
      %1192 = vmatmul.mubr.bf16.gmra.mxu0 %v616
      %v1193 = vpop.f32.mrf.mxu0
      %v1194 = vadd.f32 0.0, %v1193
      %v1195 = vpop.f32.mrf.mxu0
      %v1196 = vpop.f32.mrf.mxu0
      %v1197 = vadd.f32 0.0, %v1196
      %v1198 = vpop.f32.mrf.mxu0
      %1199 = vmatprep.mubr.bf16.mxu0 0
      %1200 = vmatmul.mubr.bf16.gmra.mxu0 %v619
      %v1201 = vpop.f32.mrf.mxu0
      %v1202 = vadd.f32 0.0, %v1201
      %v1203 = vpop.f32.mrf.mxu0
      %v1204 = vpop.f32.mrf.mxu0
      %v1205 = vadd.f32 0.0, %v1204
      %v1206 = vpop.f32.mrf.mxu0
      %1207 = vmatprep.mubr.bf16.mxu0 0
      %1208 = vmatmul.mubr.bf16.gmra.mxu0 %v622
      %v1209 = vpop.f32.mrf.mxu0
      %v1210 = vadd.f32 0.0, %v1209
      %v1211 = vpop.f32.mrf.mxu0
      %v1212 = vpop.f32.mrf.mxu0
      %v1213 = vadd.f32 0.0, %v1212
      %v1214 = vpop.f32.mrf.mxu0
      %1215 = vmatprep.mubr.bf16.mxu0 0
      %1216 = vmatmul.mubr.bf16.gmra.mxu0 %v625
      %v1217 = vpop.f32.mrf.mxu0
      %v1218 = vadd.f32 0.0, %v1217
      %v1219 = vpop.f32.mrf.mxu0
      %v1220 = vpop.f32.mrf.mxu0
      %v1221 = vadd.f32 0.0, %v1220
      %v1222 = vpop.f32.mrf.mxu0
      %1223 = vmatprep.mubr.bf16.mxu0 0
      %1224 = vmatmul.mubr.bf16.gmra.mxu0 %v628
      %v1225 = vpop.f32.mrf.mxu0
      %v1226 = vadd.f32 0.0, %v1225
      %v1227 = vpop.f32.mrf.mxu0
      %v1228 = vpop.f32.mrf.mxu0
      %v1229 = vadd.f32 0.0, %v1228
      %v1230 = vpop.f32.mrf.mxu0
      %1231 = vmatprep.mubr.bf16.mxu0 0
      %1232 = vmatmul.mubr.bf16.gmra.mxu0 %v631
      %v1233 = vpop.f32.mrf.mxu0
      %v1234 = vadd.f32 0.0, %v1233
      %v1235 = vpop.f32.mrf.mxu0
      %v1236 = vpop.f32.mrf.mxu0
      %v1237 = vadd.f32 0.0, %v1236
      %v1238 = vpop.f32.mrf.mxu0
      %1239 = vmatprep.mubr.bf16.mxu0 0
      %1240 = vmatmul.mubr.bf16.gmra.mxu0 %v634
      %v1241 = vpop.f32.mrf.mxu0
      %v1242 = vadd.f32 0.0, %v1241
      %v1243 = vpop.f32.mrf.mxu0
      %v1244 = vpop.f32.mrf.mxu0
      %v1245 = vadd.f32 0.0, %v1244
      %v1246 = vpop.f32.mrf.mxu0
      %1247 = vmatprep.mubr.bf16.mxu0 0
      %1248 = vmatmul.mubr.bf16.gmra.mxu0 %v637
      %v1249 = vpop.f32.mrf.mxu0
      %v1250 = vadd.f32 0.0, %v1249
      %v1251 = vpop.f32.mrf.mxu0
      %v1252 = vpop.f32.mrf.mxu0
      %v1253 = vadd.f32 0.0, %v1252
      %v1254 = vpop.f32.mrf.mxu0
      %1255 = vmatprep.mubr.bf16.mxu0 0
      %1256 = vmatmul.mubr.bf16.gmra.mxu0 %v640
      %v1257 = vpop.f32.mrf.mxu0
      %v1258 = vadd.f32 0.0, %v1257
      %v1259 = vpop.f32.mrf.mxu0
      %v1260 = vpop.f32.mrf.mxu0
      %v1261 = vadd.f32 0.0, %v1260
      %v1262 = vpop.f32.mrf.mxu0
      %1263 = vmatprep.mubr.bf16.mxu0 0
      %1264 = vmatmul.mubr.bf16.gmra.mxu0 %v643
      %v1265 = vpop.f32.mrf.mxu0
      %v1266 = vadd.f32 0.0, %v1265
      %v1267 = vpop.f32.mrf.mxu0
      %v1268 = vpop.f32.mrf.mxu0
      %v1269 = vadd.f32 0.0, %v1268
      %v1270 = vpop.f32.mrf.mxu0
      %1271 = vmatprep.mubr.bf16.mxu0 0
      %1272 = vmatmul.mubr.bf16.gmra.mxu0 %v646
      %v1273 = vpop.f32.mrf.mxu0
      %v1274 = vadd.f32 0.0, %v1273
      %v1275 = vpop.f32.mrf.mxu0
      %v1276 = vpop.f32.mrf.mxu0
      %v1277 = vadd.f32 0.0, %v1276
      %v1278 = vpop.f32.mrf.mxu0
      %1279 = vdwg.mxu0
      %v1280 = vld [vmem:[%s5] sm:$0x1]
      %v1281 = vld [vmem:[%s6] sm:$0x1]
      %v1283 = vlaneseq
      %v1284 = vshrl.u32 %v1283, 7
      %v1285 = vsub.s32 0, %v1284
      %v1286 = vrot.slane %v1280, %v1285
      %v1288 = vmul.f32 %v1154, %v1286
      %v1289 = vmul.f32 %v1157, %v1286
      %v1290 = vmul.f32 %v1162, %v1286
      %v1291 = vmul.f32 %v1165, %v1286
      %v1292 = vmul.f32 %v1170, %v1286
      %v1293 = vmul.f32 %v1173, %v1286
      %v1294 = vmul.f32 %v1178, %v1286
      %v1295 = vmul.f32 %v1181, %v1286
      %v1296 = vmul.f32 %v1186, %v1286
      %v1297 = vmul.f32 %v1189, %v1286
      %v1298 = vmul.f32 %v1194, %v1286
      %v1299 = vmul.f32 %v1197, %v1286
      %v1300 = vmul.f32 %v1202, %v1286
      %v1301 = vmul.f32 %v1205, %v1286
      %v1302 = vmul.f32 %v1210, %v1286
      %v1303 = vmul.f32 %v1213, %v1286
      %v1304 = vmul.f32 %v1218, %v1286
      %v1305 = vmul.f32 %v1221, %v1286
      %v1306 = vmul.f32 %v1226, %v1286
      %v1307 = vmul.f32 %v1229, %v1286
      %v1308 = vmul.f32 %v1234, %v1286
      %v1309 = vmul.f32 %v1237, %v1286
      %v1310 = vmul.f32 %v1242, %v1286
      %v1311 = vmul.f32 %v1245, %v1286
      %v1312 = vmul.f32 %v1250, %v1286
      %v1313 = vmul.f32 %v1253, %v1286
      %v1314 = vmul.f32 %v1258, %v1286
      %v1315 = vmul.f32 %v1261, %v1286
      %v1316 = vmul.f32 %v1266, %v1286
      %v1317 = vmul.f32 %v1269, %v1286
      %v1318 = vmul.f32 %v1274, %v1286
      %v1319 = vmul.f32 %v1277, %v1286
      %v1321 = vlaneseq
      %v1322 = vshrl.u32 %v1321, 7
      %v1323 = vsub.s32 0, %v1322
      %v1324 = vrot.slane %v1281, %v1323
      %v1326 = vadd.f32 %v1288, %v1324
      %v1327 = vadd.f32 %v1289, %v1324
      %v1328 = vadd.f32 %v1290, %v1324
      %v1329 = vadd.f32 %v1291, %v1324
      %v1330 = vadd.f32 %v1292, %v1324
      %v1331 = vadd.f32 %v1293, %v1324
      %v1332 = vadd.f32 %v1294, %v1324
      %v1333 = vadd.f32 %v1295, %v1324
      %v1334 = vadd.f32 %v1296, %v1324
      %v1335 = vadd.f32 %v1297, %v1324
      %v1336 = vadd.f32 %v1298, %v1324
      %v1337 = vadd.f32 %v1299, %v1324
      %v1338 = vadd.f32 %v1300, %v1324
      %v1339 = vadd.f32 %v1301, %v1324
      %v1340 = vadd.f32 %v1302, %v1324
      %v1341 = vadd.f32 %v1303, %v1324
      %v1342 = vadd.f32 %v1304, %v1324
      %v1343 = vadd.f32 %v1305, %v1324
      %v1344 = vadd.f32 %v1306, %v1324
      %v1345 = vadd.f32 %v1307, %v1324
      %v1346 = vadd.f32 %v1308, %v1324
      %v1347 = vadd.f32 %v1309, %v1324
      %v1348 = vadd.f32 %v1310, %v1324
      %v1349 = vadd.f32 %v1311, %v1324
      %v1350 = vadd.f32 %v1312, %v1324
      %v1351 = vadd.f32 %v1313, %v1324
      %v1352 = vadd.f32 %v1314, %v1324
      %v1353 = vadd.f32 %v1315, %v1324
      %v1354 = vadd.f32 %v1316, %v1324
      %v1355 = vadd.f32 %v1317, %v1324
      %v1356 = vadd.f32 %v1318, %v1324
      %v1357 = vadd.f32 %v1319, %v1324
      %v1358 = vxor.u32 %v1326, 2147483648
      %v1359 = vxor.u32 %v1327, 2147483648
      %v1360 = vxor.u32 %v1328, 2147483648
      %v1361 = vxor.u32 %v1329, 2147483648
      %v1362 = vxor.u32 %v1330, 2147483648
      %v1363 = vxor.u32 %v1331, 2147483648
      %v1364 = vxor.u32 %v1332, 2147483648
      %v1365 = vxor.u32 %v1333, 2147483648
      %v1366 = vxor.u32 %v1334, 2147483648
      %v1367 = vxor.u32 %v1335, 2147483648
      %v1368 = vxor.u32 %v1336, 2147483648
      %v1369 = vxor.u32 %v1337, 2147483648
      %v1370 = vxor.u32 %v1338, 2147483648
      %v1371 = vxor.u32 %v1339, 2147483648
      %v1372 = vxor.u32 %v1340, 2147483648
      %v1373 = vxor.u32 %v1341, 2147483648
      %v1374 = vxor.u32 %v1342, 2147483648
      %v1375 = vxor.u32 %v1343, 2147483648
      %v1376 = vxor.u32 %v1344, 2147483648
      %v1377 = vxor.u32 %v1345, 2147483648
      %v1378 = vxor.u32 %v1346, 2147483648
      %v1379 = vxor.u32 %v1347, 2147483648
      %v1380 = vxor.u32 %v1348, 2147483648
      %v1381 = vxor.u32 %v1349, 2147483648
      %v1382 = vxor.u32 %v1350, 2147483648
      %v1383 = vxor.u32 %v1351, 2147483648
      %v1384 = vxor.u32 %v1352, 2147483648
      %v1385 = vxor.u32 %v1353, 2147483648
      %v1386 = vxor.u32 %v1354, 2147483648
      %v1387 = vxor.u32 %v1355, 2147483648
      %v1388 = vxor.u32 %v1356, 2147483648
      %v1389 = vxor.u32 %v1357, 2147483648
      %v1390 = vmul.f32 %v1358, 1.442695
      %v1391 = vpow.pop %v1390
      %v1392 = vmul.f32 %v1359, 1.442695
      %v1393 = vpow.pop %v1392
      %v1394 = vmul.f32 %v1360, 1.442695
      %v1395 = vpow.pop %v1394
      %v1396 = vmul.f32 %v1361, 1.442695
      %v1397 = vpow.pop %v1396
      %v1398 = vmul.f32 %v1362, 1.442695
      %v1399 = vpow.pop %v1398
      %v1400 = vmul.f32 %v1363, 1.442695
      %v1401 = vpow.pop %v1400
      %v1402 = vmul.f32 %v1364, 1.442695
      %v1403 = vpow.pop %v1402
      %v1404 = vmul.f32 %v1365, 1.442695
      %v1405 = vpow.pop %v1404
      %v1406 = vmul.f32 %v1366, 1.442695
      %v1407 = vpow.pop %v1406
      %v1408 = vmul.f32 %v1367, 1.442695
      %v1409 = vpow.pop %v1408
      %v1410 = vmul.f32 %v1368, 1.442695
      %v1411 = vpow.pop %v1410
      %v1412 = vmul.f32 %v1369, 1.442695
      %v1413 = vpow.pop %v1412
      %v1414 = vmul.f32 %v1370, 1.442695
      %v1415 = vpow.pop %v1414
      %v1416 = vmul.f32 %v1371, 1.442695
      %v1417 = vpow.pop %v1416
      %v1418 = vmul.f32 %v1372, 1.442695
      %v1419 = vpow.pop %v1418
      %v1420 = vmul.f32 %v1373, 1.442695
      %v1421 = vpow.pop %v1420
      %v1422 = vmul.f32 %v1374, 1.442695
      %v1423 = vpow.pop %v1422
      %v1424 = vmul.f32 %v1375, 1.442695
      %v1425 = vpow.pop %v1424
      %v1426 = vmul.f32 %v1376, 1.442695
      %v1427 = vpow.pop %v1426
      %v1428 = vmul.f32 %v1377, 1.442695
      %v1429 = vpow.pop %v1428
      %v1430 = vmul.f32 %v1378, 1.442695
      %v1431 = vpow.pop %v1430
      %v1432 = vmul.f32 %v1379, 1.442695
      %v1433 = vpow.pop %v1432
      %v1434 = vmul.f32 %v1380, 1.442695
      %v1435 = vpow.pop %v1434
      %v1436 = vmul.f32 %v1381, 1.442695
      %v1437 = vpow.pop %v1436
      %v1438 = vmul.f32 %v1382, 1.442695
      %v1439 = vpow.pop %v1438
      %v1440 = vmul.f32 %v1383, 1.442695
      %v1441 = vpow.pop %v1440
      %v1442 = vmul.f32 %v1384, 1.442695
      %v1443 = vpow.pop %v1442
      %v1444 = vmul.f32 %v1385, 1.442695
      %v1445 = vpow.pop %v1444
      %v1446 = vmul.f32 %v1386, 1.442695
      %v1447 = vpow.pop %v1446
      %v1448 = vmul.f32 %v1387, 1.442695
      %v1449 = vpow.pop %v1448
      %v1450 = vmul.f32 %v1388, 1.442695
      %v1451 = vpow.pop %v1450
      %v1452 = vmul.f32 %v1389, 1.442695
      %v1453 = vpow.pop %v1452
      %v1454 = vadd.f32 %v1391, 1.0
      %v1455 = vadd.f32 %v1393, 1.0
      %v1456 = vadd.f32 %v1395, 1.0
      %v1457 = vadd.f32 %v1397, 1.0
      %v1458 = vadd.f32 %v1399, 1.0
      %v1459 = vadd.f32 %v1401, 1.0
      %v1460 = vadd.f32 %v1403, 1.0
      %v1461 = vadd.f32 %v1405, 1.0
      %v1462 = vadd.f32 %v1407, 1.0
      %v1463 = vadd.f32 %v1409, 1.0
      %v1464 = vadd.f32 %v1411, 1.0
      %v1465 = vadd.f32 %v1413, 1.0
      %v1466 = vadd.f32 %v1415, 1.0
      %v1467 = vadd.f32 %v1417, 1.0
      %v1468 = vadd.f32 %v1419, 1.0
      %v1469 = vadd.f32 %v1421, 1.0
      %v1470 = vadd.f32 %v1423, 1.0
      %v1471 = vadd.f32 %v1425, 1.0
      %v1472 = vadd.f32 %v1427, 1.0
      %v1473 = vadd.f32 %v1429, 1.0
      %v1474 = vadd.f32 %v1431, 1.0
      %v1475 = vadd.f32 %v1433, 1.0
      %v1476 = vadd.f32 %v1435, 1.0
      %v1477 = vadd.f32 %v1437, 1.0
      %v1478 = vadd.f32 %v1439, 1.0
      %v1479 = vadd.f32 %v1441, 1.0
      %v1480 = vadd.f32 %v1443, 1.0
      %v1481 = vadd.f32 %v1445, 1.0
      %v1482 = vadd.f32 %v1447, 1.0
      %v1483 = vadd.f32 %v1449, 1.0
      %v1484 = vadd.f32 %v1451, 1.0
      %v1485 = vadd.f32 %v1453, 1.0
      %v1486 = vrcp.pop %v1454
      %v1487 = vmul.f32 1.0, %v1486
      %v1488 = vrcp.pop %v1455
      %v1489 = vmul.f32 1.0, %v1488
      %v1490 = vrcp.pop %v1456
      %v1491 = vmul.f32 1.0, %v1490
      %v1492 = vrcp.pop %v1457
      %v1493 = vmul.f32 1.0, %v1492
      %v1494 = vrcp.pop %v1458
      %v1495 = vmul.f32 1.0, %v1494
      %v1496 = vrcp.pop %v1459
      %v1497 = vmul.f32 1.0, %v1496
      %v1498 = vrcp.pop %v1460
      %v1499 = vmul.f32 1.0, %v1498
      %v1500 = vrcp.pop %v1461
      %v1501 = vmul.f32 1.0, %v1500
      %v1502 = vrcp.pop %v1462
      %v1503 = vmul.f32 1.0, %v1502
      %v1504 = vrcp.pop %v1463
      %v1505 = vmul.f32 1.0, %v1504
      %v1506 = vrcp.pop %v1464
      %v1507 = vmul.f32 1.0, %v1506
      %v1508 = vrcp.pop %v1465
      %v1509 = vmul.f32 1.0, %v1508
      %v1510 = vrcp.pop %v1466
      %v1511 = vmul.f32 1.0, %v1510
      %v1512 = vrcp.pop %v1467
      %v1513 = vmul.f32 1.0, %v1512
      %v1514 = vrcp.pop %v1468
      %v1515 = vmul.f32 1.0, %v1514
      %v1516 = vrcp.pop %v1469
      %v1517 = vmul.f32 1.0, %v1516
      %v1518 = vrcp.pop %v1470
      %v1519 = vmul.f32 1.0, %v1518
      %v1520 = vrcp.pop %v1471
      %v1521 = vmul.f32 1.0, %v1520
      %v1522 = vrcp.pop %v1472
      %v1523 = vmul.f32 1.0, %v1522
      %v1524 = vrcp.pop %v1473
      %v1525 = vmul.f32 1.0, %v1524
      %v1526 = vrcp.pop %v1474
      %v1527 = vmul.f32 1.0, %v1526
      %v1528 = vrcp.pop %v1475
      %v1529 = vmul.f32 1.0, %v1528
      %v1530 = vrcp.pop %v1476
      %v1531 = vmul.f32 1.0, %v1530
      %v1532 = vrcp.pop %v1477
      %v1533 = vmul.f32 1.0, %v1532
      %v1534 = vrcp.pop %v1478
      %v1535 = vmul.f32 1.0, %v1534
      %v1536 = vrcp.pop %v1479
      %v1537 = vmul.f32 1.0, %v1536
      %v1538 = vrcp.pop %v1480
      %v1539 = vmul.f32 1.0, %v1538
      %v1540 = vrcp.pop %v1481
      %v1541 = vmul.f32 1.0, %v1540
      %v1542 = vrcp.pop %v1482
      %v1543 = vmul.f32 1.0, %v1542
      %v1544 = vrcp.pop %v1483
      %v1545 = vmul.f32 1.0, %v1544
      %v1546 = vrcp.pop %v1484
      %v1547 = vmul.f32 1.0, %v1546
      %v1548 = vrcp.pop %v1485
      %v1549 = vmul.f32 1.0, %v1548
      %v1550 = vmul.f32 %v1326, %v1487
      %v1551 = vmul.f32 %v1327, %v1489
      %v1552 = vmul.f32 %v1328, %v1491
      %v1553 = vmul.f32 %v1329, %v1493
      %v1554 = vmul.f32 %v1330, %v1495
      %v1555 = vmul.f32 %v1331, %v1497
      %v1556 = vmul.f32 %v1332, %v1499
      %v1557 = vmul.f32 %v1333, %v1501
      %v1558 = vmul.f32 %v1334, %v1503
      %v1559 = vmul.f32 %v1335, %v1505
      %v1560 = vmul.f32 %v1336, %v1507
      %v1561 = vmul.f32 %v1337, %v1509
      %v1562 = vmul.f32 %v1338, %v1511
      %v1563 = vmul.f32 %v1339, %v1513
      %v1564 = vmul.f32 %v1340, %v1515
      %v1565 = vmul.f32 %v1341, %v1517
      %v1566 = vmul.f32 %v1342, %v1519
      %v1567 = vmul.f32 %v1343, %v1521
      %v1568 = vmul.f32 %v1344, %v1523
      %v1569 = vmul.f32 %v1345, %v1525
      %v1570 = vmul.f32 %v1346, %v1527
      %v1571 = vmul.f32 %v1347, %v1529
      %v1572 = vmul.f32 %v1348, %v1531
      %v1573 = vmul.f32 %v1349, %v1533
      %v1574 = vmul.f32 %v1350, %v1535
      %v1575 = vmul.f32 %v1351, %v1537
      %v1576 = vmul.f32 %v1352, %v1539
      %v1577 = vmul.f32 %v1353, %v1541
      %v1578 = vmul.f32 %v1354, %v1543
      %v1579 = vmul.f32 %v1355, %v1545
      %v1580 = vmul.f32 %v1356, %v1547
      %v1581 = vmul.f32 %v1357, %v1549
      %v1582 = vpack.c.bf16 %v1551, %v1550
      %v1583 = vpack.c.bf16 %v1553, %v1552
      %v1584 = vpack.c.bf16 %v1555, %v1554
      %v1585 = vpack.c.bf16 %v1557, %v1556
      %v1586 = vpack.c.bf16 %v1559, %v1558
      %v1587 = vpack.c.bf16 %v1561, %v1560
      %v1588 = vpack.c.bf16 %v1563, %v1562
      %v1589 = vpack.c.bf16 %v1565, %v1564
      %v1590 = vpack.c.bf16 %v1567, %v1566
      %v1591 = vpack.c.bf16 %v1569, %v1568
      %v1592 = vpack.c.bf16 %v1571, %v1570
      %v1593 = vpack.c.bf16 %v1573, %v1572
      %v1594 = vpack.c.bf16 %v1575, %v1574
      %v1595 = vpack.c.bf16 %v1577, %v1576
      %v1596 = vpack.c.bf16 %v1579, %v1578
      %v1597 = vpack.c.bf16 %v1581, %v1580
      %v1598 = vlaneseq
      %v1599 = vshrl.u32 %v1598, 7
      %v1600 = vadd.s32 %v1599, 8
      %v1601 = vadd.s32 %v1599, 16
      %v1602 = vadd.s32 %v1599, 24
      %v1603 = vadd.s32 %v1599, 32
      %v1604 = vadd.s32 %v1599, 40
      %v1605 = vadd.s32 %v1599, 48
      %v1606 = vadd.s32 %v1599, 56
      %v1607 = vadd.s32 %v1599, 64
      %v1608 = vadd.s32 %v1599, 72
      %v1609 = vadd.s32 %v1599, 80
      %v1610 = vadd.s32 %v1599, 88
      %v1611 = vadd.s32 %v1599, 96
      %v1612 = vadd.s32 %v1599, 104
      %v1613 = vadd.s32 %v1599, 112
      %v1614 = vadd.s32 %v1599, 120
      %v1615 = vadd.s32 %v1599, 128
      %v1616 = vadd.s32 %v1599, 136
      %v1617 = vadd.s32 %v1599, 144
      %v1618 = vadd.s32 %v1599, 152
      %v1619 = vadd.s32 %v1599, 160
      %v1620 = vadd.s32 %v1599, 168
      %v1621 = vadd.s32 %v1599, 176
      %v1622 = vadd.s32 %v1599, 184
      %v1623 = vadd.s32 %v1599, 192
      %v1624 = vadd.s32 %v1599, 200
      %v1625 = vadd.s32 %v1599, 208
      %v1626 = vadd.s32 %v1599, 216
      %v1627 = vadd.s32 %v1599, 224
      %v1628 = vadd.s32 %v1599, 232
      %v1629 = vadd.s32 %v1599, 240
      %v1630 = vadd.s32 %v1599, 248
      %vm1631 = vcmp.lt.s32.totalorder %v1599, 0
      %v1632 = vsub.s32 0, %v1599
      %v1633 = vsel %vm1631, %v1632, %v1599
      %v1634 = vshrl.u32 %v1633, 4
      %v1635 = vand.u32 %v1633, 15
      %v1636 = vsub.s32 0, %v1635
      %v1637 = vsel %vm1631, %v1636, %v1635
      %vm1638 = vcmp.lt.s32.totalorder %v1600, 0
      %v1639 = vsub.s32 0, %v1600
      %v1640 = vsel %vm1638, %v1639, %v1600
      %v1641 = vshrl.u32 %v1640, 4
      %v1642 = vand.u32 %v1640, 15
      %v1643 = vsub.s32 0, %v1642
      %v1644 = vsel %vm1638, %v1643, %v1642
      %vm1645 = vcmp.lt.s32.totalorder %v1601, 0
      %v1646 = vsub.s32 0, %v1601
      %v1647 = vsel %vm1645, %v1646, %v1601
      %v1648 = vshrl.u32 %v1647, 4
      %v1649 = vand.u32 %v1647, 15
      %v1650 = vsub.s32 0, %v1649
      %v1651 = vsel %vm1645, %v1650, %v1649
      %vm1652 = vcmp.lt.s32.totalorder %v1602, 0
      %v1653 = vsub.s32 0, %v1602
      %v1654 = vsel %vm1652, %v1653, %v1602
      %v1655 = vshrl.u32 %v1654, 4
      %v1656 = vand.u32 %v1654, 15
      %v1657 = vsub.s32 0, %v1656
      %v1658 = vsel %vm1652, %v1657, %v1656
      %vm1659 = vcmp.lt.s32.totalorder %v1603, 0
      %v1660 = vsub.s32 0, %v1603
      %v1661 = vsel %vm1659, %v1660, %v1603
      %v1662 = vshrl.u32 %v1661, 4
      %v1663 = vand.u32 %v1661, 15
      %v1664 = vsub.s32 0, %v1663
      %v1665 = vsel %vm1659, %v1664, %v1663
      %vm1666 = vcmp.lt.s32.totalorder %v1604, 0
      %v1667 = vsub.s32 0, %v1604
      %v1668 = vsel %vm1666, %v1667, %v1604
      %v1669 = vshrl.u32 %v1668, 4
      %v1670 = vand.u32 %v1668, 15
      %v1671 = vsub.s32 0, %v1670
      %v1672 = vsel %vm1666, %v1671, %v1670
      %vm1673 = vcmp.lt.s32.totalorder %v1605, 0
      %v1674 = vsub.s32 0, %v1605
      %v1675 = vsel %vm1673, %v1674, %v1605
      %v1676 = vshrl.u32 %v1675, 4
      %v1677 = vand.u32 %v1675, 15
      %v1678 = vsub.s32 0, %v1677
      %v1679 = vsel %vm1673, %v1678, %v1677
      %vm1680 = vcmp.lt.s32.totalorder %v1606, 0
      %v1681 = vsub.s32 0, %v1606
      %v1682 = vsel %vm1680, %v1681, %v1606
      %v1683 = vshrl.u32 %v1682, 4
      %v1684 = vand.u32 %v1682, 15
      %v1685 = vsub.s32 0, %v1684
      %v1686 = vsel %vm1680, %v1685, %v1684
      %vm1687 = vcmp.lt.s32.totalorder %v1607, 0
      %v1688 = vsub.s32 0, %v1607
      %v1689 = vsel %vm1687, %v1688, %v1607
      %v1690 = vshrl.u32 %v1689, 4
      %v1691 = vand.u32 %v1689, 15
      %v1692 = vsub.s32 0, %v1691
      %v1693 = vsel %vm1687, %v1692, %v1691
      %vm1694 = vcmp.lt.s32.totalorder %v1608, 0
      %v1695 = vsub.s32 0, %v1608
      %v1696 = vsel %vm1694, %v1695, %v1608
      %v1697 = vshrl.u32 %v1696, 4
      %v1698 = vand.u32 %v1696, 15
      %v1699 = vsub.s32 0, %v1698
      %v1700 = vsel %vm1694, %v1699, %v1698
      %vm1701 = vcmp.lt.s32.totalorder %v1609, 0
      %v1702 = vsub.s32 0, %v1609
      %v1703 = vsel %vm1701, %v1702, %v1609
      %v1704 = vshrl.u32 %v1703, 4
      %v1705 = vand.u32 %v1703, 15
      %v1706 = vsub.s32 0, %v1705
      %v1707 = vsel %vm1701, %v1706, %v1705
      %vm1708 = vcmp.lt.s32.totalorder %v1610, 0
      %v1709 = vsub.s32 0, %v1610
      %v1710 = vsel %vm1708, %v1709, %v1610
      %v1711 = vshrl.u32 %v1710, 4
      %v1712 = vand.u32 %v1710, 15
      %v1713 = vsub.s32 0, %v1712
      %v1714 = vsel %vm1708, %v1713, %v1712
      %vm1715 = vcmp.lt.s32.totalorder %v1611, 0
      %v1716 = vsub.s32 0, %v1611
      %v1717 = vsel %vm1715, %v1716, %v1611
      %v1718 = vshrl.u32 %v1717, 4
      %v1719 = vand.u32 %v1717, 15
      %v1720 = vsub.s32 0, %v1719
      %v1721 = vsel %vm1715, %v1720, %v1719
      %vm1722 = vcmp.lt.s32.totalorder %v1612, 0
      %v1723 = vsub.s32 0, %v1612
      %v1724 = vsel %vm1722, %v1723, %v1612
      %v1725 = vshrl.u32 %v1724, 4
      %v1726 = vand.u32 %v1724, 15
      %v1727 = vsub.s32 0, %v1726
      %v1728 = vsel %vm1722, %v1727, %v1726
      %vm1729 = vcmp.lt.s32.totalorder %v1613, 0
      %v1730 = vsub.s32 0, %v1613
      %v1731 = vsel %vm1729, %v1730, %v1613
      %v1732 = vshrl.u32 %v1731, 4
      %v1733 = vand.u32 %v1731, 15
      %v1734 = vsub.s32 0, %v1733
      %v1735 = vsel %vm1729, %v1734, %v1733
      %vm1736 = vcmp.lt.s32.totalorder %v1614, 0
      %v1737 = vsub.s32 0, %v1614
      %v1738 = vsel %vm1736, %v1737, %v1614
      %v1739 = vshrl.u32 %v1738, 4
      %v1740 = vand.u32 %v1738, 15
      %v1741 = vsub.s32 0, %v1740
      %v1742 = vsel %vm1736, %v1741, %v1740
      %vm1743 = vcmp.lt.s32.totalorder %v1615, 0
      %v1744 = vsub.s32 0, %v1615
      %v1745 = vsel %vm1743, %v1744, %v1615
      %v1746 = vshrl.u32 %v1745, 4
      %v1747 = vand.u32 %v1745, 15
      %v1748 = vsub.s32 0, %v1747
      %v1749 = vsel %vm1743, %v1748, %v1747
      %vm1750 = vcmp.lt.s32.totalorder %v1616, 0
      %v1751 = vsub.s32 0, %v1616
      %v1752 = vsel %vm1750, %v1751, %v1616
      %v1753 = vshrl.u32 %v1752, 4
      %v1754 = vand.u32 %v1752, 15
      %v1755 = vsub.s32 0, %v1754
      %v1756 = vsel %vm1750, %v1755, %v1754
      %vm1757 = vcmp.lt.s32.totalorder %v1617, 0
      %v1758 = vsub.s32 0, %v1617
      %v1759 = vsel %vm1757, %v1758, %v1617
      %v1760 = vshrl.u32 %v1759, 4
      %v1761 = vand.u32 %v1759, 15
      %v1762 = vsub.s32 0, %v1761
      %v1763 = vsel %vm1757, %v1762, %v1761
      %vm1764 = vcmp.lt.s32.totalorder %v1618, 0
      %v1765 = vsub.s32 0, %v1618
      %v1766 = vsel %vm1764, %v1765, %v1618
      %v1767 = vshrl.u32 %v1766, 4
      %v1768 = vand.u32 %v1766, 15
      %v1769 = vsub.s32 0, %v1768
      %v1770 = vsel %vm1764, %v1769, %v1768
      %vm1771 = vcmp.lt.s32.totalorder %v1619, 0
      %v1772 = vsub.s32 0, %v1619
      %v1773 = vsel %vm1771, %v1772, %v1619
      %v1774 = vshrl.u32 %v1773, 4
      %v1775 = vand.u32 %v1773, 15
      %v1776 = vsub.s32 0, %v1775
      %v1777 = vsel %vm1771, %v1776, %v1775
      %vm1778 = vcmp.lt.s32.totalorder %v1620, 0
      %v1779 = vsub.s32 0, %v1620
      %v1780 = vsel %vm1778, %v1779, %v1620
      %v1781 = vshrl.u32 %v1780, 4
      %v1782 = vand.u32 %v1780, 15
      %v1783 = vsub.s32 0, %v1782
      %v1784 = vsel %vm1778, %v1783, %v1782
      %vm1785 = vcmp.lt.s32.totalorder %v1621, 0
      %v1786 = vsub.s32 0, %v1621
      %v1787 = vsel %vm1785, %v1786, %v1621
      %v1788 = vshrl.u32 %v1787, 4
      %v1789 = vand.u32 %v1787, 15
      %v1790 = vsub.s32 0, %v1789
      %v1791 = vsel %vm1785, %v1790, %v1789
      %vm1792 = vcmp.lt.s32.totalorder %v1622, 0
      %v1793 = vsub.s32 0, %v1622
      %v1794 = vsel %vm1792, %v1793, %v1622
      %v1795 = vshrl.u32 %v1794, 4
      %v1796 = vand.u32 %v1794, 15
      %v1797 = vsub.s32 0, %v1796
      %v1798 = vsel %vm1792, %v1797, %v1796
      %vm1799 = vcmp.lt.s32.totalorder %v1623, 0
      %v1800 = vsub.s32 0, %v1623
      %v1801 = vsel %vm1799, %v1800, %v1623
      %v1802 = vshrl.u32 %v1801, 4
      %v1803 = vand.u32 %v1801, 15
      %v1804 = vsub.s32 0, %v1803
      %v1805 = vsel %vm1799, %v1804, %v1803
      %vm1806 = vcmp.lt.s32.totalorder %v1624, 0
      %v1807 = vsub.s32 0, %v1624
      %v1808 = vsel %vm1806, %v1807, %v1624
      %v1809 = vshrl.u32 %v1808, 4
      %v1810 = vand.u32 %v1808, 15
      %v1811 = vsub.s32 0, %v1810
      %v1812 = vsel %vm1806, %v1811, %v1810
      %vm1813 = vcmp.lt.s32.totalorder %v1625, 0
      %v1814 = vsub.s32 0, %v1625
      %v1815 = vsel %vm1813, %v1814, %v1625
      %v1816 = vshrl.u32 %v1815, 4
      %v1817 = vand.u32 %v1815, 15
      %v1818 = vsub.s32 0, %v1817
      %v1819 = vsel %vm1813, %v1818, %v1817
      %vm1820 = vcmp.lt.s32.totalorder %v1626, 0
      %v1821 = vsub.s32 0, %v1626
      %v1822 = vsel %vm1820, %v1821, %v1626
      %v1823 = vshrl.u32 %v1822, 4
      %v1824 = vand.u32 %v1822, 15
      %v1825 = vsub.s32 0, %v1824
      %v1826 = vsel %vm1820, %v1825, %v1824
      %vm1827 = vcmp.lt.s32.totalorder %v1627, 0
      %v1828 = vsub.s32 0, %v1627
      %v1829 = vsel %vm1827, %v1828, %v1627
      %v1830 = vshrl.u32 %v1829, 4
      %v1831 = vand.u32 %v1829, 15
      %v1832 = vsub.s32 0, %v1831
      %v1833 = vsel %vm1827, %v1832, %v1831
      %vm1834 = vcmp.lt.s32.totalorder %v1628, 0
      %v1835 = vsub.s32 0, %v1628
      %v1836 = vsel %vm1834, %v1835, %v1628
      %v1837 = vshrl.u32 %v1836, 4
      %v1838 = vand.u32 %v1836, 15
      %v1839 = vsub.s32 0, %v1838
      %v1840 = vsel %vm1834, %v1839, %v1838
      %vm1841 = vcmp.lt.s32.totalorder %v1629, 0
      %v1842 = vsub.s32 0, %v1629
      %v1843 = vsel %vm1841, %v1842, %v1629
      %v1844 = vshrl.u32 %v1843, 4
      %v1845 = vand.u32 %v1843, 15
      %v1846 = vsub.s32 0, %v1845
      %v1847 = vsel %vm1841, %v1846, %v1845
      %vm1848 = vcmp.lt.s32.totalorder %v1630, 0
      %v1849 = vsub.s32 0, %v1630
      %v1850 = vsel %vm1848, %v1849, %v1630
      %v1851 = vshrl.u32 %v1850, 4
      %v1852 = vand.u32 %v1850, 15
      %v1853 = vsub.s32 0, %v1852
      %v1854 = vsel %vm1848, %v1853, %v1852
      %vm1855 = vcmp.ne.s32.totalorder %v1637, 0
      %vm1856 = vcmp.ne.s32.totalorder %v1644, 0
      %vm1857 = vcmp.ne.s32.totalorder %v1651, 0
      %vm1858 = vcmp.ne.s32.totalorder %v1658, 0
      %vm1859 = vcmp.ne.s32.totalorder %v1665, 0
      %vm1860 = vcmp.ne.s32.totalorder %v1672, 0
      %vm1861 = vcmp.ne.s32.totalorder %v1679, 0
      %vm1862 = vcmp.ne.s32.totalorder %v1686, 0
      %vm1863 = vcmp.ne.s32.totalorder %v1693, 0
      %vm1864 = vcmp.ne.s32.totalorder %v1700, 0
      %vm1865 = vcmp.ne.s32.totalorder %v1707, 0
      %vm1866 = vcmp.ne.s32.totalorder %v1714, 0
      %vm1867 = vcmp.ne.s32.totalorder %v1721, 0
      %vm1868 = vcmp.ne.s32.totalorder %v1728, 0
      %vm1869 = vcmp.ne.s32.totalorder %v1735, 0
      %vm1870 = vcmp.ne.s32.totalorder %v1742, 0
      %vm1871 = vcmp.ne.s32.totalorder %v1749, 0
      %vm1872 = vcmp.ne.s32.totalorder %v1756, 0
      %vm1873 = vcmp.ne.s32.totalorder %v1763, 0
      %vm1874 = vcmp.ne.s32.totalorder %v1770, 0
      %vm1875 = vcmp.ne.s32.totalorder %v1777, 0
      %vm1876 = vcmp.ne.s32.totalorder %v1784, 0
      %vm1877 = vcmp.ne.s32.totalorder %v1791, 0
      %vm1878 = vcmp.ne.s32.totalorder %v1798, 0
      %vm1879 = vcmp.ne.s32.totalorder %v1805, 0
      %vm1880 = vcmp.ne.s32.totalorder %v1812, 0
      %vm1881 = vcmp.ne.s32.totalorder %v1819, 0
      %vm1882 = vcmp.ne.s32.totalorder %v1826, 0
      %vm1883 = vcmp.ne.s32.totalorder %v1833, 0
      %vm1884 = vcmp.ne.s32.totalorder %v1840, 0
      %vm1885 = vcmp.ne.s32.totalorder %v1847, 0
      %vm1886 = vcmp.ne.s32.totalorder %v1854, 0
      %vm1887 = vcmp.lt.s32.totalorder %v1637, 0
      %vm1888 = vcmp.lt.s32.totalorder %v1644, 0
      %vm1889 = vcmp.lt.s32.totalorder %v1651, 0
      %vm1890 = vcmp.lt.s32.totalorder %v1658, 0
      %vm1891 = vcmp.lt.s32.totalorder %v1665, 0
      %vm1892 = vcmp.lt.s32.totalorder %v1672, 0
      %vm1893 = vcmp.lt.s32.totalorder %v1679, 0
      %vm1894 = vcmp.lt.s32.totalorder %v1686, 0
      %vm1895 = vcmp.lt.s32.totalorder %v1693, 0
      %vm1896 = vcmp.lt.s32.totalorder %v1700, 0
      %vm1897 = vcmp.lt.s32.totalorder %v1707, 0
      %vm1898 = vcmp.lt.s32.totalorder %v1714, 0
      %vm1899 = vcmp.lt.s32.totalorder %v1721, 0
      %vm1900 = vcmp.lt.s32.totalorder %v1728, 0
      %vm1901 = vcmp.lt.s32.totalorder %v1735, 0
      %vm1902 = vcmp.lt.s32.totalorder %v1742, 0
      %vm1903 = vcmp.lt.s32.totalorder %v1749, 0
      %vm1904 = vcmp.lt.s32.totalorder %v1756, 0
      %vm1905 = vcmp.lt.s32.totalorder %v1763, 0
      %vm1906 = vcmp.lt.s32.totalorder %v1770, 0
      %vm1907 = vcmp.lt.s32.totalorder %v1777, 0
      %vm1908 = vcmp.lt.s32.totalorder %v1784, 0
      %vm1909 = vcmp.lt.s32.totalorder %v1791, 0
      %vm1910 = vcmp.lt.s32.totalorder %v1798, 0
      %vm1911 = vcmp.lt.s32.totalorder %v1805, 0
      %vm1912 = vcmp.lt.s32.totalorder %v1812, 0
      %vm1913 = vcmp.lt.s32.totalorder %v1819, 0
      %vm1914 = vcmp.lt.s32.totalorder %v1826, 0
      %vm1915 = vcmp.lt.s32.totalorder %v1833, 0
      %vm1916 = vcmp.lt.s32.totalorder %v1840, 0
      %vm1917 = vcmp.lt.s32.totalorder %v1847, 0
      %vm1918 = vcmp.lt.s32.totalorder %v1854, 0
      %vm1919 = vmand %vm1887, %vm1855
      %vm1920 = vmand %vm1888, %vm1856
      %vm1921 = vmand %vm1889, %vm1857
      %vm1922 = vmand %vm1890, %vm1858
      %vm1923 = vmand %vm1891, %vm1859
      %vm1924 = vmand %vm1892, %vm1860
      %vm1925 = vmand %vm1893, %vm1861
      %vm1926 = vmand %vm1894, %vm1862
      %vm1927 = vmand %vm1895, %vm1863
      %vm1928 = vmand %vm1896, %vm1864
      %vm1929 = vmand %vm1897, %vm1865
      %vm1930 = vmand %vm1898, %vm1866
      %vm1931 = vmand %vm1899, %vm1867
      %vm1932 = vmand %vm1900, %vm1868
      %vm1933 = vmand %vm1901, %vm1869
      %vm1934 = vmand %vm1902, %vm1870
      %vm1935 = vmand %vm1903, %vm1871
      %vm1936 = vmand %vm1904, %vm1872
      %vm1937 = vmand %vm1905, %vm1873
      %vm1938 = vmand %vm1906, %vm1874
      %vm1939 = vmand %vm1907, %vm1875
      %vm1940 = vmand %vm1908, %vm1876
      %vm1941 = vmand %vm1909, %vm1877
      %vm1942 = vmand %vm1910, %vm1878
      %vm1943 = vmand %vm1911, %vm1879
      %vm1944 = vmand %vm1912, %vm1880
      %vm1945 = vmand %vm1913, %vm1881
      %vm1946 = vmand %vm1914, %vm1882
      %vm1947 = vmand %vm1915, %vm1883
      %vm1948 = vmand %vm1916, %vm1884
      %vm1949 = vmand %vm1917, %vm1885
      %vm1950 = vmand %vm1918, %vm1886
      %v1951 = vadd.s32 %v1637, 16
      %v1952 = vadd.s32 %v1644, 16
      %v1953 = vadd.s32 %v1651, 16
      %v1954 = vadd.s32 %v1658, 16
      %v1955 = vadd.s32 %v1665, 16
      %v1956 = vadd.s32 %v1672, 16
      %v1957 = vadd.s32 %v1679, 16
      %v1958 = vadd.s32 %v1686, 16
      %v1959 = vadd.s32 %v1693, 16
      %v1960 = vadd.s32 %v1700, 16
      %v1961 = vadd.s32 %v1707, 16
      %v1962 = vadd.s32 %v1714, 16
      %v1963 = vadd.s32 %v1721, 16
      %v1964 = vadd.s32 %v1728, 16
      %v1965 = vadd.s32 %v1735, 16
      %v1966 = vadd.s32 %v1742, 16
      %v1967 = vadd.s32 %v1749, 16
      %v1968 = vadd.s32 %v1756, 16
      %v1969 = vadd.s32 %v1763, 16
      %v1970 = vadd.s32 %v1770, 16
      %v1971 = vadd.s32 %v1777, 16
      %v1972 = vadd.s32 %v1784, 16
      %v1973 = vadd.s32 %v1791, 16
      %v1974 = vadd.s32 %v1798, 16
      %v1975 = vadd.s32 %v1805, 16
      %v1976 = vadd.s32 %v1812, 16
      %v1977 = vadd.s32 %v1819, 16
      %v1978 = vadd.s32 %v1826, 16
      %v1979 = vadd.s32 %v1833, 16
      %v1980 = vadd.s32 %v1840, 16
      %v1981 = vadd.s32 %v1847, 16
      %v1982 = vadd.s32 %v1854, 16
      %v1983 = vsel %vm1919, %v1951, %v1637
      %v1984 = vsel %vm1920, %v1952, %v1644
      %v1985 = vsel %vm1921, %v1953, %v1651
      %v1986 = vsel %vm1922, %v1954, %v1658
      %v1987 = vsel %vm1923, %v1955, %v1665
      %v1988 = vsel %vm1924, %v1956, %v1672
      %v1989 = vsel %vm1925, %v1957, %v1679
      %v1990 = vsel %vm1926, %v1958, %v1686
      %v1991 = vsel %vm1927, %v1959, %v1693
      %v1992 = vsel %vm1928, %v1960, %v1700
      %v1993 = vsel %vm1929, %v1961, %v1707
      %v1994 = vsel %vm1930, %v1962, %v1714
      %v1995 = vsel %vm1931, %v1963, %v1721
      %v1996 = vsel %vm1932, %v1964, %v1728
      %v1997 = vsel %vm1933, %v1965, %v1735
      %v1998 = vsel %vm1934, %v1966, %v1742
      %v1999 = vsel %vm1935, %v1967, %v1749
      %v2000 = vsel %vm1936, %v1968, %v1756
      %v2001 = vsel %vm1937, %v1969, %v1763
      %v2002 = vsel %vm1938, %v1970, %v1770
      %v2003 = vsel %vm1939, %v1971, %v1777
      %v2004 = vsel %vm1940, %v1972, %v1784
      %v2005 = vsel %vm1941, %v1973, %v1791
      %v2006 = vsel %vm1942, %v1974, %v1798
      %v2007 = vsel %vm1943, %v1975, %v1805
      %v2008 = vsel %vm1944, %v1976, %v1812
      %v2009 = vsel %vm1945, %v1977, %v1819
      %v2010 = vsel %vm1946, %v1978, %v1826
      %v2011 = vsel %vm1947, %v1979, %v1833
      %v2012 = vsel %vm1948, %v1980, %v1840
      %v2013 = vsel %vm1949, %v1981, %v1847
      %v2014 = vsel %vm1950, %v1982, %v1854
      %vm2015 = vcmp.gt.s32.totalorder %v1983, 0
      %vm2016 = vcmp.gt.s32.totalorder %v1984, 0
      %vm2017 = vcmp.gt.s32.totalorder %v1985, 0
      %vm2018 = vcmp.gt.s32.totalorder %v1986, 0
      %vm2019 = vcmp.gt.s32.totalorder %v1987, 0
      %vm2020 = vcmp.gt.s32.totalorder %v1988, 0
      %vm2021 = vcmp.gt.s32.totalorder %v1989, 0
      %vm2022 = vcmp.gt.s32.totalorder %v1990, 0
      %vm2023 = vcmp.gt.s32.totalorder %v1991, 0
      %vm2024 = vcmp.gt.s32.totalorder %v1992, 0
      %vm2025 = vcmp.gt.s32.totalorder %v1993, 0
      %vm2026 = vcmp.gt.s32.totalorder %v1994, 0
      %vm2027 = vcmp.gt.s32.totalorder %v1995, 0
      %vm2028 = vcmp.gt.s32.totalorder %v1996, 0
      %vm2029 = vcmp.gt.s32.totalorder %v1997, 0
      %vm2030 = vcmp.gt.s32.totalorder %v1998, 0
      %vm2031 = vcmp.gt.s32.totalorder %v1999, 0
      %vm2032 = vcmp.gt.s32.totalorder %v2000, 0
      %vm2033 = vcmp.gt.s32.totalorder %v2001, 0
      %vm2034 = vcmp.gt.s32.totalorder %v2002, 0
      %vm2035 = vcmp.gt.s32.totalorder %v2003, 0
      %vm2036 = vcmp.gt.s32.totalorder %v2004, 0
      %vm2037 = vcmp.gt.s32.totalorder %v2005, 0
      %vm2038 = vcmp.gt.s32.totalorder %v2006, 0
      %vm2039 = vcmp.gt.s32.totalorder %v2007, 0
      %vm2040 = vcmp.gt.s32.totalorder %v2008, 0
      %vm2041 = vcmp.gt.s32.totalorder %v2009, 0
      %vm2042 = vcmp.gt.s32.totalorder %v2010, 0
      %vm2043 = vcmp.gt.s32.totalorder %v2011, 0
      %vm2044 = vcmp.gt.s32.totalorder %v2012, 0
      %vm2045 = vcmp.gt.s32.totalorder %v2013, 0
      %vm2046 = vcmp.gt.s32.totalorder %v2014, 0
      %v2047 = vsel %vm2015, 1, 0
      %v2048 = vsel %vm2016, 1, 0
      %v2049 = vsel %vm2017, 1, 0
      %v2050 = vsel %vm2018, 1, 0
      %v2051 = vsel %vm2019, 1, 0
      %v2052 = vsel %vm2020, 1, 0
      %v2053 = vsel %vm2021, 1, 0
      %v2054 = vsel %vm2022, 1, 0
      %v2055 = vsel %vm2023, 1, 0
      %v2056 = vsel %vm2024, 1, 0
      %v2057 = vsel %vm2025, 1, 0
      %v2058 = vsel %vm2026, 1, 0
      %v2059 = vsel %vm2027, 1, 0
      %v2060 = vsel %vm2028, 1, 0
      %v2061 = vsel %vm2029, 1, 0
      %v2062 = vsel %vm2030, 1, 0
      %v2063 = vsel %vm2031, 1, 0
      %v2064 = vsel %vm2032, 1, 0
      %v2065 = vsel %vm2033, 1, 0
      %v2066 = vsel %vm2034, 1, 0
      %v2067 = vsel %vm2035, 1, 0
      %v2068 = vsel %vm2036, 1, 0
      %v2069 = vsel %vm2037, 1, 0
      %v2070 = vsel %vm2038, 1, 0
      %v2071 = vsel %vm2039, 1, 0
      %v2072 = vsel %vm2040, 1, 0
      %v2073 = vsel %vm2041, 1, 0
      %v2074 = vsel %vm2042, 1, 0
      %v2075 = vsel %vm2043, 1, 0
      %v2076 = vsel %vm2044, 1, 0
      %v2077 = vsel %vm2045, 1, 0
      %v2078 = vsel %vm2046, 1, 0
      %v2079 = vcvt.s32.f32 %v2047
      %v2080 = vcvt.s32.f32 %v2048
      %v2081 = vcvt.s32.f32 %v2049
      %v2082 = vcvt.s32.f32 %v2050
      %v2083 = vcvt.s32.f32 %v2051
      %v2084 = vcvt.s32.f32 %v2052
      %v2085 = vcvt.s32.f32 %v2053
      %v2086 = vcvt.s32.f32 %v2054
      %v2087 = vcvt.s32.f32 %v2055
      %v2088 = vcvt.s32.f32 %v2056
      %v2089 = vcvt.s32.f32 %v2057
      %v2090 = vcvt.s32.f32 %v2058
      %v2091 = vcvt.s32.f32 %v2059
      %v2092 = vcvt.s32.f32 %v2060
      %v2093 = vcvt.s32.f32 %v2061
      %v2094 = vcvt.s32.f32 %v2062
      %v2095 = vcvt.s32.f32 %v2063
      %v2096 = vcvt.s32.f32 %v2064
      %v2097 = vcvt.s32.f32 %v2065
      %v2098 = vcvt.s32.f32 %v2066
      %v2099 = vcvt.s32.f32 %v2067
      %v2100 = vcvt.s32.f32 %v2068
      %v2101 = vcvt.s32.f32 %v2069
      %v2102 = vcvt.s32.f32 %v2070
      %v2103 = vcvt.s32.f32 %v2071
      %v2104 = vcvt.s32.f32 %v2072
      %v2105 = vcvt.s32.f32 %v2073
      %v2106 = vcvt.s32.f32 %v2074
      %v2107 = vcvt.s32.f32 %v2075
      %v2108 = vcvt.s32.f32 %v2076
      %v2109 = vcvt.s32.f32 %v2077
      %v2110 = vcvt.s32.f32 %v2078
      %vm2111 = vcmp.lt.s32.totalorder %v1983, 15
      %vm2112 = vcmp.lt.s32.totalorder %v1984, 15
      %vm2113 = vcmp.lt.s32.totalorder %v1985, 15
      %vm2114 = vcmp.lt.s32.totalorder %v1986, 15
      %vm2115 = vcmp.lt.s32.totalorder %v1987, 15
      %vm2116 = vcmp.lt.s32.totalorder %v1988, 15
      %vm2117 = vcmp.lt.s32.totalorder %v1989, 15
      %vm2118 = vcmp.lt.s32.totalorder %v1990, 15
      %vm2119 = vcmp.lt.s32.totalorder %v1991, 15
      %vm2120 = vcmp.lt.s32.totalorder %v1992, 15
      %vm2121 = vcmp.lt.s32.totalorder %v1993, 15
      %vm2122 = vcmp.lt.s32.totalorder %v1994, 15
      %vm2123 = vcmp.lt.s32.totalorder %v1995, 15
      %vm2124 = vcmp.lt.s32.totalorder %v1996, 15
      %vm2125 = vcmp.lt.s32.totalorder %v1997, 15
      %vm2126 = vcmp.lt.s32.totalorder %v1998, 15
      %vm2127 = vcmp.lt.s32.totalorder %v1999, 15
      %vm2128 = vcmp.lt.s32.totalorder %v2000, 15
      %vm2129 = vcmp.lt.s32.totalorder %v2001, 15
      %vm2130 = vcmp.lt.s32.totalorder %v2002, 15
      %vm2131 = vcmp.lt.s32.totalorder %v2003, 15
      %vm2132 = vcmp.lt.s32.totalorder %v2004, 15
      %vm2133 = vcmp.lt.s32.totalorder %v2005, 15
      %vm2134 = vcmp.lt.s32.totalorder %v2006, 15
      %vm2135 = vcmp.lt.s32.totalorder %v2007, 15
      %vm2136 = vcmp.lt.s32.totalorder %v2008, 15
      %vm2137 = vcmp.lt.s32.totalorder %v2009, 15
      %vm2138 = vcmp.lt.s32.totalorder %v2010, 15
      %vm2139 = vcmp.lt.s32.totalorder %v2011, 15
      %vm2140 = vcmp.lt.s32.totalorder %v2012, 15
      %vm2141 = vcmp.lt.s32.totalorder %v2013, 15
      %vm2142 = vcmp.lt.s32.totalorder %v2014, 15
      %v2143 = vsel %vm2111, 1, 0
      %v2144 = vsel %vm2112, 1, 0
      %v2145 = vsel %vm2113, 1, 0
      %v2146 = vsel %vm2114, 1, 0
      %v2147 = vsel %vm2115, 1, 0
      %v2148 = vsel %vm2116, 1, 0
      %v2149 = vsel %vm2117, 1, 0
      %v2150 = vsel %vm2118, 1, 0
      %v2151 = vsel %vm2119, 1, 0
      %v2152 = vsel %vm2120, 1, 0
      %v2153 = vsel %vm2121, 1, 0
      %v2154 = vsel %vm2122, 1, 0
      %v2155 = vsel %vm2123, 1, 0
      %v2156 = vsel %vm2124, 1, 0
      %v2157 = vsel %vm2125, 1, 0
      %v2158 = vsel %vm2126, 1, 0
      %v2159 = vsel %vm2127, 1, 0
      %v2160 = vsel %vm2128, 1, 0
      %v2161 = vsel %vm2129, 1, 0
      %v2162 = vsel %vm2130, 1, 0
      %v2163 = vsel %vm2131, 1, 0
      %v2164 = vsel %vm2132, 1, 0
      %v2165 = vsel %vm2133, 1, 0
      %v2166 = vsel %vm2134, 1, 0
      %v2167 = vsel %vm2135, 1, 0
      %v2168 = vsel %vm2136, 1, 0
      %v2169 = vsel %vm2137, 1, 0
      %v2170 = vsel %vm2138, 1, 0
      %v2171 = vsel %vm2139, 1, 0
      %v2172 = vsel %vm2140, 1, 0
      %v2173 = vsel %vm2141, 1, 0
      %v2174 = vsel %vm2142, 1, 0
      %v2175 = vcvt.s32.f32 %v2143
      %v2176 = vcvt.s32.f32 %v2144
      %v2177 = vcvt.s32.f32 %v2145
      %v2178 = vcvt.s32.f32 %v2146
      %v2179 = vcvt.s32.f32 %v2147
      %v2180 = vcvt.s32.f32 %v2148
      %v2181 = vcvt.s32.f32 %v2149
      %v2182 = vcvt.s32.f32 %v2150
      %v2183 = vcvt.s32.f32 %v2151
      %v2184 = vcvt.s32.f32 %v2152
      %v2185 = vcvt.s32.f32 %v2153
      %v2186 = vcvt.s32.f32 %v2154
      %v2187 = vcvt.s32.f32 %v2155
      %v2188 = vcvt.s32.f32 %v2156
      %v2189 = vcvt.s32.f32 %v2157
      %v2190 = vcvt.s32.f32 %v2158
      %v2191 = vcvt.s32.f32 %v2159
      %v2192 = vcvt.s32.f32 %v2160
      %v2193 = vcvt.s32.f32 %v2161
      %v2194 = vcvt.s32.f32 %v2162
      %v2195 = vcvt.s32.f32 %v2163
      %v2196 = vcvt.s32.f32 %v2164
      %v2197 = vcvt.s32.f32 %v2165
      %v2198 = vcvt.s32.f32 %v2166
      %v2199 = vcvt.s32.f32 %v2167
      %v2200 = vcvt.s32.f32 %v2168
      %v2201 = vcvt.s32.f32 %v2169
      %v2202 = vcvt.s32.f32 %v2170
      %v2203 = vcvt.s32.f32 %v2171
      %v2204 = vcvt.s32.f32 %v2172
      %v2205 = vcvt.s32.f32 %v2173
      %v2206 = vcvt.s32.f32 %v2174
      %2207 = vst.msk [vmem:[#allocation2] sm:$0xff] %vm599, 0.0
      %2208 = vst.msk [vmem:[#allocation2 + $0x8] sm:$0xff] %vm599, 0.0
      %2209 = vst.msk [vmem:[#allocation2 + $0x10] sm:$0xff] %vm599, 0.0
      %2210 = vst.msk [vmem:[#allocation2 + $0x118] sm:$0xff] %vm599, 0.0
      %2211 = vst.msk [vmem:[#allocation2 + $0x120] sm:$0xff] %vm599, 0.0
      %2212 = vst.msk [vmem:[#allocation2 + $0x128] sm:$0xff] %vm599, 0.0
      %v2213 = vpack.c.bf16 %v1084, %v1083
      %v2214 = vpack.c.bf16 %v1086, %v1085
      %v2215 = vpack.c.bf16 %v1088, %v1087
      %v2216 = vpack.c.bf16 %v1090, %v1089
      %v2217 = vpack.c.bf16 %v1092, %v1091
      %v2218 = vpack.c.bf16 %v1094, %v1093
      %v2219 = vpack.c.bf16 %v1096, %v1095
      %v2220 = vpack.c.bf16 %v1098, %v1097
      %v2221 = vpack.c.bf16 %v1100, %v1099
      %v2222 = vpack.c.bf16 %v1102, %v1101
      %v2223 = vpack.c.bf16 %v1104, %v1103
      %v2224 = vpack.c.bf16 %v1106, %v1105
      %v2225 = vpack.c.bf16 %v1108, %v1107
      %v2226 = vpack.c.bf16 %v1110, %v1109
      %v2227 = vpack.c.bf16 %v1112, %v1111
      %v2228 = vpack.c.bf16 %v1114, %v1113
      %v2229 = vld [vmem:[%s7] sm:$0x3]
      %v2231 = vsel %vm599, %v2213, 0
      %v2234 = vsel %vm599, %v2214, 0
      %v2237 = vsel %vm599, %v2215, 0
      %v2240 = vsel %vm599, %v2216, 0
      %v2243 = vsel %vm599, %v2217, 0
      %v2246 = vsel %vm599, %v2218, 0
      %v2249 = vsel %vm599, %v2219, 0
      %v2252 = vsel %vm599, %v2220, 0
      %v2255 = vsel %vm599, %v2221, 0
      %v2258 = vsel %vm599, %v2222, 0
      %v2261 = vsel %vm599, %v2223, 0
      %v2264 = vsel %vm599, %v2224, 0
      %v2267 = vsel %vm599, %v2225, 0
      %v2270 = vsel %vm599, %v2226, 0
      %v2273 = vsel %vm599, %v2227, 0
      %v2276 = vsel %vm599, %v2228, 0
      %v2279 = vsel %vm648, %v2229, 0
      %2281 = vmatprep.subr.bf16.mxu0 0
      %2282 = vmatpush1.bf16.msra.mxu0 0
      %2283 = vmatprep.subr.bf16.mxu0 0
      %2284 = vmatpush1.bf16.msra.mxu0 0
      %2285 = vmatprep.subr.bf16.mxu0 0
      %2286 = vmatpush1.bf16.msra.mxu0 0
      %2287 = vmatprep.subr.bf16.mxu0 0
      %2288 = vmatpush1.bf16.msra.mxu0 0
      %2289 = vmatprep.subr.bf16.mxu0 0
      %2290 = vmatpush1.bf16.msra.mxu0 0
      %2291 = vmatprep.subr.bf16.mxu0 0
      %2292 = vmatpush1.bf16.msra.mxu0 0
      %2293 = vmatprep.subr.bf16.mxu0 0
      %2294 = vmatpush1.bf16.msra.mxu0 0
      %2295 = vmatprep.subr.bf16.mxu0 0
      %2296 = vmatpush1.bf16.msra.mxu0 %v2279
      %2297 = vmatprep.subr.bf16.mxu0 0
      %2298 = vmatpush2.bf16.msra.mxu0 0
      %2299 = vmatprep.subr.bf16.mxu0 0
      %2300 = vmatpush2.bf16.msra.mxu0 0
      %2301 = vmatprep.subr.bf16.mxu0 0
      %2302 = vmatpush2.bf16.msra.mxu0 0
      %2303 = vmatprep.subr.bf16.mxu0 0
      %2304 = vmatpush2.bf16.msra.mxu0 0
      %2305 = vmatprep.subr.bf16.mxu0 0
      %2306 = vmatpush2.bf16.msra.mxu0 0
      %2307 = vmatprep.subr.bf16.mxu0 0
      %2308 = vmatpush2.bf16.msra.mxu0 0
      %2309 = vmatprep.subr.bf16.mxu0 0
      %2310 = vmatpush2.bf16.msra.mxu0 0
      %2311 = vmatprep.subr.bf16.mxu0 0
      %2312 = vmatpush2.bf16.msra.mxu0 0
      %2313 = vmatprep.mubr.bf16.mxu0 0
      %2314 = vmatmul.mubr.bf16.gmra.mxu0 %v2231
      %v2315 = vpop.f32.mrf.mxu0
      %v2316 = vadd.f32 0.0, %v2315
      %v2317 = vpop.f32.mrf.mxu0
      %v2318 = vpop.f32.mrf.mxu0
      %v2319 = vadd.f32 0.0, %v2318
      %v2320 = vpop.f32.mrf.mxu0
      %2321 = vmatprep.mubr.bf16.mxu0 0
      %2322 = vmatmul.mubr.bf16.gmra.mxu0 %v2234
      %v2323 = vpop.f32.mrf.mxu0
      %v2324 = vadd.f32 0.0, %v2323
      %v2325 = vpop.f32.mrf.mxu0
      %v2326 = vpop.f32.mrf.mxu0
      %v2327 = vadd.f32 0.0, %v2326
      %v2328 = vpop.f32.mrf.mxu0
      %2329 = vmatprep.mubr.bf16.mxu0 0
      %2330 = vmatmul.mubr.bf16.gmra.mxu0 %v2237
      %v2331 = vpop.f32.mrf.mxu0
      %v2332 = vadd.f32 0.0, %v2331
      %v2333 = vpop.f32.mrf.mxu0
      %v2334 = vpop.f32.mrf.mxu0
      %v2335 = vadd.f32 0.0, %v2334
      %v2336 = vpop.f32.mrf.mxu0
      %2337 = vmatprep.mubr.bf16.mxu0 0
      %2338 = vmatmul.mubr.bf16.gmra.mxu0 %v2240
      %v2339 = vpop.f32.mrf.mxu0
      %v2340 = vadd.f32 0.0, %v2339
      %v2341 = vpop.f32.mrf.mxu0
      %v2342 = vpop.f32.mrf.mxu0
      %v2343 = vadd.f32 0.0, %v2342
      %v2344 = vpop.f32.mrf.mxu0
      %2345 = vmatprep.mubr.bf16.mxu0 0
      %2346 = vmatmul.mubr.bf16.gmra.mxu0 %v2243
      %v2347 = vpop.f32.mrf.mxu0
      %v2348 = vadd.f32 0.0, %v2347
      %v2349 = vpop.f32.mrf.mxu0
      %v2350 = vpop.f32.mrf.mxu0
      %v2351 = vadd.f32 0.0, %v2350
      %v2352 = vpop.f32.mrf.mxu0
      %2353 = vmatprep.mubr.bf16.mxu0 0
      %2354 = vmatmul.mubr.bf16.gmra.mxu0 %v2246
      %v2355 = vpop.f32.mrf.mxu0
      %v2356 = vadd.f32 0.0, %v2355
      %v2357 = vpop.f32.mrf.mxu0
      %v2358 = vpop.f32.mrf.mxu0
      %v2359 = vadd.f32 0.0, %v2358
      %v2360 = vpop.f32.mrf.mxu0
      %2361 = vmatprep.mubr.bf16.mxu0 0
      %2362 = vmatmul.mubr.bf16.gmra.mxu0 %v2249
      %v2363 = vpop.f32.mrf.mxu0
      %v2364 = vadd.f32 0.0, %v2363
      %v2365 = vpop.f32.mrf.mxu0
      %v2366 = vpop.f32.mrf.mxu0
      %v2367 = vadd.f32 0.0, %v2366
      %v2368 = vpop.f32.mrf.mxu0
      %2369 = vmatprep.mubr.bf16.mxu0 0
      %2370 = vmatmul.mubr.bf16.gmra.mxu0 %v2252
      %v2371 = vpop.f32.mrf.mxu0
      %v2372 = vadd.f32 0.0, %v2371
      %v2373 = vpop.f32.mrf.mxu0
      %v2374 = vpop.f32.mrf.mxu0
      %v2375 = vadd.f32 0.0, %v2374
      %v2376 = vpop.f32.mrf.mxu0
      %2377 = vmatprep.mubr.bf16.mxu0 0
      %2378 = vmatmul.mubr.bf16.gmra.mxu0 %v2255
      %v2379 = vpop.f32.mrf.mxu0
      %v2380 = vadd.f32 0.0, %v2379
      %v2381 = vpop.f32.mrf.mxu0
      %v2382 = vpop.f32.mrf.mxu0
      %v2383 = vadd.f32 0.0, %v2382
      %v2384 = vpop.f32.mrf.mxu0
      %2385 = vmatprep.mubr.bf16.mxu0 0
      %2386 = vmatmul.mubr.bf16.gmra.mxu0 %v2258
      %v2387 = vpop.f32.mrf.mxu0
      %v2388 = vadd.f32 0.0, %v2387
      %v2389 = vpop.f32.mrf.mxu0
      %v2390 = vpop.f32.mrf.mxu0
      %v2391 = vadd.f32 0.0, %v2390
      %v2392 = vpop.f32.mrf.mxu0
      %2393 = vmatprep.mubr.bf16.mxu0 0
      %2394 = vmatmul.mubr.bf16.gmra.mxu0 %v2261
      %v2395 = vpop.f32.mrf.mxu0
      %v2396 = vadd.f32 0.0, %v2395
      %v2397 = vpop.f32.mrf.mxu0
      %v2398 = vpop.f32.mrf.mxu0
      %v2399 = vadd.f32 0.0, %v2398
      %v2400 = vpop.f32.mrf.mxu0
      %2401 = vmatprep.mubr.bf16.mxu0 0
      %2402 = vmatmul.mubr.bf16.gmra.mxu0 %v2264
      %v2403 = vpop.f32.mrf.mxu0
      %v2404 = vadd.f32 0.0, %v2403
      %v2405 = vpop.f32.mrf.mxu0
      %v2406 = vpop.f32.mrf.mxu0
      %v2407 = vadd.f32 0.0, %v2406
      %v2408 = vpop.f32.mrf.mxu0
      %2409 = vmatprep.mubr.bf16.mxu0 0
      %2410 = vmatmul.mubr.bf16.gmra.mxu0 %v2267
      %v2411 = vpop.f32.mrf.mxu0
      %v2412 = vadd.f32 0.0, %v2411
      %v2413 = vpop.f32.mrf.mxu0
      %v2414 = vpop.f32.mrf.mxu0
      %v2415 = vadd.f32 0.0, %v2414
      %v2416 = vpop.f32.mrf.mxu0
      %2417 = vmatprep.mubr.bf16.mxu0 0
      %2418 = vmatmul.mubr.bf16.gmra.mxu0 %v2270
      %v2419 = vpop.f32.mrf.mxu0
      %v2420 = vadd.f32 0.0, %v2419
      %v2421 = vpop.f32.mrf.mxu0
      %v2422 = vpop.f32.mrf.mxu0
      %v2423 = vadd.f32 0.0, %v2422
      %v2424 = vpop.f32.mrf.mxu0
      %2425 = vmatprep.mubr.bf16.mxu0 0
      %2426 = vmatmul.mubr.bf16.gmra.mxu0 %v2273
      %v2427 = vpop.f32.mrf.mxu0
      %v2428 = vadd.f32 0.0, %v2427
      %v2429 = vpop.f32.mrf.mxu0
      %v2430 = vpop.f32.mrf.mxu0
      %v2431 = vadd.f32 0.0, %v2430
      %v2432 = vpop.f32.mrf.mxu0
      %2433 = vmatprep.mubr.bf16.mxu0 0
      %2434 = vmatmul.mubr.bf16.gmra.mxu0 %v2276
      %v2435 = vpop.f32.mrf.mxu0
      %v2436 = vadd.f32 0.0, %v2435
      %v2437 = vpop.f32.mrf.mxu0
      %v2438 = vpop.f32.mrf.mxu0
      %v2439 = vadd.f32 0.0, %v2438
      %v2440 = vpop.f32.mrf.mxu0
      %2441 = vdwg.mxu0
      %v2442 = vld [vmem:[%s8] sm:$0x1]
      %v2443 = vld [vmem:[%s9] sm:$0x1]
      %v2445 = vlaneseq
      %v2446 = vshrl.u32 %v2445, 7
      %v2447 = vsub.s32 0, %v2446
      %v2448 = vrot.slane %v2442, %v2447
      %v2450 = vmul.f32 %v2316, %v2448
      %v2451 = vmul.f32 %v2319, %v2448
      %v2452 = vmul.f32 %v2324, %v2448
      %v2453 = vmul.f32 %v2327, %v2448
      %v2454 = vmul.f32 %v2332, %v2448
      %v2455 = vmul.f32 %v2335, %v2448
      %v2456 = vmul.f32 %v2340, %v2448
      %v2457 = vmul.f32 %v2343, %v2448
      %v2458 = vmul.f32 %v2348, %v2448
      %v2459 = vmul.f32 %v2351, %v2448
      %v2460 = vmul.f32 %v2356, %v2448
      %v2461 = vmul.f32 %v2359, %v2448
      %v2462 = vmul.f32 %v2364, %v2448
      %v2463 = vmul.f32 %v2367, %v2448
      %v2464 = vmul.f32 %v2372, %v2448
      %v2465 = vmul.f32 %v2375, %v2448
      %v2466 = vmul.f32 %v2380, %v2448
      %v2467 = vmul.f32 %v2383, %v2448
      %v2468 = vmul.f32 %v2388, %v2448
      %v2469 = vmul.f32 %v2391, %v2448
      %v2470 = vmul.f32 %v2396, %v2448
      %v2471 = vmul.f32 %v2399, %v2448
      %v2472 = vmul.f32 %v2404, %v2448
      %v2473 = vmul.f32 %v2407, %v2448
      %v2474 = vmul.f32 %v2412, %v2448
      %v2475 = vmul.f32 %v2415, %v2448
      %v2476 = vmul.f32 %v2420, %v2448
      %v2477 = vmul.f32 %v2423, %v2448
      %v2478 = vmul.f32 %v2428, %v2448
      %v2479 = vmul.f32 %v2431, %v2448
      %v2480 = vmul.f32 %v2436, %v2448
      %v2481 = vmul.f32 %v2439, %v2448
      %v2483 = vlaneseq
      %v2484 = vshrl.u32 %v2483, 7
      %v2485 = vsub.s32 0, %v2484
      %v2486 = vrot.slane %v2443, %v2485
      %v2488 = vadd.f32 %v2450, %v2486
      %v2489 = vadd.f32 %v2451, %v2486
      %v2490 = vadd.f32 %v2452, %v2486
      %v2491 = vadd.f32 %v2453, %v2486
      %v2492 = vadd.f32 %v2454, %v2486
      %v2493 = vadd.f32 %v2455, %v2486
      %v2494 = vadd.f32 %v2456, %v2486
      %v2495 = vadd.f32 %v2457, %v2486
      %v2496 = vadd.f32 %v2458, %v2486
      %v2497 = vadd.f32 %v2459, %v2486
      %v2498 = vadd.f32 %v2460, %v2486
      %v2499 = vadd.f32 %v2461, %v2486
      %v2500 = vadd.f32 %v2462, %v2486
      %v2501 = vadd.f32 %v2463, %v2486
      %v2502 = vadd.f32 %v2464, %v2486
      %v2503 = vadd.f32 %v2465, %v2486
      %v2504 = vadd.f32 %v2466, %v2486
      %v2505 = vadd.f32 %v2467, %v2486
      %v2506 = vadd.f32 %v2468, %v2486
      %v2507 = vadd.f32 %v2469, %v2486
      %v2508 = vadd.f32 %v2470, %v2486
      %v2509 = vadd.f32 %v2471, %v2486
      %v2510 = vadd.f32 %v2472, %v2486
      %v2511 = vadd.f32 %v2473, %v2486
      %v2512 = vadd.f32 %v2474, %v2486
      %v2513 = vadd.f32 %v2475, %v2486
      %v2514 = vadd.f32 %v2476, %v2486
      %v2515 = vadd.f32 %v2477, %v2486
      %v2516 = vadd.f32 %v2478, %v2486
      %v2517 = vadd.f32 %v2479, %v2486
      %v2518 = vadd.f32 %v2480, %v2486
      %v2519 = vadd.f32 %v2481, %v2486
      %v2520 = vxor.u32 %v2488, 2147483648
      %v2521 = vxor.u32 %v2489, 2147483648
      %v2522 = vxor.u32 %v2490, 2147483648
      %v2523 = vxor.u32 %v2491, 2147483648
      %v2524 = vxor.u32 %v2492, 2147483648
      %v2525 = vxor.u32 %v2493, 2147483648
      %v2526 = vxor.u32 %v2494, 2147483648
      %v2527 = vxor.u32 %v2495, 2147483648
      %v2528 = vxor.u32 %v2496, 2147483648
      %v2529 = vxor.u32 %v2497, 2147483648
      %v2530 = vxor.u32 %v2498, 2147483648
      %v2531 = vxor.u32 %v2499, 2147483648
      %v2532 = vxor.u32 %v2500, 2147483648
      %v2533 = vxor.u32 %v2501, 2147483648
      %v2534 = vxor.u32 %v2502, 2147483648
      %v2535 = vxor.u32 %v2503, 2147483648
      %v2536 = vxor.u32 %v2504, 2147483648
      %v2537 = vxor.u32 %v2505, 2147483648
      %v2538 = vxor.u32 %v2506, 2147483648
      %v2539 = vxor.u32 %v2507, 2147483648
      %v2540 = vxor.u32 %v2508, 2147483648
      %v2541 = vxor.u32 %v2509, 2147483648
      %v2542 = vxor.u32 %v2510, 2147483648
      %v2543 = vxor.u32 %v2511, 2147483648
      %v2544 = vxor.u32 %v2512, 2147483648
      %v2545 = vxor.u32 %v2513, 2147483648
      %v2546 = vxor.u32 %v2514, 2147483648
      %v2547 = vxor.u32 %v2515, 2147483648
      %v2548 = vxor.u32 %v2516, 2147483648
      %v2549 = vxor.u32 %v2517, 2147483648
      %v2550 = vxor.u32 %v2518, 2147483648
      %v2551 = vxor.u32 %v2519, 2147483648
      %v2552 = vmul.f32 %v2520, 1.442695
      %v2553 = vpow.pop %v2552
      %v2554 = vmul.f32 %v2521, 1.442695
      %v2555 = vpow.pop %v2554
      %v2556 = vmul.f32 %v2522, 1.442695
      %v2557 = vpow.pop %v2556
      %v2558 = vmul.f32 %v2523, 1.442695
      %v2559 = vpow.pop %v2558
      %v2560 = vmul.f32 %v2524, 1.442695
      %v2561 = vpow.pop %v2560
      %v2562 = vmul.f32 %v2525, 1.442695
      %v2563 = vpow.pop %v2562
      %v2564 = vmul.f32 %v2526, 1.442695
      %v2565 = vpow.pop %v2564
      %v2566 = vmul.f32 %v2527, 1.442695
      %v2567 = vpow.pop %v2566
      %v2568 = vmul.f32 %v2528, 1.442695
      %v2569 = vpow.pop %v2568
      %v2570 = vmul.f32 %v2529, 1.442695
      %v2571 = vpow.pop %v2570
      %v2572 = vmul.f32 %v2530, 1.442695
      %v2573 = vpow.pop %v2572
      %v2574 = vmul.f32 %v2531, 1.442695
      %v2575 = vpow.pop %v2574
      %v2576 = vmul.f32 %v2532, 1.442695
      %v2577 = vpow.pop %v2576
      %v2578 = vmul.f32 %v2533, 1.442695
      %v2579 = vpow.pop %v2578
      %v2580 = vmul.f32 %v2534, 1.442695
      %v2581 = vpow.pop %v2580
      %v2582 = vmul.f32 %v2535, 1.442695
      %v2583 = vpow.pop %v2582
      %v2584 = vmul.f32 %v2536, 1.442695
      %v2585 = vpow.pop %v2584
      %v2586 = vmul.f32 %v2537, 1.442695
      %v2587 = vpow.pop %v2586
      %v2588 = vmul.f32 %v2538, 1.442695
      %v2589 = vpow.pop %v2588
      %v2590 = vmul.f32 %v2539, 1.442695
      %v2591 = vpow.pop %v2590
      %v2592 = vmul.f32 %v2540, 1.442695
      %v2593 = vpow.pop %v2592
      %v2594 = vmul.f32 %v2541, 1.442695
      %v2595 = vpow.pop %v2594
      %v2596 = vmul.f32 %v2542, 1.442695
      %v2597 = vpow.pop %v2596
      %v2598 = vmul.f32 %v2543, 1.442695
      %v2599 = vpow.pop %v2598
      %v2600 = vmul.f32 %v2544, 1.442695
      %v2601 = vpow.pop %v2600
      %v2602 = vmul.f32 %v2545, 1.442695
      %v2603 = vpow.pop %v2602
      %v2604 = vmul.f32 %v2546, 1.442695
      %v2605 = vpow.pop %v2604
      %v2606 = vmul.f32 %v2547, 1.442695
      %v2607 = vpow.pop %v2606
      %v2608 = vmul.f32 %v2548, 1.442695
      %v2609 = vpow.pop %v2608
      %v2610 = vmul.f32 %v2549, 1.442695
      %v2611 = vpow.pop %v2610
      %v2612 = vmul.f32 %v2550, 1.442695
      %v2613 = vpow.pop %v2612
      %v2614 = vmul.f32 %v2551, 1.442695
      %v2615 = vpow.pop %v2614
      %v2616 = vadd.f32 %v2553, 1.0
      %v2617 = vadd.f32 %v2555, 1.0
      %v2618 = vadd.f32 %v2557, 1.0
      %v2619 = vadd.f32 %v2559, 1.0
      %v2620 = vadd.f32 %v2561, 1.0
      %v2621 = vadd.f32 %v2563, 1.0
      %v2622 = vadd.f32 %v2565, 1.0
      %v2623 = vadd.f32 %v2567, 1.0
      %v2624 = vadd.f32 %v2569, 1.0
      %v2625 = vadd.f32 %v2571, 1.0
      %v2626 = vadd.f32 %v2573, 1.0
      %v2627 = vadd.f32 %v2575, 1.0
      %v2628 = vadd.f32 %v2577, 1.0
      %v2629 = vadd.f32 %v2579, 1.0
      %v2630 = vadd.f32 %v2581, 1.0
      %v2631 = vadd.f32 %v2583, 1.0
      %v2632 = vadd.f32 %v2585, 1.0
      %v2633 = vadd.f32 %v2587, 1.0
      %v2634 = vadd.f32 %v2589, 1.0
      %v2635 = vadd.f32 %v2591, 1.0
      %v2636 = vadd.f32 %v2593, 1.0
      %v2637 = vadd.f32 %v2595, 1.0
      %v2638 = vadd.f32 %v2597, 1.0
      %v2639 = vadd.f32 %v2599, 1.0
      %v2640 = vadd.f32 %v2601, 1.0
      %v2641 = vadd.f32 %v2603, 1.0
      %v2642 = vadd.f32 %v2605, 1.0
      %v2643 = vadd.f32 %v2607, 1.0
      %v2644 = vadd.f32 %v2609, 1.0
      %v2645 = vadd.f32 %v2611, 1.0
      %v2646 = vadd.f32 %v2613, 1.0
      %v2647 = vadd.f32 %v2615, 1.0
      %v2648 = vrcp.pop %v2616
      %v2649 = vmul.f32 1.0, %v2648
      %v2650 = vrcp.pop %v2617
      %v2651 = vmul.f32 1.0, %v2650
      %v2652 = vrcp.pop %v2618
      %v2653 = vmul.f32 1.0, %v2652
      %v2654 = vrcp.pop %v2619
      %v2655 = vmul.f32 1.0, %v2654
      %v2656 = vrcp.pop %v2620
      %v2657 = vmul.f32 1.0, %v2656
      %v2658 = vrcp.pop %v2621
      %v2659 = vmul.f32 1.0, %v2658
      %v2660 = vrcp.pop %v2622
      %v2661 = vmul.f32 1.0, %v2660
      %v2662 = vrcp.pop %v2623
      %v2663 = vmul.f32 1.0, %v2662
      %v2664 = vrcp.pop %v2624
      %v2665 = vmul.f32 1.0, %v2664
      %v2666 = vrcp.pop %v2625
      %v2667 = vmul.f32 1.0, %v2666
      %v2668 = vrcp.pop %v2626
      %v2669 = vmul.f32 1.0, %v2668
      %v2670 = vrcp.pop %v2627
      %v2671 = vmul.f32 1.0, %v2670
      %v2672 = vrcp.pop %v2628
      %v2673 = vmul.f32 1.0, %v2672
      %v2674 = vrcp.pop %v2629
      %v2675 = vmul.f32 1.0, %v2674
      %v2676 = vrcp.pop %v2630
      %v2677 = vmul.f32 1.0, %v2676
      %v2678 = vrcp.pop %v2631
      %v2679 = vmul.f32 1.0, %v2678
      %v2680 = vrcp.pop %v2632
      %v2681 = vmul.f32 1.0, %v2680
      %v2682 = vrcp.pop %v2633
      %v2683 = vmul.f32 1.0, %v2682
      %v2684 = vrcp.pop %v2634
      %v2685 = vmul.f32 1.0, %v2684
      %v2686 = vrcp.pop %v2635
      %v2687 = vmul.f32 1.0, %v2686
      %v2688 = vrcp.pop %v2636
      %v2689 = vmul.f32 1.0, %v2688
      %v2690 = vrcp.pop %v2637
      %v2691 = vmul.f32 1.0, %v2690
      %v2692 = vrcp.pop %v2638
      %v2693 = vmul.f32 1.0, %v2692
      %v2694 = vrcp.pop %v2639
      %v2695 = vmul.f32 1.0, %v2694
      %v2696 = vrcp.pop %v2640
      %v2697 = vmul.f32 1.0, %v2696
      %v2698 = vrcp.pop %v2641
      %v2699 = vmul.f32 1.0, %v2698
      %v2700 = vrcp.pop %v2642
      %v2701 = vmul.f32 1.0, %v2700
      %v2702 = vrcp.pop %v2643
      %v2703 = vmul.f32 1.0, %v2702
      %v2704 = vrcp.pop %v2644
      %v2705 = vmul.f32 1.0, %v2704
      %v2706 = vrcp.pop %v2645
      %v2707 = vmul.f32 1.0, %v2706
      %v2708 = vrcp.pop %v2646
      %v2709 = vmul.f32 1.0, %v2708
      %v2710 = vrcp.pop %v2647
      %v2711 = vmul.f32 1.0, %v2710
      %v2712 = vmul.f32 %v2488, %v2649
      %v2713 = vmul.f32 %v2489, %v2651
      %v2714 = vmul.f32 %v2490, %v2653
      %v2715 = vmul.f32 %v2491, %v2655
      %v2716 = vmul.f32 %v2492, %v2657
      %v2717 = vmul.f32 %v2493, %v2659
      %v2718 = vmul.f32 %v2494, %v2661
      %v2719 = vmul.f32 %v2495, %v2663
      %v2720 = vmul.f32 %v2496, %v2665
      %v2721 = vmul.f32 %v2497, %v2667
      %v2722 = vmul.f32 %v2498, %v2669
      %v2723 = vmul.f32 %v2499, %v2671
      %v2724 = vmul.f32 %v2500, %v2673
      %v2725 = vmul.f32 %v2501, %v2675
      %v2726 = vmul.f32 %v2502, %v2677
      %v2727 = vmul.f32 %v2503, %v2679
      %v2728 = vmul.f32 %v2504, %v2681
      %v2729 = vmul.f32 %v2505, %v2683
      %v2730 = vmul.f32 %v2506, %v2685
      %v2731 = vmul.f32 %v2507, %v2687
      %v2732 = vmul.f32 %v2508, %v2689
      %v2733 = vmul.f32 %v2509, %v2691
      %v2734 = vmul.f32 %v2510, %v2693
      %v2735 = vmul.f32 %v2511, %v2695
      %v2736 = vmul.f32 %v2512, %v2697
      %v2737 = vmul.f32 %v2513, %v2699
      %v2738 = vmul.f32 %v2514, %v2701
      %v2739 = vmul.f32 %v2515, %v2703
      %v2740 = vmul.f32 %v2516, %v2705
      %v2741 = vmul.f32 %v2517, %v2707
      %v2742 = vmul.f32 %v2518, %v2709
      %v2743 = vmul.f32 %v2519, %v2711
      %2744 = vst.msk [vmem:[#allocation2 + $0x18] sm:$0xff] %vm599, %v2712
      %2745 = vst.msk [vmem:[#allocation2 + $0x20] sm:$0xff] %vm599, %v2713
      %2746 = vst.msk [vmem:[#allocation2 + $0x28] sm:$0xff] %vm599, %v2714
      %2747 = vst.msk [vmem:[#allocation2 + $0x30] sm:$0xff] %vm599, %v2715
      %2748 = vst.msk [vmem:[#allocation2 + $0x38] sm:$0xff] %vm599, %v2716
      %2749 = vst.msk [vmem:[#allocation2 + $0x40] sm:$0xff] %vm599, %v2717
      %2750 = vst.msk [vmem:[#allocation2 + $0x48] sm:$0xff] %vm599, %v2718
      %2751 = vst.msk [vmem:[#allocation2 + $0x50] sm:$0xff] %vm599, %v2719
      %2752 = vst.msk [vmem:[#allocation2 + $0x58] sm:$0xff] %vm599, %v2720
      %2753 = vst.msk [vmem:[#allocation2 + $0x60] sm:$0xff] %vm599, %v2721
      %2754 = vst.msk [vmem:[#allocation2 + $0x68] sm:$0xff] %vm599, %v2722
      %2755 = vst.msk [vmem:[#allocation2 + $0x70] sm:$0xff] %vm599, %v2723
      %2756 = vst.msk [vmem:[#allocation2 + $0x78] sm:$0xff] %vm599, %v2724
      %2757 = vst.msk [vmem:[#allocation2 + $0x80] sm:$0xff] %vm599, %v2725
      %2758 = vst.msk [vmem:[#allocation2 + $0x88] sm:$0xff] %vm599, %v2726
      %2759 = vst.msk [vmem:[#allocation2 + $0x90] sm:$0xff] %vm599, %v2727
      %2760 = vst.msk [vmem:[#allocation2 + $0x98] sm:$0xff] %vm599, %v2728
      %2761 = vst.msk [vmem:[#allocation2 + $0xa0] sm:$0xff] %vm599, %v2729
      %2762 = vst.msk [vmem:[#allocation2 + $0xa8] sm:$0xff] %vm599, %v2730
      %2763 = vst.msk [vmem:[#allocation2 + $0xb0] sm:$0xff] %vm599, %v2731
      %2764 = vst.msk [vmem:[#allocation2 + $0xb8] sm:$0xff] %vm599, %v2732
      %2765 = vst.msk [vmem:[#allocation2 + $0xc0] sm:$0xff] %vm599, %v2733
      %2766 = vst.msk [vmem:[#allocation2 + $0xc8] sm:$0xff] %vm599, %v2734
      %2767 = vst.msk [vmem:[#allocation2 + $0xd0] sm:$0xff] %vm599, %v2735
      %2768 = vst.msk [vmem:[#allocation2 + $0xd8] sm:$0xff] %vm599, %v2736
      %2769 = vst.msk [vmem:[#allocation2 + $0xe0] sm:$0xff] %vm599, %v2737
      %2770 = vst.msk [vmem:[#allocation2 + $0xe8] sm:$0xff] %vm599, %v2738
      %2771 = vst.msk [vmem:[#allocation2 + $0xf0] sm:$0xff] %vm599, %v2739
      %2772 = vst.msk [vmem:[#allocation2 + $0xf8] sm:$0xff] %vm599, %v2740
      %2773 = vst.msk [vmem:[#allocation2 + $0x100] sm:$0xff] %vm599, %v2741
      %2774 = vst.msk [vmem:[#allocation2 + $0x108] sm:$0xff] %vm599, %v2742
      %2775 = vst.msk [vmem:[#allocation2 + $0x110] sm:$0xff] %vm599, %v2743
      %v2776 = vld [vmem:[#allocation2 + $0x7] sm:$0xff]
      %v2777 = vld [vmem:[#allocation2 + $0xf] sm:$0xff]
      %v2778 = vld [vmem:[#allocation2 + $0x17] sm:$0xff]
      %v2779 = vld [vmem:[#allocation2 + $0x1f] sm:$0xff]
      %v2780 = vld [vmem:[#allocation2 + $0x27] sm:$0xff]
      %v2781 = vld [vmem:[#allocation2 + $0x2f] sm:$0xff]
      %v2782 = vld [vmem:[#allocation2 + $0x37] sm:$0xff]
      %v2783 = vld [vmem:[#allocation2 + $0x3f] sm:$0xff]
      %v2784 = vld [vmem:[#allocation2 + $0x47] sm:$0xff]
      %v2785 = vld [vmem:[#allocation2 + $0x4f] sm:$0xff]
      %v2786 = vld [vmem:[#allocation2 + $0x57] sm:$0xff]
      %v2787 = vld [vmem:[#allocation2 + $0x5f] sm:$0xff]
      %v2788 = vld [vmem:[#allocation2 + $0x67] sm:$0xff]
      %v2789 = vld [vmem:[#allocation2 + $0x6f] sm:$0xff]
      %v2790 = vld [vmem:[#allocation2 + $0x77] sm:$0xff]
      %v2791 = vld [vmem:[#allocation2 + $0x7f] sm:$0xff]
      %v2792 = vld [vmem:[#allocation2 + $0x87] sm:$0xff]
      %v2793 = vld [vmem:[#allocation2 + $0x8f] sm:$0xff]
      %v2794 = vld [vmem:[#allocation2 + $0x97] sm:$0xff]
      %v2795 = vld [vmem:[#allocation2 + $0x9f] sm:$0xff]
      %v2796 = vld [vmem:[#allocation2 + $0xa7] sm:$0xff]
      %v2797 = vld [vmem:[#allocation2 + $0xaf] sm:$0xff]
      %v2798 = vld [vmem:[#allocation2 + $0xb7] sm:$0xff]
      %v2799 = vld [vmem:[#allocation2 + $0xbf] sm:$0xff]
      %v2800 = vld [vmem:[#allocation2 + $0xc7] sm:$0xff]
      %v2801 = vld [vmem:[#allocation2 + $0xcf] sm:$0xff]
      %v2802 = vld [vmem:[#allocation2 + $0xd7] sm:$0xff]
      %v2803 = vld [vmem:[#allocation2 + $0xdf] sm:$0xff]
      %v2804 = vld [vmem:[#allocation2 + $0xe7] sm:$0xff]
      %v2805 = vld [vmem:[#allocation2 + $0xef] sm:$0xff]
      %v2806 = vld [vmem:[#allocation2 + $0xf7] sm:$0xff]
      %v2807 = vld [vmem:[#allocation2 + $0xff] sm:$0xff]
      %v2808 = vpack.c.bf16 %v2777, %v2776
      %v2809 = vpack.c.bf16 %v2779, %v2778
      %v2810 = vpack.c.bf16 %v2781, %v2780
      %v2811 = vpack.c.bf16 %v2783, %v2782
      %v2812 = vpack.c.bf16 %v2785, %v2784
      %v2813 = vpack.c.bf16 %v2787, %v2786
      %v2814 = vpack.c.bf16 %v2789, %v2788
      %v2815 = vpack.c.bf16 %v2791, %v2790
      %v2816 = vpack.c.bf16 %v2793, %v2792
      %v2817 = vpack.c.bf16 %v2795, %v2794
      %v2818 = vpack.c.bf16 %v2797, %v2796
      %v2819 = vpack.c.bf16 %v2799, %v2798
      %v2820 = vpack.c.bf16 %v2801, %v2800
      %v2821 = vpack.c.bf16 %v2803, %v2802
      %v2822 = vpack.c.bf16 %v2805, %v2804
      %v2823 = vpack.c.bf16 %v2807, %v2806
      %v2824 = vld [vmem:[%s10] sm:$0x3]
      %v2825 = vld [vmem:[#allocation2 + $0x107] sm:$0xff]
      %v2826 = vld [vmem:[#allocation2 + $0x10f] sm:$0xff]
      %v2827 = vpack.c.bf16 %v2826, %v2825
      %s2828 = scalar_lea.vmem %s10, 6
      %v2829 = vld [vmem:[%s2828] sm:$0x3]
      %v2831 = vsel %vm599, %v2809, 0
      %v2834 = vsel %vm599, %v2810, 0
      %v2837 = vsel %vm599, %v2811, 0
      %v2840 = vsel %vm599, %v2812, 0
      %v2843 = vsel %vm599, %v2813, 0
      %v2846 = vsel %vm599, %v2814, 0
      %v2849 = vsel %vm599, %v2815, 0
      %v2852 = vsel %vm599, %v2816, 0
      %v2855 = vsel %vm599, %v2817, 0
      %v2858 = vsel %vm599, %v2818, 0
      %v2861 = vsel %vm599, %v2819, 0
      %v2864 = vsel %vm599, %v2820, 0
      %v2867 = vsel %vm599, %v2821, 0
      %v2870 = vsel %vm599, %v2822, 0
      %v2873 = vsel %vm599, %v2823, 0
      %v2876 = vsel %vm599, %v2827, 0
      %v2879 = vsel %vm648, %v2829, 0
      %2881 = vmatprep.subr.bf16.mxu0 0
      %2882 = vmatpush1.bf16.msra.mxu0 0
      %2883 = vmatprep.subr.bf16.mxu0 0
      %2884 = vmatpush1.bf16.msra.mxu0 0
      %2885 = vmatprep.subr.bf16.mxu0 0
      %2886 = vmatpush1.bf16.msra.mxu0 0
      %2887 = vmatprep.subr.bf16.mxu0 0
      %2888 = vmatpush1.bf16.msra.mxu0 0
      %2889 = vmatprep.subr.bf16.mxu0 0
      %2890 = vmatpush1.bf16.msra.mxu0 0
      %2891 = vmatprep.subr.bf16.mxu0 0
      %2892 = vmatpush1.bf16.msra.mxu0 0
      %2893 = vmatprep.subr.bf16.mxu0 0
      %2894 = vmatpush1.bf16.msra.mxu0 0
      %2895 = vmatprep.subr.bf16.mxu0 0
      %2896 = vmatpush1.bf16.msra.mxu0 %v2879
      %2897 = vmatprep.subr.bf16.mxu0 0
      %2898 = vmatpush2.bf16.msra.mxu0 0
      %2899 = vmatprep.subr.bf16.mxu0 0
      %2900 = vmatpush2.bf16.msra.mxu0 0
      %2901 = vmatprep.subr.bf16.mxu0 0
      %2902 = vmatpush2.bf16.msra.mxu0 0
      %2903 = vmatprep.subr.bf16.mxu0 0
      %2904 = vmatpush2.bf16.msra.mxu0 0
      %2905 = vmatprep.subr.bf16.mxu0 0
      %2906 = vmatpush2.bf16.msra.mxu0 0
      %2907 = vmatprep.subr.bf16.mxu0 0
      %2908 = vmatpush2.bf16.msra.mxu0 0
      %2909 = vmatprep.subr.bf16.mxu0 0
      %2910 = vmatpush2.bf16.msra.mxu0 0
      %2911 = vmatprep.subr.bf16.mxu0 0
      %2912 = vmatpush2.bf16.msra.mxu0 0
      %2913 = vmatprep.mubr.bf16.mxu0 0
      %2914 = vmatmul.mubr.bf16.gmra.mxu0 %v2831
      %v2915 = vpop.f32.mrf.mxu0
      %v2916 = vadd.f32 0.0, %v2915
      %v2917 = vpop.f32.mrf.mxu0
      %v2918 = vpop.f32.mrf.mxu0
      %v2919 = vadd.f32 0.0, %v2918
      %v2920 = vpop.f32.mrf.mxu0
      %2921 = vmatprep.mubr.bf16.mxu0 0
      %2922 = vmatmul.mubr.bf16.gmra.mxu0 %v2834
      %v2923 = vpop.f32.mrf.mxu0
      %v2924 = vadd.f32 0.0, %v2923
      %v2925 = vpop.f32.mrf.mxu0
      %v2926 = vpop.f32.mrf.mxu0
      %v2927 = vadd.f32 0.0, %v2926
      %v2928 = vpop.f32.mrf.mxu0
      %2929 = vmatprep.mubr.bf16.mxu0 0
      %2930 = vmatmul.mubr.bf16.gmra.mxu0 %v2837
      %v2931 = vpop.f32.mrf.mxu0
      %v2932 = vadd.f32 0.0, %v2931
      %v2933 = vpop.f32.mrf.mxu0
      %v2934 = vpop.f32.mrf.mxu0
      %v2935 = vadd.f32 0.0, %v2934
      %v2936 = vpop.f32.mrf.mxu0
      %2937 = vmatprep.mubr.bf16.mxu0 0
      %2938 = vmatmul.mubr.bf16.gmra.mxu0 %v2840
      %v2939 = vpop.f32.mrf.mxu0
      %v2940 = vadd.f32 0.0, %v2939
      %v2941 = vpop.f32.mrf.mxu0
      %v2942 = vpop.f32.mrf.mxu0
      %v2943 = vadd.f32 0.0, %v2942
      %v2944 = vpop.f32.mrf.mxu0
      %2945 = vmatprep.mubr.bf16.mxu0 0
      %2946 = vmatmul.mubr.bf16.gmra.mxu0 %v2843
      %v2947 = vpop.f32.mrf.mxu0
      %v2948 = vadd.f32 0.0, %v2947
      %v2949 = vpop.f32.mrf.mxu0
      %v2950 = vpop.f32.mrf.mxu0
      %v2951 = vadd.f32 0.0, %v2950
      %v2952 = vpop.f32.mrf.mxu0
      %2953 = vmatprep.mubr.bf16.mxu0 0
      %2954 = vmatmul.mubr.bf16.gmra.mxu0 %v2846
      %v2955 = vpop.f32.mrf.mxu0
      %v2956 = vadd.f32 0.0, %v2955
      %v2957 = vpop.f32.mrf.mxu0
      %v2958 = vpop.f32.mrf.mxu0
      %v2959 = vadd.f32 0.0, %v2958
      %v2960 = vpop.f32.mrf.mxu0
      %2961 = vmatprep.mubr.bf16.mxu0 0
      %2962 = vmatmul.mubr.bf16.gmra.mxu0 %v2849
      %v2963 = vpop.f32.mrf.mxu0
      %v2964 = vadd.f32 0.0, %v2963
      %v2965 = vpop.f32.mrf.mxu0
      %v2966 = vpop.f32.mrf.mxu0
      %v2967 = vadd.f32 0.0, %v2966
      %v2968 = vpop.f32.mrf.mxu0
      %2969 = vmatprep.mubr.bf16.mxu0 0
      %2970 = vmatmul.mubr.bf16.gmra.mxu0 %v2852
      %v2971 = vpop.f32.mrf.mxu0
      %v2972 = vadd.f32 0.0, %v2971
      %v2973 = vpop.f32.mrf.mxu0
      %v2974 = vpop.f32.mrf.mxu0
      %v2975 = vadd.f32 0.0, %v2974
      %v2976 = vpop.f32.mrf.mxu0
      %2977 = vmatprep.mubr.bf16.mxu0 0
      %2978 = vmatmul.mubr.bf16.gmra.mxu0 %v2855
      %v2979 = vpop.f32.mrf.mxu0
      %v2980 = vadd.f32 0.0, %v2979
      %v2981 = vpop.f32.mrf.mxu0
      %v2982 = vpop.f32.mrf.mxu0
      %v2983 = vadd.f32 0.0, %v2982
      %v2984 = vpop.f32.mrf.mxu0
      %2985 = vmatprep.mubr.bf16.mxu0 0
      %2986 = vmatmul.mubr.bf16.gmra.mxu0 %v2858
      %v2987 = vpop.f32.mrf.mxu0
      %v2988 = vadd.f32 0.0, %v2987
      %v2989 = vpop.f32.mrf.mxu0
      %v2990 = vpop.f32.mrf.mxu0
      %v2991 = vadd.f32 0.0, %v2990
      %v2992 = vpop.f32.mrf.mxu0
      %2993 = vmatprep.mubr.bf16.mxu0 0
      %2994 = vmatmul.mubr.bf16.gmra.mxu0 %v2861
      %v2995 = vpop.f32.mrf.mxu0
      %v2996 = vadd.f32 0.0, %v2995
      %v2997 = vpop.f32.mrf.mxu0
      %v2998 = vpop.f32.mrf.mxu0
      %v2999 = vadd.f32 0.0, %v2998
      %v3000 = vpop.f32.mrf.mxu0
      %3001 = vmatprep.mubr.bf16.mxu0 0
      %3002 = vmatmul.mubr.bf16.gmra.mxu0 %v2864
      %v3003 = vpop.f32.mrf.mxu0
      %v3004 = vadd.f32 0.0, %v3003
      %v3005 = vpop.f32.mrf.mxu0
      %v3006 = vpop.f32.mrf.mxu0
      %v3007 = vadd.f32 0.0, %v3006
      %v3008 = vpop.f32.mrf.mxu0
      %3009 = vmatprep.mubr.bf16.mxu0 0
      %3010 = vmatmul.mubr.bf16.gmra.mxu0 %v2867
      %v3011 = vpop.f32.mrf.mxu0
      %v3012 = vadd.f32 0.0, %v3011
      %v3013 = vpop.f32.mrf.mxu0
      %v3014 = vpop.f32.mrf.mxu0
      %v3015 = vadd.f32 0.0, %v3014
      %v3016 = vpop.f32.mrf.mxu0
      %3017 = vmatprep.mubr.bf16.mxu0 0
      %3018 = vmatmul.mubr.bf16.gmra.mxu0 %v2870
      %v3019 = vpop.f32.mrf.mxu0
      %v3020 = vadd.f32 0.0, %v3019
      %v3021 = vpop.f32.mrf.mxu0
      %v3022 = vpop.f32.mrf.mxu0
      %v3023 = vadd.f32 0.0, %v3022
      %v3024 = vpop.f32.mrf.mxu0
      %3025 = vmatprep.mubr.bf16.mxu0 0
      %3026 = vmatmul.mubr.bf16.gmra.mxu0 %v2873
      %v3027 = vpop.f32.mrf.mxu0
      %v3028 = vadd.f32 0.0, %v3027
      %v3029 = vpop.f32.mrf.mxu0
      %v3030 = vpop.f32.mrf.mxu0
      %v3031 = vadd.f32 0.0, %v3030
      %v3032 = vpop.f32.mrf.mxu0
      %3033 = vmatprep.mubr.bf16.mxu0 0
      %3034 = vmatmul.mubr.bf16.gmra.mxu0 %v2876
      %v3035 = vpop.f32.mrf.mxu0
      %v3036 = vadd.f32 0.0, %v3035
      %v3037 = vpop.f32.mrf.mxu0
      %v3038 = vpop.f32.mrf.mxu0
      %v3039 = vadd.f32 0.0, %v3038
      %v3040 = vpop.f32.mrf.mxu0
      %3041 = vdwg.mxu0
      %v3043 = vsel %vm599, %v2808, 0
      %v3046 = vsel %vm648, %v2824, 0
      %3048 = vmatprep.subr.bf16.mxu0 0
      %3049 = vmatpush1.bf16.msra.mxu0 0
      %3050 = vmatprep.subr.bf16.mxu0 0
      %3051 = vmatpush1.bf16.msra.mxu0 0
      %3052 = vmatprep.subr.bf16.mxu0 0
      %3053 = vmatpush1.bf16.msra.mxu0 0
      %3054 = vmatprep.subr.bf16.mxu0 0
      %3055 = vmatpush1.bf16.msra.mxu0 0
      %3056 = vmatprep.subr.bf16.mxu0 0
      %3057 = vmatpush1.bf16.msra.mxu0 0
      %3058 = vmatprep.subr.bf16.mxu0 0
      %3059 = vmatpush1.bf16.msra.mxu0 0
      %3060 = vmatprep.subr.bf16.mxu0 0
      %3061 = vmatpush1.bf16.msra.mxu0 0
      %3062 = vmatprep.subr.bf16.mxu0 0
      %3063 = vmatpush1.bf16.msra.mxu0 %v3046
      %3064 = vmatprep.subr.bf16.mxu0 0
      %3065 = vmatpush2.bf16.msra.mxu0 0
      %3066 = vmatprep.subr.bf16.mxu0 0
      %3067 = vmatpush2.bf16.msra.mxu0 0
      %3068 = vmatprep.subr.bf16.mxu0 0
      %3069 = vmatpush2.bf16.msra.mxu0 0
      %3070 = vmatprep.subr.bf16.mxu0 0
      %3071 = vmatpush2.bf16.msra.mxu0 0
      %3072 = vmatprep.subr.bf16.mxu0 0
      %3073 = vmatpush2.bf16.msra.mxu0 0
      %3074 = vmatprep.subr.bf16.mxu0 0
      %3075 = vmatpush2.bf16.msra.mxu0 0
      %3076 = vmatprep.subr.bf16.mxu0 0
      %3077 = vmatpush2.bf16.msra.mxu0 0
      %3078 = vmatprep.subr.bf16.mxu0 0
      %3079 = vmatpush2.bf16.msra.mxu0 0
      %3080 = vmatprep.mubr.bf16.mxu0 0
      %3081 = vmatmul.mubr.bf16.gmra.mxu0 %v3043
      %v3082 = vpop.f32.mrf.mxu0
      %v3083 = vadd.f32 %v2916, %v3082
      %v3084 = vpop.f32.mrf.mxu0
      %v3085 = vpop.f32.mrf.mxu0
      %v3086 = vadd.f32 %v2919, %v3085
      %v3087 = vpop.f32.mrf.mxu0
      %3088 = vmatprep.mubr.bf16.mxu0 0
      %3089 = vmatmul.mubr.bf16.gmra.mxu0 %v2831
      %v3090 = vpop.f32.mrf.mxu0
      %v3091 = vadd.f32 %v2924, %v3090
      %v3092 = vpop.f32.mrf.mxu0
      %v3093 = vpop.f32.mrf.mxu0
      %v3094 = vadd.f32 %v2927, %v3093
      %v3095 = vpop.f32.mrf.mxu0
      %3096 = vmatprep.mubr.bf16.mxu0 0
      %3097 = vmatmul.mubr.bf16.gmra.mxu0 %v2834
      %v3098 = vpop.f32.mrf.mxu0
      %v3099 = vadd.f32 %v2932, %v3098
      %v3100 = vpop.f32.mrf.mxu0
      %v3101 = vpop.f32.mrf.mxu0
      %v3102 = vadd.f32 %v2935, %v3101
      %v3103 = vpop.f32.mrf.mxu0
      %3104 = vmatprep.mubr.bf16.mxu0 0
      %3105 = vmatmul.mubr.bf16.gmra.mxu0 %v2837
      %v3106 = vpop.f32.mrf.mxu0
      %v3107 = vadd.f32 %v2940, %v3106
      %v3108 = vpop.f32.mrf.mxu0
      %v3109 = vpop.f32.mrf.mxu0
      %v3110 = vadd.f32 %v2943, %v3109
      %v3111 = vpop.f32.mrf.mxu0
      %3112 = vmatprep.mubr.bf16.mxu0 0
      %3113 = vmatmul.mubr.bf16.gmra.mxu0 %v2840
      %v3114 = vpop.f32.mrf.mxu0
      %v3115 = vadd.f32 %v2948, %v3114
      %v3116 = vpop.f32.mrf.mxu0
      %v3117 = vpop.f32.mrf.mxu0
      %v3118 = vadd.f32 %v2951, %v3117
      %v3119 = vpop.f32.mrf.mxu0
      %3120 = vmatprep.mubr.bf16.mxu0 0
      %3121 = vmatmul.mubr.bf16.gmra.mxu0 %v2843
      %v3122 = vpop.f32.mrf.mxu0
      %v3123 = vadd.f32 %v2956, %v3122
      %v3124 = vpop.f32.mrf.mxu0
      %v3125 = vpop.f32.mrf.mxu0
      %v3126 = vadd.f32 %v2959, %v3125
      %v3127 = vpop.f32.mrf.mxu0
      %3128 = vmatprep.mubr.bf16.mxu0 0
      %3129 = vmatmul.mubr.bf16.gmra.mxu0 %v2846
      %v3130 = vpop.f32.mrf.mxu0
      %v3131 = vadd.f32 %v2964, %v3130
      %v3132 = vpop.f32.mrf.mxu0
      %v3133 = vpop.f32.mrf.mxu0
      %v3134 = vadd.f32 %v2967, %v3133
      %v3135 = vpop.f32.mrf.mxu0
      %3136 = vmatprep.mubr.bf16.mxu0 0
      %3137 = vmatmul.mubr.bf16.gmra.mxu0 %v2849
      %v3138 = vpop.f32.mrf.mxu0
      %v3139 = vadd.f32 %v2972, %v3138
      %v3140 = vpop.f32.mrf.mxu0
      %v3141 = vpop.f32.mrf.mxu0
      %v3142 = vadd.f32 %v2975, %v3141
      %v3143 = vpop.f32.mrf.mxu0
      %3144 = vmatprep.mubr.bf16.mxu0 0
      %3145 = vmatmul.mubr.bf16.gmra.mxu0 %v2852
      %v3146 = vpop.f32.mrf.mxu0
      %v3147 = vadd.f32 %v2980, %v3146
      %v3148 = vpop.f32.mrf.mxu0
      %v3149 = vpop.f32.mrf.mxu0
      %v3150 = vadd.f32 %v2983, %v3149
      %v3151 = vpop.f32.mrf.mxu0
      %3152 = vmatprep.mubr.bf16.mxu0 0
      %3153 = vmatmul.mubr.bf16.gmra.mxu0 %v2855
      %v3154 = vpop.f32.mrf.mxu0
      %v3155 = vadd.f32 %v2988, %v3154
      %v3156 = vpop.f32.mrf.mxu0
      %v3157 = vpop.f32.mrf.mxu0
      %v3158 = vadd.f32 %v2991, %v3157
      %v3159 = vpop.f32.mrf.mxu0
      %3160 = vmatprep.mubr.bf16.mxu0 0
      %3161 = vmatmul.mubr.bf16.gmra.mxu0 %v2858
      %v3162 = vpop.f32.mrf.mxu0
      %v3163 = vadd.f32 %v2996, %v3162
      %v3164 = vpop.f32.mrf.mxu0
      %v3165 = vpop.f32.mrf.mxu0
      %v3166 = vadd.f32 %v2999, %v3165
      %v3167 = vpop.f32.mrf.mxu0
      %3168 = vmatprep.mubr.bf16.mxu0 0
      %3169 = vmatmul.mubr.bf16.gmra.mxu0 %v2861
      %v3170 = vpop.f32.mrf.mxu0
      %v3171 = vadd.f32 %v3004, %v3170
      %v3172 = vpop.f32.mrf.mxu0
      %v3173 = vpop.f32.mrf.mxu0
      %v3174 = vadd.f32 %v3007, %v3173
      %v3175 = vpop.f32.mrf.mxu0
      %3176 = vmatprep.mubr.bf16.mxu0 0
      %3177 = vmatmul.mubr.bf16.gmra.mxu0 %v2864
      %v3178 = vpop.f32.mrf.mxu0
      %v3179 = vadd.f32 %v3012, %v3178
      %v3180 = vpop.f32.mrf.mxu0
      %v3181 = vpop.f32.mrf.mxu0
      %v3182 = vadd.f32 %v3015, %v3181
      %v3183 = vpop.f32.mrf.mxu0
      %3184 = vmatprep.mubr.bf16.mxu0 0
      %3185 = vmatmul.mubr.bf16.gmra.mxu0 %v2867
      %v3186 = vpop.f32.mrf.mxu0
      %v3187 = vadd.f32 %v3020, %v3186
      %v3188 = vpop.f32.mrf.mxu0
      %v3189 = vpop.f32.mrf.mxu0
      %v3190 = vadd.f32 %v3023, %v3189
      %v3191 = vpop.f32.mrf.mxu0
      %3192 = vmatprep.mubr.bf16.mxu0 0
      %3193 = vmatmul.mubr.bf16.gmra.mxu0 %v2870
      %v3194 = vpop.f32.mrf.mxu0
      %v3195 = vadd.f32 %v3028, %v3194
      %v3196 = vpop.f32.mrf.mxu0
      %v3197 = vpop.f32.mrf.mxu0
      %v3198 = vadd.f32 %v3031, %v3197
      %v3199 = vpop.f32.mrf.mxu0
      %3200 = vmatprep.mubr.bf16.mxu0 0
      %3201 = vmatmul.mubr.bf16.gmra.mxu0 %v2873
      %v3202 = vpop.f32.mrf.mxu0
      %v3203 = vadd.f32 %v3036, %v3202
      %v3204 = vpop.f32.mrf.mxu0
      %v3205 = vpop.f32.mrf.mxu0
      %v3206 = vadd.f32 %v3039, %v3205
      %v3207 = vpop.f32.mrf.mxu0
      %3208 = vdwg.mxu0
      %v3209 = vld [vmem:[#allocation2 + $0x27] sm:$0xff]
      %v3210 = vld [vmem:[#allocation2 + $0x2f] sm:$0xff]
      %v3211 = vld [vmem:[#allocation2 + $0x37] sm:$0xff]
      %v3212 = vld [vmem:[#allocation2 + $0x3f] sm:$0xff]
      %v3213 = vld [vmem:[#allocation2 + $0x47] sm:$0xff]
      %v3214 = vld [vmem:[#allocation2 + $0x4f] sm:$0xff]
      %v3215 = vld [vmem:[#allocation2 + $0x57] sm:$0xff]
      %v3216 = vld [vmem:[#allocation2 + $0x5f] sm:$0xff]
      %v3217 = vld [vmem:[#allocation2 + $0x67] sm:$0xff]
      %v3218 = vld [vmem:[#allocation2 + $0x6f] sm:$0xff]
      %v3219 = vld [vmem:[#allocation2 + $0x77] sm:$0xff]
      %v3220 = vld [vmem:[#allocation2 + $0x7f] sm:$0xff]
      %v3221 = vld [vmem:[#allocation2 + $0x87] sm:$0xff]
      %v3222 = vld [vmem:[#allocation2 + $0x8f] sm:$0xff]
      %v3223 = vld [vmem:[#allocation2 + $0x97] sm:$0xff]
      %v3224 = vld [vmem:[#allocation2 + $0x9f] sm:$0xff]
      %v3225 = vld [vmem:[#allocation2 + $0xa7] sm:$0xff]
      %v3226 = vld [vmem:[#allocation2 + $0xaf] sm:$0xff]
      %v3227 = vld [vmem:[#allocation2 + $0xb7] sm:$0xff]
      %v3228 = vld [vmem:[#allocation2 + $0xbf] sm:$0xff]
      %v3229 = vld [vmem:[#allocation2 + $0xc7] sm:$0xff]
      %v3230 = vld [vmem:[#allocation2 + $0xcf] sm:$0xff]
      %v3231 = vld [vmem:[#allocation2 + $0xd7] sm:$0xff]
      %v3232 = vld [vmem:[#allocation2 + $0xdf] sm:$0xff]
      %v3233 = vld [vmem:[#allocation2 + $0xe7] sm:$0xff]
      %v3234 = vld [vmem:[#allocation2 + $0xef] sm:$0xff]
      %v3235 = vld [vmem:[#allocation2 + $0xf7] sm:$0xff]
      %v3236 = vld [vmem:[#allocation2 + $0xff] sm:$0xff]
      %v3237 = vld [vmem:[#allocation2 + $0x107] sm:$0xff]
      %v3238 = vld [vmem:[#allocation2 + $0x10f] sm:$0xff]
      %v3239 = vld [vmem:[#allocation2 + $0x117] sm:$0xff]
      %v3240 = vld [vmem:[#allocation2 + $0x11f] sm:$0xff]
      %v3241 = vpack.c.bf16 %v3210, %v3209
      %v3242 = vpack.c.bf16 %v3212, %v3211
      %v3243 = vpack.c.bf16 %v3214, %v3213
      %v3244 = vpack.c.bf16 %v3216, %v3215
      %v3245 = vpack.c.bf16 %v3218, %v3217
      %v3246 = vpack.c.bf16 %v3220, %v3219
      %v3247 = vpack.c.bf16 %v3222, %v3221
      %v3248 = vpack.c.bf16 %v3224, %v3223
      %v3249 = vpack.c.bf16 %v3226, %v3225
      %v3250 = vpack.c.bf16 %v3228, %v3227
      %v3251 = vpack.c.bf16 %v3230, %v3229
      %v3252 = vpack.c.bf16 %v3232, %v3231
      %v3253 = vpack.c.bf16 %v3234, %v3233
      %v3254 = vpack.c.bf16 %v3236, %v3235
      %v3255 = vpack.c.bf16 %v3238, %v3237
      %v3256 = vpack.c.bf16 %v3240, %v3239
      %s3257 = scalar_lea.vmem %s10, 12
      %v3258 = vld [vmem:[%s3257] sm:$0x3]
      %v3260 = vsel %vm599, %v3241, 0
      %v3263 = vsel %vm599, %v3242, 0
      %v3266 = vsel %vm599, %v3243, 0
      %v3269 = vsel %vm599, %v3244, 0
      %v3272 = vsel %vm599, %v3245, 0
      %v3275 = vsel %vm599, %v3246, 0
      %v3278 = vsel %vm599, %v3247, 0
      %v3281 = vsel %vm599, %v3248, 0
      %v3284 = vsel %vm599, %v3249, 0
      %v3287 = vsel %vm599, %v3250, 0
      %v3290 = vsel %vm599, %v3251, 0
      %v3293 = vsel %vm599, %v3252, 0
      %v3296 = vsel %vm599, %v3253, 0
      %v3299 = vsel %vm599, %v3254, 0
      %v3302 = vsel %vm599, %v3255, 0
      %v3305 = vsel %vm599, %v3256, 0
      %v3308 = vsel %vm648, %v3258, 0
      %3310 = vmatprep.subr.bf16.mxu0 0
      %3311 = vmatpush1.bf16.msra.mxu0 0
      %3312 = vmatprep.subr.bf16.mxu0 0
      %3313 = vmatpush1.bf16.msra.mxu0 0
      %3314 = vmatprep.subr.bf16.mxu0 0
      %3315 = vmatpush1.bf16.msra.mxu0 0
      %3316 = vmatprep.subr.bf16.mxu0 0
      %3317 = vmatpush1.bf16.msra.mxu0 0
      %3318 = vmatprep.subr.bf16.mxu0 0
      %3319 = vmatpush1.bf16.msra.mxu0 0
      %3320 = vmatprep.subr.bf16.mxu0 0
      %3321 = vmatpush1.bf16.msra.mxu0 0
      %3322 = vmatprep.subr.bf16.mxu0 0
      %3323 = vmatpush1.bf16.msra.mxu0 0
      %3324 = vmatprep.subr.bf16.mxu0 0
      %3325 = vmatpush1.bf16.msra.mxu0 %v3308
      %3326 = vmatprep.subr.bf16.mxu0 0
      %3327 = vmatpush2.bf16.msra.mxu0 0
      %3328 = vmatprep.subr.bf16.mxu0 0
      %3329 = vmatpush2.bf16.msra.mxu0 0
      %3330 = vmatprep.subr.bf16.mxu0 0
      %3331 = vmatpush2.bf16.msra.mxu0 0
      %3332 = vmatprep.subr.bf16.mxu0 0
      %3333 = vmatpush2.bf16.msra.mxu0 0
      %3334 = vmatprep.subr.bf16.mxu0 0
      %3335 = vmatpush2.bf16.msra.mxu0 0
      %3336 = vmatprep.subr.bf16.mxu0 0
      %3337 = vmatpush2.bf16.msra.mxu0 0
      %3338 = vmatprep.subr.bf16.mxu0 0
      %3339 = vmatpush2.bf16.msra.mxu0 0
      %3340 = vmatprep.subr.bf16.mxu0 0
      %3341 = vmatpush2.bf16.msra.mxu0 0
      %3342 = vmatprep.mubr.bf16.mxu0 0
      %3343 = vmatmul.mubr.bf16.gmra.mxu0 %v3260
      %v3344 = vpop.f32.mrf.mxu0
      %v3345 = vadd.f32 0.0, %v3344
      %v3346 = vpop.f32.mrf.mxu0
      %v3347 = vpop.f32.mrf.mxu0
      %v3348 = vadd.f32 0.0, %v3347
      %v3349 = vpop.f32.mrf.mxu0
      %3350 = vmatprep.mubr.bf16.mxu0 0
      %3351 = vmatmul.mubr.bf16.gmra.mxu0 %v3263
      %v3352 = vpop.f32.mrf.mxu0
      %v3353 = vadd.f32 0.0, %v3352
      %v3354 = vpop.f32.mrf.mxu0
      %v3355 = vpop.f32.mrf.mxu0
      %v3356 = vadd.f32 0.0, %v3355
      %v3357 = vpop.f32.mrf.mxu0
      %3358 = vmatprep.mubr.bf16.mxu0 0
      %3359 = vmatmul.mubr.bf16.gmra.mxu0 %v3266
      %v3360 = vpop.f32.mrf.mxu0
      %v3361 = vadd.f32 0.0, %v3360
      %v3362 = vpop.f32.mrf.mxu0
      %v3363 = vpop.f32.mrf.mxu0
      %v3364 = vadd.f32 0.0, %v3363
      %v3365 = vpop.f32.mrf.mxu0
      %3366 = vmatprep.mubr.bf16.mxu0 0
      %3367 = vmatmul.mubr.bf16.gmra.mxu0 %v3269
      %v3368 = vpop.f32.mrf.mxu0
      %v3369 = vadd.f32 0.0, %v3368
      %v3370 = vpop.f32.mrf.mxu0
      %v3371 = vpop.f32.mrf.mxu0
      %v3372 = vadd.f32 0.0, %v3371
      %v3373 = vpop.f32.mrf.mxu0
      %3374 = vmatprep.mubr.bf16.mxu0 0
      %3375 = vmatmul.mubr.bf16.gmra.mxu0 %v3272
      %v3376 = vpop.f32.mrf.mxu0
      %v3377 = vadd.f32 0.0, %v3376
      %v3378 = vpop.f32.mrf.mxu0
      %v3379 = vpop.f32.mrf.mxu0
      %v3380 = vadd.f32 0.0, %v3379
      %v3381 = vpop.f32.mrf.mxu0
      %3382 = vmatprep.mubr.bf16.mxu0 0
      %3383 = vmatmul.mubr.bf16.gmra.mxu0 %v3275
      %v3384 = vpop.f32.mrf.mxu0
      %v3385 = vadd.f32 0.0, %v3384
      %v3386 = vpop.f32.mrf.mxu0
      %v3387 = vpop.f32.mrf.mxu0
      %v3388 = vadd.f32 0.0, %v3387
      %v3389 = vpop.f32.mrf.mxu0
      %3390 = vmatprep.mubr.bf16.mxu0 0
      %3391 = vmatmul.mubr.bf16.gmra.mxu0 %v3278
      %v3392 = vpop.f32.mrf.mxu0
      %v3393 = vadd.f32 0.0, %v3392
      %v3394 = vpop.f32.mrf.mxu0
      %v3395 = vpop.f32.mrf.mxu0
      %v3396 = vadd.f32 0.0, %v3395
      %v3397 = vpop.f32.mrf.mxu0
      %3398 = vmatprep.mubr.bf16.mxu0 0
      %3399 = vmatmul.mubr.bf16.gmra.mxu0 %v3281
      %v3400 = vpop.f32.mrf.mxu0
      %v3401 = vadd.f32 0.0, %v3400
      %v3402 = vpop.f32.mrf.mxu0
      %v3403 = vpop.f32.mrf.mxu0
      %v3404 = vadd.f32 0.0, %v3403
      %v3405 = vpop.f32.mrf.mxu0
      %3406 = vmatprep.mubr.bf16.mxu0 0
      %3407 = vmatmul.mubr.bf16.gmra.mxu0 %v3284
      %v3408 = vpop.f32.mrf.mxu0
      %v3409 = vadd.f32 0.0, %v3408
      %v3410 = vpop.f32.mrf.mxu0
      %v3411 = vpop.f32.mrf.mxu0
      %v3412 = vadd.f32 0.0, %v3411
      %v3413 = vpop.f32.mrf.mxu0
      %3414 = vmatprep.mubr.bf16.mxu0 0
      %3415 = vmatmul.mubr.bf16.gmra.mxu0 %v3287
      %v3416 = vpop.f32.mrf.mxu0
      %v3417 = vadd.f32 0.0, %v3416
      %v3418 = vpop.f32.mrf.mxu0
      %v3419 = vpop.f32.mrf.mxu0
      %v3420 = vadd.f32 0.0, %v3419
      %v3421 = vpop.f32.mrf.mxu0
      %3422 = vmatprep.mubr.bf16.mxu0 0
      %3423 = vmatmul.mubr.bf16.gmra.mxu0 %v3290
      %v3424 = vpop.f32.mrf.mxu0
      %v3425 = vadd.f32 0.0, %v3424
      %v3426 = vpop.f32.mrf.mxu0
      %v3427 = vpop.f32.mrf.mxu0
      %v3428 = vadd.f32 0.0, %v3427
      %v3429 = vpop.f32.mrf.mxu0
      %3430 = vmatprep.mubr.bf16.mxu0 0
      %3431 = vmatmul.mubr.bf16.gmra.mxu0 %v3293
      %v3432 = vpop.f32.mrf.mxu0
      %v3433 = vadd.f32 0.0, %v3432
      %v3434 = vpop.f32.mrf.mxu0
      %v3435 = vpop.f32.mrf.mxu0
      %v3436 = vadd.f32 0.0, %v3435
      %v3437 = vpop.f32.mrf.mxu0
      %3438 = vmatprep.mubr.bf16.mxu0 0
      %3439 = vmatmul.mubr.bf16.gmra.mxu0 %v3296
      %v3440 = vpop.f32.mrf.mxu0
      %v3441 = vadd.f32 0.0, %v3440
      %v3442 = vpop.f32.mrf.mxu0
      %v3443 = vpop.f32.mrf.mxu0
      %v3444 = vadd.f32 0.0, %v3443
      %v3445 = vpop.f32.mrf.mxu0
      %3446 = vmatprep.mubr.bf16.mxu0 0
      %3447 = vmatmul.mubr.bf16.gmra.mxu0 %v3299
      %v3448 = vpop.f32.mrf.mxu0
      %v3449 = vadd.f32 0.0, %v3448
      %v3450 = vpop.f32.mrf.mxu0
      %v3451 = vpop.f32.mrf.mxu0
      %v3452 = vadd.f32 0.0, %v3451
      %v3453 = vpop.f32.mrf.mxu0
      %3454 = vmatprep.mubr.bf16.mxu0 0
      %3455 = vmatmul.mubr.bf16.gmra.mxu0 %v3302
      %v3456 = vpop.f32.mrf.mxu0
      %v3457 = vadd.f32 0.0, %v3456
      %v3458 = vpop.f32.mrf.mxu0
      %v3459 = vpop.f32.mrf.mxu0
      %v3460 = vadd.f32 0.0, %v3459
      %v3461 = vpop.f32.mrf.mxu0
      %3462 = vmatprep.mubr.bf16.mxu0 0
      %3463 = vmatmul.mubr.bf16.gmra.mxu0 %v3305
      %v3464 = vpop.f32.mrf.mxu0
      %v3465 = vadd.f32 0.0, %v3464
      %v3466 = vpop.f32.mrf.mxu0
      %v3467 = vpop.f32.mrf.mxu0
      %v3468 = vadd.f32 0.0, %v3467
      %v3469 = vpop.f32.mrf.mxu0
      %3470 = vdwg.mxu0
      %v3471 = vadd.f32 %v3083, %v3345
      %v3472 = vadd.f32 %v3086, %v3348
      %v3473 = vadd.f32 %v3091, %v3353
      %v3474 = vadd.f32 %v3094, %v3356
      %v3475 = vadd.f32 %v3099, %v3361
      %v3476 = vadd.f32 %v3102, %v3364
      %v3477 = vadd.f32 %v3107, %v3369
      %v3478 = vadd.f32 %v3110, %v3372
      %v3479 = vadd.f32 %v3115, %v3377
      %v3480 = vadd.f32 %v3118, %v3380
      %v3481 = vadd.f32 %v3123, %v3385
      %v3482 = vadd.f32 %v3126, %v3388
      %v3483 = vadd.f32 %v3131, %v3393
      %v3484 = vadd.f32 %v3134, %v3396
      %v3485 = vadd.f32 %v3139, %v3401
      %v3486 = vadd.f32 %v3142, %v3404
      %v3487 = vadd.f32 %v3147, %v3409
      %v3488 = vadd.f32 %v3150, %v3412
      %v3489 = vadd.f32 %v3155, %v3417
      %v3490 = vadd.f32 %v3158, %v3420
      %v3491 = vadd.f32 %v3163, %v3425
      %v3492 = vadd.f32 %v3166, %v3428
      %v3493 = vadd.f32 %v3171, %v3433
      %v3494 = vadd.f32 %v3174, %v3436
      %v3495 = vadd.f32 %v3179, %v3441
      %v3496 = vadd.f32 %v3182, %v3444
      %v3497 = vadd.f32 %v3187, %v3449
      %v3498 = vadd.f32 %v3190, %v3452
      %v3499 = vadd.f32 %v3195, %v3457
      %v3500 = vadd.f32 %v3198, %v3460
      %v3501 = vadd.f32 %v3203, %v3465
      %v3502 = vadd.f32 %v3206, %v3468
      %v3503 = vmul.f32 %v3471, %v2079
      %v3504 = vmul.f32 %v3472, %v2080
      %v3505 = vmul.f32 %v3473, %v2081
      %v3506 = vmul.f32 %v3474, %v2082
      %v3507 = vmul.f32 %v3475, %v2083
      %v3508 = vmul.f32 %v3476, %v2084
      %v3509 = vmul.f32 %v3477, %v2085
      %v3510 = vmul.f32 %v3478, %v2086
      %v3511 = vmul.f32 %v3479, %v2087
      %v3512 = vmul.f32 %v3480, %v2088
      %v3513 = vmul.f32 %v3481, %v2089
      %v3514 = vmul.f32 %v3482, %v2090
      %v3515 = vmul.f32 %v3483, %v2091
      %v3516 = vmul.f32 %v3484, %v2092
      %v3517 = vmul.f32 %v3485, %v2093
      %v3518 = vmul.f32 %v3486, %v2094
      %v3519 = vmul.f32 %v3487, %v2095
      %v3520 = vmul.f32 %v3488, %v2096
      %v3521 = vmul.f32 %v3489, %v2097
      %v3522 = vmul.f32 %v3490, %v2098
      %v3523 = vmul.f32 %v3491, %v2099
      %v3524 = vmul.f32 %v3492, %v2100
      %v3525 = vmul.f32 %v3493, %v2101
      %v3526 = vmul.f32 %v3494, %v2102
      %v3527 = vmul.f32 %v3495, %v2103
      %v3528 = vmul.f32 %v3496, %v2104
      %v3529 = vmul.f32 %v3497, %v2105
      %v3530 = vmul.f32 %v3498, %v2106
      %v3531 = vmul.f32 %v3499, %v2107
      %v3532 = vmul.f32 %v3500, %v2108
      %v3533 = vmul.f32 %v3501, %v2109
      %v3534 = vmul.f32 %v3502, %v2110
      %v3535 = vadd.f32 %v3503, 0.0
      %v3536 = vadd.f32 %v3504, 0.0
      %v3537 = vadd.f32 %v3505, 0.0
      %v3538 = vadd.f32 %v3506, 0.0
      %v3539 = vadd.f32 %v3507, 0.0
      %v3540 = vadd.f32 %v3508, 0.0
      %v3541 = vadd.f32 %v3509, 0.0
      %v3542 = vadd.f32 %v3510, 0.0
      %v3543 = vadd.f32 %v3511, 0.0
      %v3544 = vadd.f32 %v3512, 0.0
      %v3545 = vadd.f32 %v3513, 0.0
      %v3546 = vadd.f32 %v3514, 0.0
      %v3547 = vadd.f32 %v3515, 0.0
      %v3548 = vadd.f32 %v3516, 0.0
      %v3549 = vadd.f32 %v3517, 0.0
      %v3550 = vadd.f32 %v3518, 0.0
      %v3551 = vadd.f32 %v3519, 0.0
      %v3552 = vadd.f32 %v3520, 0.0
      %v3553 = vadd.f32 %v3521, 0.0
      %v3554 = vadd.f32 %v3522, 0.0
      %v3555 = vadd.f32 %v3523, 0.0
      %v3556 = vadd.f32 %v3524, 0.0
      %v3557 = vadd.f32 %v3525, 0.0
      %v3558 = vadd.f32 %v3526, 0.0
      %v3559 = vadd.f32 %v3527, 0.0
      %v3560 = vadd.f32 %v3528, 0.0
      %v3561 = vadd.f32 %v3529, 0.0
      %v3562 = vadd.f32 %v3530, 0.0
      %v3563 = vadd.f32 %v3531, 0.0
      %v3564 = vadd.f32 %v3532, 0.0
      %v3565 = vadd.f32 %v3533, 0.0
      %v3566 = vadd.f32 %v3534, 0.0
      %v3567 = vld [vmem:[#allocation2 + $0x8] sm:$0xff]
      %v3568 = vld [vmem:[#allocation2 + $0x10] sm:$0xff]
      %v3569 = vld [vmem:[#allocation2 + $0x18] sm:$0xff]
      %v3570 = vld [vmem:[#allocation2 + $0x20] sm:$0xff]
      %v3571 = vld [vmem:[#allocation2 + $0x28] sm:$0xff]
      %v3572 = vld [vmem:[#allocation2 + $0x30] sm:$0xff]
      %v3573 = vld [vmem:[#allocation2 + $0x38] sm:$0xff]
      %v3574 = vld [vmem:[#allocation2 + $0x40] sm:$0xff]
      %v3575 = vld [vmem:[#allocation2 + $0x48] sm:$0xff]
      %v3576 = vld [vmem:[#allocation2 + $0x50] sm:$0xff]
      %v3577 = vld [vmem:[#allocation2 + $0x58] sm:$0xff]
      %v3578 = vld [vmem:[#allocation2 + $0x60] sm:$0xff]
      %v3579 = vld [vmem:[#allocation2 + $0x68] sm:$0xff]
      %v3580 = vld [vmem:[#allocation2 + $0x70] sm:$0xff]
      %v3581 = vld [vmem:[#allocation2 + $0x78] sm:$0xff]
      %v3582 = vld [vmem:[#allocation2 + $0x80] sm:$0xff]
      %v3583 = vld [vmem:[#allocation2 + $0x88] sm:$0xff]
      %v3584 = vld [vmem:[#allocation2 + $0x90] sm:$0xff]
      %v3585 = vld [vmem:[#allocation2 + $0x98] sm:$0xff]
      %v3586 = vld [vmem:[#allocation2 + $0xa0] sm:$0xff]
      %v3587 = vld [vmem:[#allocation2 + $0xa8] sm:$0xff]
      %v3588 = vld [vmem:[#allocation2 + $0xb0] sm:$0xff]
      %v3589 = vld [vmem:[#allocation2 + $0xb8] sm:$0xff]
      %v3590 = vld [vmem:[#allocation2 + $0xc0] sm:$0xff]
      %v3591 = vld [vmem:[#allocation2 + $0xc8] sm:$0xff]
      %v3592 = vld [vmem:[#allocation2 + $0xd0] sm:$0xff]
      %v3593 = vld [vmem:[#allocation2 + $0xd8] sm:$0xff]
      %v3594 = vld [vmem:[#allocation2 + $0xe0] sm:$0xff]
      %v3595 = vld [vmem:[#allocation2 + $0xe8] sm:$0xff]
      %v3596 = vld [vmem:[#allocation2 + $0xf0] sm:$0xff]
      %v3597 = vld [vmem:[#allocation2 + $0xf8] sm:$0xff]
      %v3598 = vld [vmem:[#allocation2 + $0x100] sm:$0xff]
      %v3599 = vpack.c.bf16 %v3568, %v3567
      %v3600 = vpack.c.bf16 %v3570, %v3569
      %v3601 = vpack.c.bf16 %v3572, %v3571
      %v3602 = vpack.c.bf16 %v3574, %v3573
      %v3603 = vpack.c.bf16 %v3576, %v3575
      %v3604 = vpack.c.bf16 %v3578, %v3577
      %v3605 = vpack.c.bf16 %v3580, %v3579
      %v3606 = vpack.c.bf16 %v3582, %v3581
      %v3607 = vpack.c.bf16 %v3584, %v3583
      %v3608 = vpack.c.bf16 %v3586, %v3585
      %v3609 = vpack.c.bf16 %v3588, %v3587
      %v3610 = vpack.c.bf16 %v3590, %v3589
      %v3611 = vpack.c.bf16 %v3592, %v3591
      %v3612 = vpack.c.bf16 %v3594, %v3593
      %v3613 = vpack.c.bf16 %v3596, %v3595
      %v3614 = vpack.c.bf16 %v3598, %v3597
      %s3615 = scalar_lea.vmem %s10, 2
      %v3616 = vld [vmem:[%s3615] sm:$0x3]
      %v3617 = vld [vmem:[#allocation2 + $0x108] sm:$0xff]
      %v3618 = vld [vmem:[#allocation2 + $0x110] sm:$0xff]
      %v3619 = vpack.c.bf16 %v3618, %v3617
      %s3620 = scalar_lea.vmem %s10, 8
      %v3621 = vld [vmem:[%s3620] sm:$0x3]
      %v3623 = vsel %vm599, %v3600, 0
      %v3626 = vsel %vm599, %v3601, 0
      %v3629 = vsel %vm599, %v3602, 0
      %v3632 = vsel %vm599, %v3603, 0
      %v3635 = vsel %vm599, %v3604, 0
      %v3638 = vsel %vm599, %v3605, 0
      %v3641 = vsel %vm599, %v3606, 0
      %v3644 = vsel %vm599, %v3607, 0
      %v3647 = vsel %vm599, %v3608, 0
      %v3650 = vsel %vm599, %v3609, 0
      %v3653 = vsel %vm599, %v3610, 0
      %v3656 = vsel %vm599, %v3611, 0
      %v3659 = vsel %vm599, %v3612, 0
      %v3662 = vsel %vm599, %v3613, 0
      %v3665 = vsel %vm599, %v3614, 0
      %v3668 = vsel %vm599, %v3619, 0
      %v3671 = vsel %vm648, %v3621, 0
      %3673 = vmatprep.subr.bf16.mxu0 0
      %3674 = vmatpush1.bf16.msra.mxu0 0
      %3675 = vmatprep.subr.bf16.mxu0 0
      %3676 = vmatpush1.bf16.msra.mxu0 0
      %3677 = vmatprep.subr.bf16.mxu0 0
      %3678 = vmatpush1.bf16.msra.mxu0 0
      %3679 = vmatprep.subr.bf16.mxu0 0
      %3680 = vmatpush1.bf16.msra.mxu0 0
      %3681 = vmatprep.subr.bf16.mxu0 0
      %3682 = vmatpush1.bf16.msra.mxu0 0
      %3683 = vmatprep.subr.bf16.mxu0 0
      %3684 = vmatpush1.bf16.msra.mxu0 0
      %3685 = vmatprep.subr.bf16.mxu0 0
      %3686 = vmatpush1.bf16.msra.mxu0 0
      %3687 = vmatprep.subr.bf16.mxu0 0
      %3688 = vmatpush1.bf16.msra.mxu0 %v3671
      %3689 = vmatprep.subr.bf16.mxu0 0
      %3690 = vmatpush2.bf16.msra.mxu0 0
      %3691 = vmatprep.subr.bf16.mxu0 0
      %3692 = vmatpush2.bf16.msra.mxu0 0
      %3693 = vmatprep.subr.bf16.mxu0 0
      %3694 = vmatpush2.bf16.msra.mxu0 0
      %3695 = vmatprep.subr.bf16.mxu0 0
      %3696 = vmatpush2.bf16.msra.mxu0 0
      %3697 = vmatprep.subr.bf16.mxu0 0
      %3698 = vmatpush2.bf16.msra.mxu0 0
      %3699 = vmatprep.subr.bf16.mxu0 0
      %3700 = vmatpush2.bf16.msra.mxu0 0
      %3701 = vmatprep.subr.bf16.mxu0 0
      %3702 = vmatpush2.bf16.msra.mxu0 0
      %3703 = vmatprep.subr.bf16.mxu0 0
      %3704 = vmatpush2.bf16.msra.mxu0 0
      %3705 = vmatprep.mubr.bf16.mxu0 0
      %3706 = vmatmul.mubr.bf16.gmra.mxu0 %v3623
      %v3707 = vpop.f32.mrf.mxu0
      %v3708 = vadd.f32 0.0, %v3707
      %v3709 = vpop.f32.mrf.mxu0
      %v3710 = vpop.f32.mrf.mxu0
      %v3711 = vadd.f32 0.0, %v3710
      %v3712 = vpop.f32.mrf.mxu0
      %3713 = vmatprep.mubr.bf16.mxu0 0
      %3714 = vmatmul.mubr.bf16.gmra.mxu0 %v3626
      %v3715 = vpop.f32.mrf.mxu0
      %v3716 = vadd.f32 0.0, %v3715
      %v3717 = vpop.f32.mrf.mxu0
      %v3718 = vpop.f32.mrf.mxu0
      %v3719 = vadd.f32 0.0, %v3718
      %v3720 = vpop.f32.mrf.mxu0
      %3721 = vmatprep.mubr.bf16.mxu0 0
      %3722 = vmatmul.mubr.bf16.gmra.mxu0 %v3629
      %v3723 = vpop.f32.mrf.mxu0
      %v3724 = vadd.f32 0.0, %v3723
      %v3725 = vpop.f32.mrf.mxu0
      %v3726 = vpop.f32.mrf.mxu0
      %v3727 = vadd.f32 0.0, %v3726
      %v3728 = vpop.f32.mrf.mxu0
      %3729 = vmatprep.mubr.bf16.mxu0 0
      %3730 = vmatmul.mubr.bf16.gmra.mxu0 %v3632
      %v3731 = vpop.f32.mrf.mxu0
      %v3732 = vadd.f32 0.0, %v3731
      %v3733 = vpop.f32.mrf.mxu0
      %v3734 = vpop.f32.mrf.mxu0
      %v3735 = vadd.f32 0.0, %v3734
      %v3736 = vpop.f32.mrf.mxu0
      %3737 = vmatprep.mubr.bf16.mxu0 0
      %3738 = vmatmul.mubr.bf16.gmra.mxu0 %v3635
      %v3739 = vpop.f32.mrf.mxu0
      %v3740 = vadd.f32 0.0, %v3739
      %v3741 = vpop.f32.mrf.mxu0
      %v3742 = vpop.f32.mrf.mxu0
      %v3743 = vadd.f32 0.0, %v3742
      %v3744 = vpop.f32.mrf.mxu0
      %3745 = vmatprep.mubr.bf16.mxu0 0
      %3746 = vmatmul.mubr.bf16.gmra.mxu0 %v3638
      %v3747 = vpop.f32.mrf.mxu0
      %v3748 = vadd.f32 0.0, %v3747
      %v3749 = vpop.f32.mrf.mxu0
      %v3750 = vpop.f32.mrf.mxu0
      %v3751 = vadd.f32 0.0, %v3750
      %v3752 = vpop.f32.mrf.mxu0
      %3753 = vmatprep.mubr.bf16.mxu0 0
      %3754 = vmatmul.mubr.bf16.gmra.mxu0 %v3641
      %v3755 = vpop.f32.mrf.mxu0
      %v3756 = vadd.f32 0.0, %v3755
      %v3757 = vpop.f32.mrf.mxu0
      %v3758 = vpop.f32.mrf.mxu0
      %v3759 = vadd.f32 0.0, %v3758
      %v3760 = vpop.f32.mrf.mxu0
      %3761 = vmatprep.mubr.bf16.mxu0 0
      %3762 = vmatmul.mubr.bf16.gmra.mxu0 %v3644
      %v3763 = vpop.f32.mrf.mxu0
      %v3764 = vadd.f32 0.0, %v3763
      %v3765 = vpop.f32.mrf.mxu0
      %v3766 = vpop.f32.mrf.mxu0
      %v3767 = vadd.f32 0.0, %v3766
      %v3768 = vpop.f32.mrf.mxu0
      %3769 = vmatprep.mubr.bf16.mxu0 0
      %3770 = vmatmul.mubr.bf16.gmra.mxu0 %v3647
      %v3771 = vpop.f32.mrf.mxu0
      %v3772 = vadd.f32 0.0, %v3771
      %v3773 = vpop.f32.mrf.mxu0
      %v3774 = vpop.f32.mrf.mxu0
      %v3775 = vadd.f32 0.0, %v3774
      %v3776 = vpop.f32.mrf.mxu0
      %3777 = vmatprep.mubr.bf16.mxu0 0
      %3778 = vmatmul.mubr.bf16.gmra.mxu0 %v3650
      %v3779 = vpop.f32.mrf.mxu0
      %v3780 = vadd.f32 0.0, %v3779
      %v3781 = vpop.f32.mrf.mxu0
      %v3782 = vpop.f32.mrf.mxu0
      %v3783 = vadd.f32 0.0, %v3782
      %v3784 = vpop.f32.mrf.mxu0
      %3785 = vmatprep.mubr.bf16.mxu0 0
      %3786 = vmatmul.mubr.bf16.gmra.mxu0 %v3653
      %v3787 = vpop.f32.mrf.mxu0
      %v3788 = vadd.f32 0.0, %v3787
      %v3789 = vpop.f32.mrf.mxu0
      %v3790 = vpop.f32.mrf.mxu0
      %v3791 = vadd.f32 0.0, %v3790
      %v3792 = vpop.f32.mrf.mxu0
      %3793 = vmatprep.mubr.bf16.mxu0 0
      %3794 = vmatmul.mubr.bf16.gmra.mxu0 %v3656
      %v3795 = vpop.f32.mrf.mxu0
      %v3796 = vadd.f32 0.0, %v3795
      %v3797 = vpop.f32.mrf.mxu0
      %v3798 = vpop.f32.mrf.mxu0
      %v3799 = vadd.f32 0.0, %v3798
      %v3800 = vpop.f32.mrf.mxu0
      %3801 = vmatprep.mubr.bf16.mxu0 0
      %3802 = vmatmul.mubr.bf16.gmra.mxu0 %v3659
      %v3803 = vpop.f32.mrf.mxu0
      %v3804 = vadd.f32 0.0, %v3803
      %v3805 = vpop.f32.mrf.mxu0
      %v3806 = vpop.f32.mrf.mxu0
      %v3807 = vadd.f32 0.0, %v3806
      %v3808 = vpop.f32.mrf.mxu0
      %3809 = vmatprep.mubr.bf16.mxu0 0
      %3810 = vmatmul.mubr.bf16.gmra.mxu0 %v3662
      %v3811 = vpop.f32.mrf.mxu0
      %v3812 = vadd.f32 0.0, %v3811
      %v3813 = vpop.f32.mrf.mxu0
      %v3814 = vpop.f32.mrf.mxu0
      %v3815 = vadd.f32 0.0, %v3814
      %v3816 = vpop.f32.mrf.mxu0
      %3817 = vmatprep.mubr.bf16.mxu0 0
      %3818 = vmatmul.mubr.bf16.gmra.mxu0 %v3665
      %v3819 = vpop.f32.mrf.mxu0
      %v3820 = vadd.f32 0.0, %v3819
      %v3821 = vpop.f32.mrf.mxu0
      %v3822 = vpop.f32.mrf.mxu0
      %v3823 = vadd.f32 0.0, %v3822
      %v3824 = vpop.f32.mrf.mxu0
      %3825 = vmatprep.mubr.bf16.mxu0 0
      %3826 = vmatmul.mubr.bf16.gmra.mxu0 %v3668
      %v3827 = vpop.f32.mrf.mxu0
      %v3828 = vadd.f32 0.0, %v3827
      %v3829 = vpop.f32.mrf.mxu0
      %v3830 = vpop.f32.mrf.mxu0
      %v3831 = vadd.f32 0.0, %v3830
      %v3832 = vpop.f32.mrf.mxu0
      %3833 = vdwg.mxu0
      %v3835 = vsel %vm599, %v3599, 0
      %v3838 = vsel %vm648, %v3616, 0
      %3840 = vmatprep.subr.bf16.mxu0 0
      %3841 = vmatpush1.bf16.msra.mxu0 0
      %3842 = vmatprep.subr.bf16.mxu0 0
      %3843 = vmatpush1.bf16.msra.mxu0 0
      %3844 = vmatprep.subr.bf16.mxu0 0
      %3845 = vmatpush1.bf16.msra.mxu0 0
      %3846 = vmatprep.subr.bf16.mxu0 0
      %3847 = vmatpush1.bf16.msra.mxu0 0
      %3848 = vmatprep.subr.bf16.mxu0 0
      %3849 = vmatpush1.bf16.msra.mxu0 0
      %3850 = vmatprep.subr.bf16.mxu0 0
      %3851 = vmatpush1.bf16.msra.mxu0 0
      %3852 = vmatprep.subr.bf16.mxu0 0
      %3853 = vmatpush1.bf16.msra.mxu0 0
      %3854 = vmatprep.subr.bf16.mxu0 0
      %3855 = vmatpush1.bf16.msra.mxu0 %v3838
      %3856 = vmatprep.subr.bf16.mxu0 0
      %3857 = vmatpush2.bf16.msra.mxu0 0
      %3858 = vmatprep.subr.bf16.mxu0 0
      %3859 = vmatpush2.bf16.msra.mxu0 0
      %3860 = vmatprep.subr.bf16.mxu0 0
      %3861 = vmatpush2.bf16.msra.mxu0 0
      %3862 = vmatprep.subr.bf16.mxu0 0
      %3863 = vmatpush2.bf16.msra.mxu0 0
      %3864 = vmatprep.subr.bf16.mxu0 0
      %3865 = vmatpush2.bf16.msra.mxu0 0
      %3866 = vmatprep.subr.bf16.mxu0 0
      %3867 = vmatpush2.bf16.msra.mxu0 0
      %3868 = vmatprep.subr.bf16.mxu0 0
      %3869 = vmatpush2.bf16.msra.mxu0 0
      %3870 = vmatprep.subr.bf16.mxu0 0
      %3871 = vmatpush2.bf16.msra.mxu0 0
      %3872 = vmatprep.mubr.bf16.mxu0 0
      %3873 = vmatmul.mubr.bf16.gmra.mxu0 %v3835
      %v3874 = vpop.f32.mrf.mxu0
      %v3875 = vadd.f32 %v3708, %v3874
      %v3876 = vpop.f32.mrf.mxu0
      %v3877 = vpop.f32.mrf.mxu0
      %v3878 = vadd.f32 %v3711, %v3877
      %v3879 = vpop.f32.mrf.mxu0
      %3880 = vmatprep.mubr.bf16.mxu0 0
      %3881 = vmatmul.mubr.bf16.gmra.mxu0 %v3623
      %v3882 = vpop.f32.mrf.mxu0
      %v3883 = vadd.f32 %v3716, %v3882
      %v3884 = vpop.f32.mrf.mxu0
      %v3885 = vpop.f32.mrf.mxu0
      %v3886 = vadd.f32 %v3719, %v3885
      %v3887 = vpop.f32.mrf.mxu0
      %3888 = vmatprep.mubr.bf16.mxu0 0
      %3889 = vmatmul.mubr.bf16.gmra.mxu0 %v3626
      %v3890 = vpop.f32.mrf.mxu0
      %v3891 = vadd.f32 %v3724, %v3890
      %v3892 = vpop.f32.mrf.mxu0
      %v3893 = vpop.f32.mrf.mxu0
      %v3894 = vadd.f32 %v3727, %v3893
      %v3895 = vpop.f32.mrf.mxu0
      %3896 = vmatprep.mubr.bf16.mxu0 0
      %3897 = vmatmul.mubr.bf16.gmra.mxu0 %v3629
      %v3898 = vpop.f32.mrf.mxu0
      %v3899 = vadd.f32 %v3732, %v3898
      %v3900 = vpop.f32.mrf.mxu0
      %v3901 = vpop.f32.mrf.mxu0
      %v3902 = vadd.f32 %v3735, %v3901
      %v3903 = vpop.f32.mrf.mxu0
      %3904 = vmatprep.mubr.bf16.mxu0 0
      %3905 = vmatmul.mubr.bf16.gmra.mxu0 %v3632
      %v3906 = vpop.f32.mrf.mxu0
      %v3907 = vadd.f32 %v3740, %v3906
      %v3908 = vpop.f32.mrf.mxu0
      %v3909 = vpop.f32.mrf.mxu0
      %v3910 = vadd.f32 %v3743, %v3909
      %v3911 = vpop.f32.mrf.mxu0
      %3912 = vmatprep.mubr.bf16.mxu0 0
      %3913 = vmatmul.mubr.bf16.gmra.mxu0 %v3635
      %v3914 = vpop.f32.mrf.mxu0
      %v3915 = vadd.f32 %v3748, %v3914
      %v3916 = vpop.f32.mrf.mxu0
      %v3917 = vpop.f32.mrf.mxu0
      %v3918 = vadd.f32 %v3751, %v3917
      %v3919 = vpop.f32.mrf.mxu0
      %3920 = vmatprep.mubr.bf16.mxu0 0
      %3921 = vmatmul.mubr.bf16.gmra.mxu0 %v3638
      %v3922 = vpop.f32.mrf.mxu0
      %v3923 = vadd.f32 %v3756, %v3922
      %v3924 = vpop.f32.mrf.mxu0
      %v3925 = vpop.f32.mrf.mxu0
      %v3926 = vadd.f32 %v3759, %v3925
      %v3927 = vpop.f32.mrf.mxu0
      %3928 = vmatprep.mubr.bf16.mxu0 0
      %3929 = vmatmul.mubr.bf16.gmra.mxu0 %v3641
      %v3930 = vpop.f32.mrf.mxu0
      %v3931 = vadd.f32 %v3764, %v3930
      %v3932 = vpop.f32.mrf.mxu0
      %v3933 = vpop.f32.mrf.mxu0
      %v3934 = vadd.f32 %v3767, %v3933
      %v3935 = vpop.f32.mrf.mxu0
      %3936 = vmatprep.mubr.bf16.mxu0 0
      %3937 = vmatmul.mubr.bf16.gmra.mxu0 %v3644
      %v3938 = vpop.f32.mrf.mxu0
      %v3939 = vadd.f32 %v3772, %v3938
      %v3940 = vpop.f32.mrf.mxu0
      %v3941 = vpop.f32.mrf.mxu0
      %v3942 = vadd.f32 %v3775, %v3941
      %v3943 = vpop.f32.mrf.mxu0
      %3944 = vmatprep.mubr.bf16.mxu0 0
      %3945 = vmatmul.mubr.bf16.gmra.mxu0 %v3647
      %v3946 = vpop.f32.mrf.mxu0
      %v3947 = vadd.f32 %v3780, %v3946
      %v3948 = vpop.f32.mrf.mxu0
      %v3949 = vpop.f32.mrf.mxu0
      %v3950 = vadd.f32 %v3783, %v3949
      %v3951 = vpop.f32.mrf.mxu0
      %3952 = vmatprep.mubr.bf16.mxu0 0
      %3953 = vmatmul.mubr.bf16.gmra.mxu0 %v3650
      %v3954 = vpop.f32.mrf.mxu0
      %v3955 = vadd.f32 %v3788, %v3954
      %v3956 = vpop.f32.mrf.mxu0
      %v3957 = vpop.f32.mrf.mxu0
      %v3958 = vadd.f32 %v3791, %v3957
      %v3959 = vpop.f32.mrf.mxu0
      %3960 = vmatprep.mubr.bf16.mxu0 0
      %3961 = vmatmul.mubr.bf16.gmra.mxu0 %v3653
      %v3962 = vpop.f32.mrf.mxu0
      %v3963 = vadd.f32 %v3796, %v3962
      %v3964 = vpop.f32.mrf.mxu0
      %v3965 = vpop.f32.mrf.mxu0
      %v3966 = vadd.f32 %v3799, %v3965
      %v3967 = vpop.f32.mrf.mxu0
      %3968 = vmatprep.mubr.bf16.mxu0 0
      %3969 = vmatmul.mubr.bf16.gmra.mxu0 %v3656
      %v3970 = vpop.f32.mrf.mxu0
      %v3971 = vadd.f32 %v3804, %v3970
      %v3972 = vpop.f32.mrf.mxu0
      %v3973 = vpop.f32.mrf.mxu0
      %v3974 = vadd.f32 %v3807, %v3973
      %v3975 = vpop.f32.mrf.mxu0
      %3976 = vmatprep.mubr.bf16.mxu0 0
      %3977 = vmatmul.mubr.bf16.gmra.mxu0 %v3659
      %v3978 = vpop.f32.mrf.mxu0
      %v3979 = vadd.f32 %v3812, %v3978
      %v3980 = vpop.f32.mrf.mxu0
      %v3981 = vpop.f32.mrf.mxu0
      %v3982 = vadd.f32 %v3815, %v3981
      %v3983 = vpop.f32.mrf.mxu0
      %3984 = vmatprep.mubr.bf16.mxu0 0
      %3985 = vmatmul.mubr.bf16.gmra.mxu0 %v3662
      %v3986 = vpop.f32.mrf.mxu0
      %v3987 = vadd.f32 %v3820, %v3986
      %v3988 = vpop.f32.mrf.mxu0
      %v3989 = vpop.f32.mrf.mxu0
      %v3990 = vadd.f32 %v3823, %v3989
      %v3991 = vpop.f32.mrf.mxu0
      %3992 = vmatprep.mubr.bf16.mxu0 0
      %3993 = vmatmul.mubr.bf16.gmra.mxu0 %v3665
      %v3994 = vpop.f32.mrf.mxu0
      %v3995 = vadd.f32 %v3828, %v3994
      %v3996 = vpop.f32.mrf.mxu0
      %v3997 = vpop.f32.mrf.mxu0
      %v3998 = vadd.f32 %v3831, %v3997
      %v3999 = vpop.f32.mrf.mxu0
      %4000 = vdwg.mxu0
      %v4001 = vld [vmem:[#allocation2 + $0x28] sm:$0xff]
      %v4002 = vld [vmem:[#allocation2 + $0x30] sm:$0xff]
      %v4003 = vld [vmem:[#allocation2 + $0x38] sm:$0xff]
      %v4004 = vld [vmem:[#allocation2 + $0x40] sm:$0xff]
      %v4005 = vld [vmem:[#allocation2 + $0x48] sm:$0xff]
      %v4006 = vld [vmem:[#allocation2 + $0x50] sm:$0xff]
      %v4007 = vld [vmem:[#allocation2 + $0x58] sm:$0xff]
      %v4008 = vld [vmem:[#allocation2 + $0x60] sm:$0xff]
      %v4009 = vld [vmem:[#allocation2 + $0x68] sm:$0xff]
      %v4010 = vld [vmem:[#allocation2 + $0x70] sm:$0xff]
      %v4011 = vld [vmem:[#allocation2 + $0x78] sm:$0xff]
      %v4012 = vld [vmem:[#allocation2 + $0x80] sm:$0xff]
      %v4013 = vld [vmem:[#allocation2 + $0x88] sm:$0xff]
      %v4014 = vld [vmem:[#allocation2 + $0x90] sm:$0xff]
      %v4015 = vld [vmem:[#allocation2 + $0x98] sm:$0xff]
      %v4016 = vld [vmem:[#allocation2 + $0xa0] sm:$0xff]
      %v4017 = vld [vmem:[#allocation2 + $0xa8] sm:$0xff]
      %v4018 = vld [vmem:[#allocation2 + $0xb0] sm:$0xff]
      %v4019 = vld [vmem:[#allocation2 + $0xb8] sm:$0xff]
      %v4020 = vld [vmem:[#allocation2 + $0xc0] sm:$0xff]
      %v4021 = vld [vmem:[#allocation2 + $0xc8] sm:$0xff]
      %v4022 = vld [vmem:[#allocation2 + $0xd0] sm:$0xff]
      %v4023 = vld [vmem:[#allocation2 + $0xd8] sm:$0xff]
      %v4024 = vld [vmem:[#allocation2 + $0xe0] sm:$0xff]
      %v4025 = vld [vmem:[#allocation2 + $0xe8] sm:$0xff]
      %v4026 = vld [vmem:[#allocation2 + $0xf0] sm:$0xff]
      %v4027 = vld [vmem:[#allocation2 + $0xf8] sm:$0xff]
      %v4028 = vld [vmem:[#allocation2 + $0x100] sm:$0xff]
      %v4029 = vld [vmem:[#allocation2 + $0x108] sm:$0xff]
      %v4030 = vld [vmem:[#allocation2 + $0x110] sm:$0xff]
      %v4031 = vld [vmem:[#allocation2 + $0x118] sm:$0xff]
      %v4032 = vld [vmem:[#allocation2 + $0x120] sm:$0xff]
      %v4033 = vpack.c.bf16 %v4002, %v4001
      %v4034 = vpack.c.bf16 %v4004, %v4003
      %v4035 = vpack.c.bf16 %v4006, %v4005
      %v4036 = vpack.c.bf16 %v4008, %v4007
      %v4037 = vpack.c.bf16 %v4010, %v4009
      %v4038 = vpack.c.bf16 %v4012, %v4011
      %v4039 = vpack.c.bf16 %v4014, %v4013
      %v4040 = vpack.c.bf16 %v4016, %v4015
      %v4041 = vpack.c.bf16 %v4018, %v4017
      %v4042 = vpack.c.bf16 %v4020, %v4019
      %v4043 = vpack.c.bf16 %v4022, %v4021
      %v4044 = vpack.c.bf16 %v4024, %v4023
      %v4045 = vpack.c.bf16 %v4026, %v4025
      %v4046 = vpack.c.bf16 %v4028, %v4027
      %v4047 = vpack.c.bf16 %v4030, %v4029
      %v4048 = vpack.c.bf16 %v4032, %v4031
      %s4049 = scalar_lea.vmem %s10, 14
      %v4050 = vld [vmem:[%s4049] sm:$0x3]
      %v4052 = vsel %vm599, %v4033, 0
      %v4055 = vsel %vm599, %v4034, 0
      %v4058 = vsel %vm599, %v4035, 0
      %v4061 = vsel %vm599, %v4036, 0
      %v4064 = vsel %vm599, %v4037, 0
      %v4067 = vsel %vm599, %v4038, 0
      %v4070 = vsel %vm599, %v4039, 0
      %v4073 = vsel %vm599, %v4040, 0
      %v4076 = vsel %vm599, %v4041, 0
      %v4079 = vsel %vm599, %v4042, 0
      %v4082 = vsel %vm599, %v4043, 0
      %v4085 = vsel %vm599, %v4044, 0
      %v4088 = vsel %vm599, %v4045, 0
      %v4091 = vsel %vm599, %v4046, 0
      %v4094 = vsel %vm599, %v4047, 0
      %v4097 = vsel %vm599, %v4048, 0
      %v4100 = vsel %vm648, %v4050, 0
      %4102 = vmatprep.subr.bf16.mxu0 0
      %4103 = vmatpush1.bf16.msra.mxu0 0
      %4104 = vmatprep.subr.bf16.mxu0 0
      %4105 = vmatpush1.bf16.msra.mxu0 0
      %4106 = vmatprep.subr.bf16.mxu0 0
      %4107 = vmatpush1.bf16.msra.mxu0 0
      %4108 = vmatprep.subr.bf16.mxu0 0
      %4109 = vmatpush1.bf16.msra.mxu0 0
      %4110 = vmatprep.subr.bf16.mxu0 0
      %4111 = vmatpush1.bf16.msra.mxu0 0
      %4112 = vmatprep.subr.bf16.mxu0 0
      %4113 = vmatpush1.bf16.msra.mxu0 0
      %4114 = vmatprep.subr.bf16.mxu0 0
      %4115 = vmatpush1.bf16.msra.mxu0 0
      %4116 = vmatprep.subr.bf16.mxu0 0
      %4117 = vmatpush1.bf16.msra.mxu0 %v4100
      %4118 = vmatprep.subr.bf16.mxu0 0
      %4119 = vmatpush2.bf16.msra.mxu0 0
      %4120 = vmatprep.subr.bf16.mxu0 0
      %4121 = vmatpush2.bf16.msra.mxu0 0
      %4122 = vmatprep.subr.bf16.mxu0 0
      %4123 = vmatpush2.bf16.msra.mxu0 0
      %4124 = vmatprep.subr.bf16.mxu0 0
      %4125 = vmatpush2.bf16.msra.mxu0 0
      %4126 = vmatprep.subr.bf16.mxu0 0
      %4127 = vmatpush2.bf16.msra.mxu0 0
      %4128 = vmatprep.subr.bf16.mxu0 0
      %4129 = vmatpush2.bf16.msra.mxu0 0
      %4130 = vmatprep.subr.bf16.mxu0 0
      %4131 = vmatpush2.bf16.msra.mxu0 0
      %4132 = vmatprep.subr.bf16.mxu0 0
      %4133 = vmatpush2.bf16.msra.mxu0 0
      %4134 = vmatprep.mubr.bf16.mxu0 0
      %4135 = vmatmul.mubr.bf16.gmra.mxu0 %v4052
      %v4136 = vpop.f32.mrf.mxu0
      %v4137 = vadd.f32 0.0, %v4136
      %v4138 = vpop.f32.mrf.mxu0
      %v4139 = vpop.f32.mrf.mxu0
      %v4140 = vadd.f32 0.0, %v4139
      %v4141 = vpop.f32.mrf.mxu0
      %4142 = vmatprep.mubr.bf16.mxu0 0
      %4143 = vmatmul.mubr.bf16.gmra.mxu0 %v4055
      %v4144 = vpop.f32.mrf.mxu0
      %v4145 = vadd.f32 0.0, %v4144
      %v4146 = vpop.f32.mrf.mxu0
      %v4147 = vpop.f32.mrf.mxu0
      %v4148 = vadd.f32 0.0, %v4147
      %v4149 = vpop.f32.mrf.mxu0
      %4150 = vmatprep.mubr.bf16.mxu0 0
      %4151 = vmatmul.mubr.bf16.gmra.mxu0 %v4058
      %v4152 = vpop.f32.mrf.mxu0
      %v4153 = vadd.f32 0.0, %v4152
      %v4154 = vpop.f32.mrf.mxu0
      %v4155 = vpop.f32.mrf.mxu0
      %v4156 = vadd.f32 0.0, %v4155
      %v4157 = vpop.f32.mrf.mxu0
      %4158 = vmatprep.mubr.bf16.mxu0 0
      %4159 = vmatmul.mubr.bf16.gmra.mxu0 %v4061
      %v4160 = vpop.f32.mrf.mxu0
      %v4161 = vadd.f32 0.0, %v4160
      %v4162 = vpop.f32.mrf.mxu0
      %v4163 = vpop.f32.mrf.mxu0
      %v4164 = vadd.f32 0.0, %v4163
      %v4165 = vpop.f32.mrf.mxu0
      %4166 = vmatprep.mubr.bf16.mxu0 0
      %4167 = vmatmul.mubr.bf16.gmra.mxu0 %v4064
      %v4168 = vpop.f32.mrf.mxu0
      %v4169 = vadd.f32 0.0, %v4168
      %v4170 = vpop.f32.mrf.mxu0
      %v4171 = vpop.f32.mrf.mxu0
      %v4172 = vadd.f32 0.0, %v4171
      %v4173 = vpop.f32.mrf.mxu0
      %4174 = vmatprep.mubr.bf16.mxu0 0
      %4175 = vmatmul.mubr.bf16.gmra.mxu0 %v4067
      %v4176 = vpop.f32.mrf.mxu0
      %v4177 = vadd.f32 0.0, %v4176
      %v4178 = vpop.f32.mrf.mxu0
      %v4179 = vpop.f32.mrf.mxu0
      %v4180 = vadd.f32 0.0, %v4179
      %v4181 = vpop.f32.mrf.mxu0
      %4182 = vmatprep.mubr.bf16.mxu0 0
      %4183 = vmatmul.mubr.bf16.gmra.mxu0 %v4070
      %v4184 = vpop.f32.mrf.mxu0
      %v4185 = vadd.f32 0.0, %v4184
      %v4186 = vpop.f32.mrf.mxu0
      %v4187 = vpop.f32.mrf.mxu0
      %v4188 = vadd.f32 0.0, %v4187
      %v4189 = vpop.f32.mrf.mxu0
      %4190 = vmatprep.mubr.bf16.mxu0 0
      %4191 = vmatmul.mubr.bf16.gmra.mxu0 %v4073
      %v4192 = vpop.f32.mrf.mxu0
      %v4193 = vadd.f32 0.0, %v4192
      %v4194 = vpop.f32.mrf.mxu0
      %v4195 = vpop.f32.mrf.mxu0
      %v4196 = vadd.f32 0.0, %v4195
      %v4197 = vpop.f32.mrf.mxu0
      %4198 = vmatprep.mubr.bf16.mxu0 0
      %4199 = vmatmul.mubr.bf16.gmra.mxu0 %v4076
      %v4200 = vpop.f32.mrf.mxu0
      %v4201 = vadd.f32 0.0, %v4200
      %v4202 = vpop.f32.mrf.mxu0
      %v4203 = vpop.f32.mrf.mxu0
      %v4204 = vadd.f32 0.0, %v4203
      %v4205 = vpop.f32.mrf.mxu0
      %4206 = vmatprep.mubr.bf16.mxu0 0
      %4207 = vmatmul.mubr.bf16.gmra.mxu0 %v4079
      %v4208 = vpop.f32.mrf.mxu0
      %v4209 = vadd.f32 0.0, %v4208
      %v4210 = vpop.f32.mrf.mxu0
      %v4211 = vpop.f32.mrf.mxu0
      %v4212 = vadd.f32 0.0, %v4211
      %v4213 = vpop.f32.mrf.mxu0
      %4214 = vmatprep.mubr.bf16.mxu0 0
      %4215 = vmatmul.mubr.bf16.gmra.mxu0 %v4082
      %v4216 = vpop.f32.mrf.mxu0
      %v4217 = vadd.f32 0.0, %v4216
      %v4218 = vpop.f32.mrf.mxu0
      %v4219 = vpop.f32.mrf.mxu0
      %v4220 = vadd.f32 0.0, %v4219
      %v4221 = vpop.f32.mrf.mxu0
      %4222 = vmatprep.mubr.bf16.mxu0 0
      %4223 = vmatmul.mubr.bf16.gmra.mxu0 %v4085
      %v4224 = vpop.f32.mrf.mxu0
      %v4225 = vadd.f32 0.0, %v4224
      %v4226 = vpop.f32.mrf.mxu0
      %v4227 = vpop.f32.mrf.mxu0
      %v4228 = vadd.f32 0.0, %v4227
      %v4229 = vpop.f32.mrf.mxu0
      %4230 = vmatprep.mubr.bf16.mxu0 0
      %4231 = vmatmul.mubr.bf16.gmra.mxu0 %v4088
      %v4232 = vpop.f32.mrf.mxu0
      %v4233 = vadd.f32 0.0, %v4232
      %v4234 = vpop.f32.mrf.mxu0
      %v4235 = vpop.f32.mrf.mxu0
      %v4236 = vadd.f32 0.0, %v4235
      %v4237 = vpop.f32.mrf.mxu0
      %4238 = vmatprep.mubr.bf16.mxu0 0
      %4239 = vmatmul.mubr.bf16.gmra.mxu0 %v4091
      %v4240 = vpop.f32.mrf.mxu0
      %v4241 = vadd.f32 0.0, %v4240
      %v4242 = vpop.f32.mrf.mxu0
      %v4243 = vpop.f32.mrf.mxu0
      %v4244 = vadd.f32 0.0, %v4243
      %v4245 = vpop.f32.mrf.mxu0
      %4246 = vmatprep.mubr.bf16.mxu0 0
      %4247 = vmatmul.mubr.bf16.gmra.mxu0 %v4094
      %v4248 = vpop.f32.mrf.mxu0
      %v4249 = vadd.f32 0.0, %v4248
      %v4250 = vpop.f32.mrf.mxu0
      %v4251 = vpop.f32.mrf.mxu0
      %v4252 = vadd.f32 0.0, %v4251
      %v4253 = vpop.f32.mrf.mxu0
      %4254 = vmatprep.mubr.bf16.mxu0 0
      %4255 = vmatmul.mubr.bf16.gmra.mxu0 %v4097
      %v4256 = vpop.f32.mrf.mxu0
      %v4257 = vadd.f32 0.0, %v4256
      %v4258 = vpop.f32.mrf.mxu0
      %v4259 = vpop.f32.mrf.mxu0
      %v4260 = vadd.f32 0.0, %v4259
      %v4261 = vpop.f32.mrf.mxu0
      %4262 = vdwg.mxu0
      %v4263 = vadd.f32 %v3875, %v4137
      %v4264 = vadd.f32 %v3878, %v4140
      %v4265 = vadd.f32 %v3883, %v4145
      %v4266 = vadd.f32 %v3886, %v4148
      %v4267 = vadd.f32 %v3891, %v4153
      %v4268 = vadd.f32 %v3894, %v4156
      %v4269 = vadd.f32 %v3899, %v4161
      %v4270 = vadd.f32 %v3902, %v4164
      %v4271 = vadd.f32 %v3907, %v4169
      %v4272 = vadd.f32 %v3910, %v4172
      %v4273 = vadd.f32 %v3915, %v4177
      %v4274 = vadd.f32 %v3918, %v4180
      %v4275 = vadd.f32 %v3923, %v4185
      %v4276 = vadd.f32 %v3926, %v4188
      %v4277 = vadd.f32 %v3931, %v4193
      %v4278 = vadd.f32 %v3934, %v4196
      %v4279 = vadd.f32 %v3939, %v4201
      %v4280 = vadd.f32 %v3942, %v4204
      %v4281 = vadd.f32 %v3947, %v4209
      %v4282 = vadd.f32 %v3950, %v4212
      %v4283 = vadd.f32 %v3955, %v4217
      %v4284 = vadd.f32 %v3958, %v4220
      %v4285 = vadd.f32 %v3963, %v4225
      %v4286 = vadd.f32 %v3966, %v4228
      %v4287 = vadd.f32 %v3971, %v4233
      %v4288 = vadd.f32 %v3974, %v4236
      %v4289 = vadd.f32 %v3979, %v4241
      %v4290 = vadd.f32 %v3982, %v4244
      %v4291 = vadd.f32 %v3987, %v4249
      %v4292 = vadd.f32 %v3990, %v4252
      %v4293 = vadd.f32 %v3995, %v4257
      %v4294 = vadd.f32 %v3998, %v4260
      %v4295 = vadd.f32 %v3535, %v4263
      %v4296 = vadd.f32 %v3536, %v4264
      %v4297 = vadd.f32 %v3537, %v4265
      %v4298 = vadd.f32 %v3538, %v4266
      %v4299 = vadd.f32 %v3539, %v4267
      %v4300 = vadd.f32 %v3540, %v4268
      %v4301 = vadd.f32 %v3541, %v4269
      %v4302 = vadd.f32 %v3542, %v4270
      %v4303 = vadd.f32 %v3543, %v4271
      %v4304 = vadd.f32 %v3544, %v4272
      %v4305 = vadd.f32 %v3545, %v4273
      %v4306 = vadd.f32 %v3546, %v4274
      %v4307 = vadd.f32 %v3547, %v4275
      %v4308 = vadd.f32 %v3548, %v4276
      %v4309 = vadd.f32 %v3549, %v4277
      %v4310 = vadd.f32 %v3550, %v4278
      %v4311 = vadd.f32 %v3551, %v4279
      %v4312 = vadd.f32 %v3552, %v4280
      %v4313 = vadd.f32 %v3553, %v4281
      %v4314 = vadd.f32 %v3554, %v4282
      %v4315 = vadd.f32 %v3555, %v4283
      %v4316 = vadd.f32 %v3556, %v4284
      %v4317 = vadd.f32 %v3557, %v4285
      %v4318 = vadd.f32 %v3558, %v4286
      %v4319 = vadd.f32 %v3559, %v4287
      %v4320 = vadd.f32 %v3560, %v4288
      %v4321 = vadd.f32 %v3561, %v4289
      %v4322 = vadd.f32 %v3562, %v4290
      %v4323 = vadd.f32 %v3563, %v4291
      %v4324 = vadd.f32 %v3564, %v4292
      %v4325 = vadd.f32 %v3565, %v4293
      %v4326 = vadd.f32 %v3566, %v4294
      %v4327 = vld [vmem:[#allocation2 + $0x9] sm:$0xff]
      %v4328 = vld [vmem:[#allocation2 + $0x11] sm:$0xff]
      %v4329 = vld [vmem:[#allocation2 + $0x19] sm:$0xff]
      %v4330 = vld [vmem:[#allocation2 + $0x21] sm:$0xff]
      %v4331 = vld [vmem:[#allocation2 + $0x29] sm:$0xff]
      %v4332 = vld [vmem:[#allocation2 + $0x31] sm:$0xff]
      %v4333 = vld [vmem:[#allocation2 + $0x39] sm:$0xff]
      %v4334 = vld [vmem:[#allocation2 + $0x41] sm:$0xff]
      %v4335 = vld [vmem:[#allocation2 + $0x49] sm:$0xff]
      %v4336 = vld [vmem:[#allocation2 + $0x51] sm:$0xff]
      %v4337 = vld [vmem:[#allocation2 + $0x59] sm:$0xff]
      %v4338 = vld [vmem:[#allocation2 + $0x61] sm:$0xff]
      %v4339 = vld [vmem:[#allocation2 + $0x69] sm:$0xff]
      %v4340 = vld [vmem:[#allocation2 + $0x71] sm:$0xff]
      %v4341 = vld [vmem:[#allocation2 + $0x79] sm:$0xff]
      %v4342 = vld [vmem:[#allocation2 + $0x81] sm:$0xff]
      %v4343 = vld [vmem:[#allocation2 + $0x89] sm:$0xff]
      %v4344 = vld [vmem:[#allocation2 + $0x91] sm:$0xff]
      %v4345 = vld [vmem:[#allocation2 + $0x99] sm:$0xff]
      %v4346 = vld [vmem:[#allocation2 + $0xa1] sm:$0xff]
      %v4347 = vld [vmem:[#allocation2 + $0xa9] sm:$0xff]
      %v4348 = vld [vmem:[#allocation2 + $0xb1] sm:$0xff]
      %v4349 = vld [vmem:[#allocation2 + $0xb9] sm:$0xff]
      %v4350 = vld [vmem:[#allocation2 + $0xc1] sm:$0xff]
      %v4351 = vld [vmem:[#allocation2 + $0xc9] sm:$0xff]
      %v4352 = vld [vmem:[#allocation2 + $0xd1] sm:$0xff]
      %v4353 = vld [vmem:[#allocation2 + $0xd9] sm:$0xff]
      %v4354 = vld [vmem:[#allocation2 + $0xe1] sm:$0xff]
      %v4355 = vld [vmem:[#allocation2 + $0xe9] sm:$0xff]
      %v4356 = vld [vmem:[#allocation2 + $0xf1] sm:$0xff]
      %v4357 = vld [vmem:[#allocation2 + $0xf9] sm:$0xff]
      %v4358 = vld [vmem:[#allocation2 + $0x101] sm:$0xff]
      %v4359 = vpack.c.bf16 %v4328, %v4327
      %v4360 = vpack.c.bf16 %v4330, %v4329
      %v4361 = vpack.c.bf16 %v4332, %v4331
      %v4362 = vpack.c.bf16 %v4334, %v4333
      %v4363 = vpack.c.bf16 %v4336, %v4335
      %v4364 = vpack.c.bf16 %v4338, %v4337
      %v4365 = vpack.c.bf16 %v4340, %v4339
      %v4366 = vpack.c.bf16 %v4342, %v4341
      %v4367 = vpack.c.bf16 %v4344, %v4343
      %v4368 = vpack.c.bf16 %v4346, %v4345
      %v4369 = vpack.c.bf16 %v4348, %v4347
      %v4370 = vpack.c.bf16 %v4350, %v4349
      %v4371 = vpack.c.bf16 %v4352, %v4351
      %v4372 = vpack.c.bf16 %v4354, %v4353
      %v4373 = vpack.c.bf16 %v4356, %v4355
      %v4374 = vpack.c.bf16 %v4358, %v4357
      %s4375 = scalar_lea.vmem %s10, 4
      %v4376 = vld [vmem:[%s4375] sm:$0x3]
      %v4377 = vld [vmem:[#allocation2 + $0x109] sm:$0xff]
      %v4378 = vld [vmem:[#allocation2 + $0x111] sm:$0xff]
      %v4379 = vpack.c.bf16 %v4378, %v4377
      %s4380 = scalar_lea.vmem %s10, 10
      %v4381 = vld [vmem:[%s4380] sm:$0x3]
      %v4383 = vsel %vm599, %v4360, 0
      %v4386 = vsel %vm599, %v4361, 0
      %v4389 = vsel %vm599, %v4362, 0
      %v4392 = vsel %vm599, %v4363, 0
      %v4395 = vsel %vm599, %v4364, 0
      %v4398 = vsel %vm599, %v4365, 0
      %v4401 = vsel %vm599, %v4366, 0
      %v4404 = vsel %vm599, %v4367, 0
      %v4407 = vsel %vm599, %v4368, 0
      %v4410 = vsel %vm599, %v4369, 0
      %v4413 = vsel %vm599, %v4370, 0
      %v4416 = vsel %vm599, %v4371, 0
      %v4419 = vsel %vm599, %v4372, 0
      %v4422 = vsel %vm599, %v4373, 0
      %v4425 = vsel %vm599, %v4374, 0
      %v4428 = vsel %vm599, %v4379, 0
      %v4431 = vsel %vm648, %v4381, 0
      %4433 = vmatprep.subr.bf16.mxu0 0
      %4434 = vmatpush1.bf16.msra.mxu0 0
      %4435 = vmatprep.subr.bf16.mxu0 0
      %4436 = vmatpush1.bf16.msra.mxu0 0
      %4437 = vmatprep.subr.bf16.mxu0 0
      %4438 = vmatpush1.bf16.msra.mxu0 0
      %4439 = vmatprep.subr.bf16.mxu0 0
      %4440 = vmatpush1.bf16.msra.mxu0 0
      %4441 = vmatprep.subr.bf16.mxu0 0
      %4442 = vmatpush1.bf16.msra.mxu0 0
      %4443 = vmatprep.subr.bf16.mxu0 0
      %4444 = vmatpush1.bf16.msra.mxu0 0
      %4445 = vmatprep.subr.bf16.mxu0 0
      %4446 = vmatpush1.bf16.msra.mxu0 0
      %4447 = vmatprep.subr.bf16.mxu0 0
      %4448 = vmatpush1.bf16.msra.mxu0 %v4431
      %4449 = vmatprep.subr.bf16.mxu0 0
      %4450 = vmatpush2.bf16.msra.mxu0 0
      %4451 = vmatprep.subr.bf16.mxu0 0
      %4452 = vmatpush2.bf16.msra.mxu0 0
      %4453 = vmatprep.subr.bf16.mxu0 0
      %4454 = vmatpush2.bf16.msra.mxu0 0
      %4455 = vmatprep.subr.bf16.mxu0 0
      %4456 = vmatpush2.bf16.msra.mxu0 0
      %4457 = vmatprep.subr.bf16.mxu0 0
      %4458 = vmatpush2.bf16.msra.mxu0 0
      %4459 = vmatprep.subr.bf16.mxu0 0
      %4460 = vmatpush2.bf16.msra.mxu0 0
      %4461 = vmatprep.subr.bf16.mxu0 0
      %4462 = vmatpush2.bf16.msra.mxu0 0
      %4463 = vmatprep.subr.bf16.mxu0 0
      %4464 = vmatpush2.bf16.msra.mxu0 0
      %4465 = vmatprep.mubr.bf16.mxu0 0
      %4466 = vmatmul.mubr.bf16.gmra.mxu0 %v4383
      %v4467 = vpop.f32.mrf.mxu0
      %v4468 = vadd.f32 0.0, %v4467
      %v4469 = vpop.f32.mrf.mxu0
      %v4470 = vpop.f32.mrf.mxu0
      %v4471 = vadd.f32 0.0, %v4470
      %v4472 = vpop.f32.mrf.mxu0
      %4473 = vmatprep.mubr.bf16.mxu0 0
      %4474 = vmatmul.mubr.bf16.gmra.mxu0 %v4386
      %v4475 = vpop.f32.mrf.mxu0
      %v4476 = vadd.f32 0.0, %v4475
      %v4477 = vpop.f32.mrf.mxu0
      %v4478 = vpop.f32.mrf.mxu0
      %v4479 = vadd.f32 0.0, %v4478
      %v4480 = vpop.f32.mrf.mxu0
      %4481 = vmatprep.mubr.bf16.mxu0 0
      %4482 = vmatmul.mubr.bf16.gmra.mxu0 %v4389
      %v4483 = vpop.f32.mrf.mxu0
      %v4484 = vadd.f32 0.0, %v4483
      %v4485 = vpop.f32.mrf.mxu0
      %v4486 = vpop.f32.mrf.mxu0
      %v4487 = vadd.f32 0.0, %v4486
      %v4488 = vpop.f32.mrf.mxu0
      %4489 = vmatprep.mubr.bf16.mxu0 0
      %4490 = vmatmul.mubr.bf16.gmra.mxu0 %v4392
      %v4491 = vpop.f32.mrf.mxu0
      %v4492 = vadd.f32 0.0, %v4491
      %v4493 = vpop.f32.mrf.mxu0
      %v4494 = vpop.f32.mrf.mxu0
      %v4495 = vadd.f32 0.0, %v4494
      %v4496 = vpop.f32.mrf.mxu0
      %4497 = vmatprep.mubr.bf16.mxu0 0
      %4498 = vmatmul.mubr.bf16.gmra.mxu0 %v4395
      %v4499 = vpop.f32.mrf.mxu0
      %v4500 = vadd.f32 0.0, %v4499
      %v4501 = vpop.f32.mrf.mxu0
      %v4502 = vpop.f32.mrf.mxu0
      %v4503 = vadd.f32 0.0, %v4502
      %v4504 = vpop.f32.mrf.mxu0
      %4505 = vmatprep.mubr.bf16.mxu0 0
      %4506 = vmatmul.mubr.bf16.gmra.mxu0 %v4398
      %v4507 = vpop.f32.mrf.mxu0
      %v4508 = vadd.f32 0.0, %v4507
      %v4509 = vpop.f32.mrf.mxu0
      %v4510 = vpop.f32.mrf.mxu0
      %v4511 = vadd.f32 0.0, %v4510
      %v4512 = vpop.f32.mrf.mxu0
      %4513 = vmatprep.mubr.bf16.mxu0 0
      %4514 = vmatmul.mubr.bf16.gmra.mxu0 %v4401
      %v4515 = vpop.f32.mrf.mxu0
      %v4516 = vadd.f32 0.0, %v4515
      %v4517 = vpop.f32.mrf.mxu0
      %v4518 = vpop.f32.mrf.mxu0
      %v4519 = vadd.f32 0.0, %v4518
      %v4520 = vpop.f32.mrf.mxu0
      %4521 = vmatprep.mubr.bf16.mxu0 0
      %4522 = vmatmul.mubr.bf16.gmra.mxu0 %v4404
      %v4523 = vpop.f32.mrf.mxu0
      %v4524 = vadd.f32 0.0, %v4523
      %v4525 = vpop.f32.mrf.mxu0
      %v4526 = vpop.f32.mrf.mxu0
      %v4527 = vadd.f32 0.0, %v4526
      %v4528 = vpop.f32.mrf.mxu0
      %4529 = vmatprep.mubr.bf16.mxu0 0
      %4530 = vmatmul.mubr.bf16.gmra.mxu0 %v4407
      %v4531 = vpop.f32.mrf.mxu0
      %v4532 = vadd.f32 0.0, %v4531
      %v4533 = vpop.f32.mrf.mxu0
      %v4534 = vpop.f32.mrf.mxu0
      %v4535 = vadd.f32 0.0, %v4534
      %v4536 = vpop.f32.mrf.mxu0
      %4537 = vmatprep.mubr.bf16.mxu0 0
      %4538 = vmatmul.mubr.bf16.gmra.mxu0 %v4410
      %v4539 = vpop.f32.mrf.mxu0
      %v4540 = vadd.f32 0.0, %v4539
      %v4541 = vpop.f32.mrf.mxu0
      %v4542 = vpop.f32.mrf.mxu0
      %v4543 = vadd.f32 0.0, %v4542
      %v4544 = vpop.f32.mrf.mxu0
      %4545 = vmatprep.mubr.bf16.mxu0 0
      %4546 = vmatmul.mubr.bf16.gmra.mxu0 %v4413
      %v4547 = vpop.f32.mrf.mxu0
      %v4548 = vadd.f32 0.0, %v4547
      %v4549 = vpop.f32.mrf.mxu0
      %v4550 = vpop.f32.mrf.mxu0
      %v4551 = vadd.f32 0.0, %v4550
      %v4552 = vpop.f32.mrf.mxu0
      %4553 = vmatprep.mubr.bf16.mxu0 0
      %4554 = vmatmul.mubr.bf16.gmra.mxu0 %v4416
      %v4555 = vpop.f32.mrf.mxu0
      %v4556 = vadd.f32 0.0, %v4555
      %v4557 = vpop.f32.mrf.mxu0
      %v4558 = vpop.f32.mrf.mxu0
      %v4559 = vadd.f32 0.0, %v4558
      %v4560 = vpop.f32.mrf.mxu0
      %4561 = vmatprep.mubr.bf16.mxu0 0
      %4562 = vmatmul.mubr.bf16.gmra.mxu0 %v4419
      %v4563 = vpop.f32.mrf.mxu0
      %v4564 = vadd.f32 0.0, %v4563
      %v4565 = vpop.f32.mrf.mxu0
      %v4566 = vpop.f32.mrf.mxu0
      %v4567 = vadd.f32 0.0, %v4566
      %v4568 = vpop.f32.mrf.mxu0
      %4569 = vmatprep.mubr.bf16.mxu0 0
      %4570 = vmatmul.mubr.bf16.gmra.mxu0 %v4422
      %v4571 = vpop.f32.mrf.mxu0
      %v4572 = vadd.f32 0.0, %v4571
      %v4573 = vpop.f32.mrf.mxu0
      %v4574 = vpop.f32.mrf.mxu0
      %v4575 = vadd.f32 0.0, %v4574
      %v4576 = vpop.f32.mrf.mxu0
      %4577 = vmatprep.mubr.bf16.mxu0 0
      %4578 = vmatmul.mubr.bf16.gmra.mxu0 %v4425
      %v4579 = vpop.f32.mrf.mxu0
      %v4580 = vadd.f32 0.0, %v4579
      %v4581 = vpop.f32.mrf.mxu0
      %v4582 = vpop.f32.mrf.mxu0
      %v4583 = vadd.f32 0.0, %v4582
      %v4584 = vpop.f32.mrf.mxu0
      %4585 = vmatprep.mubr.bf16.mxu0 0
      %4586 = vmatmul.mubr.bf16.gmra.mxu0 %v4428
      %v4587 = vpop.f32.mrf.mxu0
      %v4588 = vadd.f32 0.0, %v4587
      %v4589 = vpop.f32.mrf.mxu0
      %v4590 = vpop.f32.mrf.mxu0
      %v4591 = vadd.f32 0.0, %v4590
      %v4592 = vpop.f32.mrf.mxu0
      %4593 = vdwg.mxu0
      %v4595 = vsel %vm599, %v4359, 0
      %v4598 = vsel %vm648, %v4376, 0
      %4600 = vmatprep.subr.bf16.mxu0 0
      %4601 = vmatpush1.bf16.msra.mxu0 0
      %4602 = vmatprep.subr.bf16.mxu0 0
      %4603 = vmatpush1.bf16.msra.mxu0 0
      %4604 = vmatprep.subr.bf16.mxu0 0
      %4605 = vmatpush1.bf16.msra.mxu0 0
      %4606 = vmatprep.subr.bf16.mxu0 0
      %4607 = vmatpush1.bf16.msra.mxu0 0
      %4608 = vmatprep.subr.bf16.mxu0 0
      %4609 = vmatpush1.bf16.msra.mxu0 0
      %4610 = vmatprep.subr.bf16.mxu0 0
      %4611 = vmatpush1.bf16.msra.mxu0 0
      %4612 = vmatprep.subr.bf16.mxu0 0
      %4613 = vmatpush1.bf16.msra.mxu0 0
      %4614 = vmatprep.subr.bf16.mxu0 0
      %4615 = vmatpush1.bf16.msra.mxu0 %v4598
      %4616 = vmatprep.subr.bf16.mxu0 0
      %4617 = vmatpush2.bf16.msra.mxu0 0
      %4618 = vmatprep.subr.bf16.mxu0 0
      %4619 = vmatpush2.bf16.msra.mxu0 0
      %4620 = vmatprep.subr.bf16.mxu0 0
      %4621 = vmatpush2.bf16.msra.mxu0 0
      %4622 = vmatprep.subr.bf16.mxu0 0
      %4623 = vmatpush2.bf16.msra.mxu0 0
      %4624 = vmatprep.subr.bf16.mxu0 0
      %4625 = vmatpush2.bf16.msra.mxu0 0
      %4626 = vmatprep.subr.bf16.mxu0 0
      %4627 = vmatpush2.bf16.msra.mxu0 0
      %4628 = vmatprep.subr.bf16.mxu0 0
      %4629 = vmatpush2.bf16.msra.mxu0 0
      %4630 = vmatprep.subr.bf16.mxu0 0
      %4631 = vmatpush2.bf16.msra.mxu0 0
      %4632 = vmatprep.mubr.bf16.mxu0 0
      %4633 = vmatmul.mubr.bf16.gmra.mxu0 %v4595
      %v4634 = vpop.f32.mrf.mxu0
      %v4635 = vadd.f32 %v4468, %v4634
      %v4636 = vpop.f32.mrf.mxu0
      %v4637 = vpop.f32.mrf.mxu0
      %v4638 = vadd.f32 %v4471, %v4637
      %v4639 = vpop.f32.mrf.mxu0
      %4640 = vmatprep.mubr.bf16.mxu0 0
      %4641 = vmatmul.mubr.bf16.gmra.mxu0 %v4383
      %v4642 = vpop.f32.mrf.mxu0
      %v4643 = vadd.f32 %v4476, %v4642
      %v4644 = vpop.f32.mrf.mxu0
      %v4645 = vpop.f32.mrf.mxu0
      %v4646 = vadd.f32 %v4479, %v4645
      %v4647 = vpop.f32.mrf.mxu0
      %4648 = vmatprep.mubr.bf16.mxu0 0
      %4649 = vmatmul.mubr.bf16.gmra.mxu0 %v4386
      %v4650 = vpop.f32.mrf.mxu0
      %v4651 = vadd.f32 %v4484, %v4650
      %v4652 = vpop.f32.mrf.mxu0
      %v4653 = vpop.f32.mrf.mxu0
      %v4654 = vadd.f32 %v4487, %v4653
      %v4655 = vpop.f32.mrf.mxu0
      %4656 = vmatprep.mubr.bf16.mxu0 0
      %4657 = vmatmul.mubr.bf16.gmra.mxu0 %v4389
      %v4658 = vpop.f32.mrf.mxu0
      %v4659 = vadd.f32 %v4492, %v4658
      %v4660 = vpop.f32.mrf.mxu0
      %v4661 = vpop.f32.mrf.mxu0
      %v4662 = vadd.f32 %v4495, %v4661
      %v4663 = vpop.f32.mrf.mxu0
      %4664 = vmatprep.mubr.bf16.mxu0 0
      %4665 = vmatmul.mubr.bf16.gmra.mxu0 %v4392
      %v4666 = vpop.f32.mrf.mxu0
      %v4667 = vadd.f32 %v4500, %v4666
      %v4668 = vpop.f32.mrf.mxu0
      %v4669 = vpop.f32.mrf.mxu0
      %v4670 = vadd.f32 %v4503, %v4669
      %v4671 = vpop.f32.mrf.mxu0
      %4672 = vmatprep.mubr.bf16.mxu0 0
      %4673 = vmatmul.mubr.bf16.gmra.mxu0 %v4395
      %v4674 = vpop.f32.mrf.mxu0
      %v4675 = vadd.f32 %v4508, %v4674
      %v4676 = vpop.f32.mrf.mxu0
      %v4677 = vpop.f32.mrf.mxu0
      %v4678 = vadd.f32 %v4511, %v4677
      %v4679 = vpop.f32.mrf.mxu0
      %4680 = vmatprep.mubr.bf16.mxu0 0
      %4681 = vmatmul.mubr.bf16.gmra.mxu0 %v4398
      %v4682 = vpop.f32.mrf.mxu0
      %v4683 = vadd.f32 %v4516, %v4682
      %v4684 = vpop.f32.mrf.mxu0
      %v4685 = vpop.f32.mrf.mxu0
      %v4686 = vadd.f32 %v4519, %v4685
      %v4687 = vpop.f32.mrf.mxu0
      %4688 = vmatprep.mubr.bf16.mxu0 0
      %4689 = vmatmul.mubr.bf16.gmra.mxu0 %v4401
      %v4690 = vpop.f32.mrf.mxu0
      %v4691 = vadd.f32 %v4524, %v4690
      %v4692 = vpop.f32.mrf.mxu0
      %v4693 = vpop.f32.mrf.mxu0
      %v4694 = vadd.f32 %v4527, %v4693
      %v4695 = vpop.f32.mrf.mxu0
      %4696 = vmatprep.mubr.bf16.mxu0 0
      %4697 = vmatmul.mubr.bf16.gmra.mxu0 %v4404
      %v4698 = vpop.f32.mrf.mxu0
      %v4699 = vadd.f32 %v4532, %v4698
      %v4700 = vpop.f32.mrf.mxu0
      %v4701 = vpop.f32.mrf.mxu0
      %v4702 = vadd.f32 %v4535, %v4701
      %v4703 = vpop.f32.mrf.mxu0
      %4704 = vmatprep.mubr.bf16.mxu0 0
      %4705 = vmatmul.mubr.bf16.gmra.mxu0 %v4407
      %v4706 = vpop.f32.mrf.mxu0
      %v4707 = vadd.f32 %v4540, %v4706
      %v4708 = vpop.f32.mrf.mxu0
      %v4709 = vpop.f32.mrf.mxu0
      %v4710 = vadd.f32 %v4543, %v4709
      %v4711 = vpop.f32.mrf.mxu0
      %4712 = vmatprep.mubr.bf16.mxu0 0
      %4713 = vmatmul.mubr.bf16.gmra.mxu0 %v4410
      %v4714 = vpop.f32.mrf.mxu0
      %v4715 = vadd.f32 %v4548, %v4714
      %v4716 = vpop.f32.mrf.mxu0
      %v4717 = vpop.f32.mrf.mxu0
      %v4718 = vadd.f32 %v4551, %v4717
      %v4719 = vpop.f32.mrf.mxu0
      %4720 = vmatprep.mubr.bf16.mxu0 0
      %4721 = vmatmul.mubr.bf16.gmra.mxu0 %v4413
      %v4722 = vpop.f32.mrf.mxu0
      %v4723 = vadd.f32 %v4556, %v4722
      %v4724 = vpop.f32.mrf.mxu0
      %v4725 = vpop.f32.mrf.mxu0
      %v4726 = vadd.f32 %v4559, %v4725
      %v4727 = vpop.f32.mrf.mxu0
      %4728 = vmatprep.mubr.bf16.mxu0 0
      %4729 = vmatmul.mubr.bf16.gmra.mxu0 %v4416
      %v4730 = vpop.f32.mrf.mxu0
      %v4731 = vadd.f32 %v4564, %v4730
      %v4732 = vpop.f32.mrf.mxu0
      %v4733 = vpop.f32.mrf.mxu0
      %v4734 = vadd.f32 %v4567, %v4733
      %v4735 = vpop.f32.mrf.mxu0
      %4736 = vmatprep.mubr.bf16.mxu0 0
      %4737 = vmatmul.mubr.bf16.gmra.mxu0 %v4419
      %v4738 = vpop.f32.mrf.mxu0
      %v4739 = vadd.f32 %v4572, %v4738
      %v4740 = vpop.f32.mrf.mxu0
      %v4741 = vpop.f32.mrf.mxu0
      %v4742 = vadd.f32 %v4575, %v4741
      %v4743 = vpop.f32.mrf.mxu0
      %4744 = vmatprep.mubr.bf16.mxu0 0
      %4745 = vmatmul.mubr.bf16.gmra.mxu0 %v4422
      %v4746 = vpop.f32.mrf.mxu0
      %v4747 = vadd.f32 %v4580, %v4746
      %v4748 = vpop.f32.mrf.mxu0
      %v4749 = vpop.f32.mrf.mxu0
      %v4750 = vadd.f32 %v4583, %v4749
      %v4751 = vpop.f32.mrf.mxu0
      %4752 = vmatprep.mubr.bf16.mxu0 0
      %4753 = vmatmul.mubr.bf16.gmra.mxu0 %v4425
      %v4754 = vpop.f32.mrf.mxu0
      %v4755 = vadd.f32 %v4588, %v4754
      %v4756 = vpop.f32.mrf.mxu0
      %v4757 = vpop.f32.mrf.mxu0
      %v4758 = vadd.f32 %v4591, %v4757
      %v4759 = vpop.f32.mrf.mxu0
      %4760 = vdwg.mxu0
      %v4761 = vld [vmem:[#allocation2 + $0x29] sm:$0xff]
      %v4762 = vld [vmem:[#allocation2 + $0x31] sm:$0xff]
      %v4763 = vld [vmem:[#allocation2 + $0x39] sm:$0xff]
      %v4764 = vld [vmem:[#allocation2 + $0x41] sm:$0xff]
      %v4765 = vld [vmem:[#allocation2 + $0x49] sm:$0xff]
      %v4766 = vld [vmem:[#allocation2 + $0x51] sm:$0xff]
      %v4767 = vld [vmem:[#allocation2 + $0x59] sm:$0xff]
      %v4768 = vld [vmem:[#allocation2 + $0x61] sm:$0xff]
      %v4769 = vld [vmem:[#allocation2 + $0x69] sm:$0xff]
      %v4770 = vld [vmem:[#allocation2 + $0x71] sm:$0xff]
      %v4771 = vld [vmem:[#allocation2 + $0x79] sm:$0xff]
      %v4772 = vld [vmem:[#allocation2 + $0x81] sm:$0xff]
      %v4773 = vld [vmem:[#allocation2 + $0x89] sm:$0xff]
      %v4774 = vld [vmem:[#allocation2 + $0x91] sm:$0xff]
      %v4775 = vld [vmem:[#allocation2 + $0x99] sm:$0xff]
      %v4776 = vld [vmem:[#allocation2 + $0xa1] sm:$0xff]
      %v4777 = vld [vmem:[#allocation2 + $0xa9] sm:$0xff]
      %v4778 = vld [vmem:[#allocation2 + $0xb1] sm:$0xff]
      %v4779 = vld [vmem:[#allocation2 + $0xb9] sm:$0xff]
      %v4780 = vld [vmem:[#allocation2 + $0xc1] sm:$0xff]
      %v4781 = vld [vmem:[#allocation2 + $0xc9] sm:$0xff]
      %v4782 = vld [vmem:[#allocation2 + $0xd1] sm:$0xff]
      %v4783 = vld [vmem:[#allocation2 + $0xd9] sm:$0xff]
      %v4784 = vld [vmem:[#allocation2 + $0xe1] sm:$0xff]
      %v4785 = vld [vmem:[#allocation2 + $0xe9] sm:$0xff]
      %v4786 = vld [vmem:[#allocation2 + $0xf1] sm:$0xff]
      %v4787 = vld [vmem:[#allocation2 + $0xf9] sm:$0xff]
      %v4788 = vld [vmem:[#allocation2 + $0x101] sm:$0xff]
      %v4789 = vld [vmem:[#allocation2 + $0x109] sm:$0xff]
      %v4790 = vld [vmem:[#allocation2 + $0x111] sm:$0xff]
      %v4791 = vld [vmem:[#allocation2 + $0x119] sm:$0xff]
      %v4792 = vld [vmem:[#allocation2 + $0x121] sm:$0xff]
      %v4793 = vpack.c.bf16 %v4762, %v4761
      %v4794 = vpack.c.bf16 %v4764, %v4763
      %v4795 = vpack.c.bf16 %v4766, %v4765
      %v4796 = vpack.c.bf16 %v4768, %v4767
      %v4797 = vpack.c.bf16 %v4770, %v4769
      %v4798 = vpack.c.bf16 %v4772, %v4771
      %v4799 = vpack.c.bf16 %v4774, %v4773
      %v4800 = vpack.c.bf16 %v4776, %v4775
      %v4801 = vpack.c.bf16 %v4778, %v4777
      %v4802 = vpack.c.bf16 %v4780, %v4779
      %v4803 = vpack.c.bf16 %v4782, %v4781
      %v4804 = vpack.c.bf16 %v4784, %v4783
      %v4805 = vpack.c.bf16 %v4786, %v4785
      %v4806 = vpack.c.bf16 %v4788, %v4787
      %v4807 = vpack.c.bf16 %v4790, %v4789
      %v4808 = vpack.c.bf16 %v4792, %v4791
      %s4809 = scalar_lea.vmem %s10, 16
      %v4810 = vld [vmem:[%s4809] sm:$0x3]
      %v4812 = vsel %vm599, %v4793, 0
      %v4815 = vsel %vm599, %v4794, 0
      %v4818 = vsel %vm599, %v4795, 0
      %v4821 = vsel %vm599, %v4796, 0
      %v4824 = vsel %vm599, %v4797, 0
      %v4827 = vsel %vm599, %v4798, 0
      %v4830 = vsel %vm599, %v4799, 0
      %v4833 = vsel %vm599, %v4800, 0
      %v4836 = vsel %vm599, %v4801, 0
      %v4839 = vsel %vm599, %v4802, 0
      %v4842 = vsel %vm599, %v4803, 0
      %v4845 = vsel %vm599, %v4804, 0
      %v4848 = vsel %vm599, %v4805, 0
      %v4851 = vsel %vm599, %v4806, 0
      %v4854 = vsel %vm599, %v4807, 0
      %v4857 = vsel %vm599, %v4808, 0
      %v4860 = vsel %vm648, %v4810, 0
      %4862 = vmatprep.subr.bf16.mxu0 0
      %4863 = vmatpush1.bf16.msra.mxu0 0
      %4864 = vmatprep.subr.bf16.mxu0 0
      %4865 = vmatpush1.bf16.msra.mxu0 0
      %4866 = vmatprep.subr.bf16.mxu0 0
      %4867 = vmatpush1.bf16.msra.mxu0 0
      %4868 = vmatprep.subr.bf16.mxu0 0
      %4869 = vmatpush1.bf16.msra.mxu0 0
      %4870 = vmatprep.subr.bf16.mxu0 0
      %4871 = vmatpush1.bf16.msra.mxu0 0
      %4872 = vmatprep.subr.bf16.mxu0 0
      %4873 = vmatpush1.bf16.msra.mxu0 0
      %4874 = vmatprep.subr.bf16.mxu0 0
      %4875 = vmatpush1.bf16.msra.mxu0 0
      %4876 = vmatprep.subr.bf16.mxu0 0
      %4877 = vmatpush1.bf16.msra.mxu0 %v4860
      %4878 = vmatprep.subr.bf16.mxu0 0
      %4879 = vmatpush2.bf16.msra.mxu0 0
      %4880 = vmatprep.subr.bf16.mxu0 0
      %4881 = vmatpush2.bf16.msra.mxu0 0
      %4882 = vmatprep.subr.bf16.mxu0 0
      %4883 = vmatpush2.bf16.msra.mxu0 0
      %4884 = vmatprep.subr.bf16.mxu0 0
      %4885 = vmatpush2.bf16.msra.mxu0 0
      %4886 = vmatprep.subr.bf16.mxu0 0
      %4887 = vmatpush2.bf16.msra.mxu0 0
      %4888 = vmatprep.subr.bf16.mxu0 0
      %4889 = vmatpush2.bf16.msra.mxu0 0
      %4890 = vmatprep.subr.bf16.mxu0 0
      %4891 = vmatpush2.bf16.msra.mxu0 0
      %4892 = vmatprep.subr.bf16.mxu0 0
      %4893 = vmatpush2.bf16.msra.mxu0 0
      %4894 = vmatprep.mubr.bf16.mxu0 0
      %4895 = vmatmul.mubr.bf16.gmra.mxu0 %v4812
      %v4896 = vpop.f32.mrf.mxu0
      %v4897 = vadd.f32 0.0, %v4896
      %v4898 = vpop.f32.mrf.mxu0
      %v4899 = vpop.f32.mrf.mxu0
      %v4900 = vadd.f32 0.0, %v4899
      %v4901 = vpop.f32.mrf.mxu0
      %4902 = vmatprep.mubr.bf16.mxu0 0
      %4903 = vmatmul.mubr.bf16.gmra.mxu0 %v4815
      %v4904 = vpop.f32.mrf.mxu0
      %v4905 = vadd.f32 0.0, %v4904
      %v4906 = vpop.f32.mrf.mxu0
      %v4907 = vpop.f32.mrf.mxu0
      %v4908 = vadd.f32 0.0, %v4907
      %v4909 = vpop.f32.mrf.mxu0
      %4910 = vmatprep.mubr.bf16.mxu0 0
      %4911 = vmatmul.mubr.bf16.gmra.mxu0 %v4818
      %v4912 = vpop.f32.mrf.mxu0
      %v4913 = vadd.f32 0.0, %v4912
      %v4914 = vpop.f32.mrf.mxu0
      %v4915 = vpop.f32.mrf.mxu0
      %v4916 = vadd.f32 0.0, %v4915
      %v4917 = vpop.f32.mrf.mxu0
      %4918 = vmatprep.mubr.bf16.mxu0 0
      %4919 = vmatmul.mubr.bf16.gmra.mxu0 %v4821
      %v4920 = vpop.f32.mrf.mxu0
      %v4921 = vadd.f32 0.0, %v4920
      %v4922 = vpop.f32.mrf.mxu0
      %v4923 = vpop.f32.mrf.mxu0
      %v4924 = vadd.f32 0.0, %v4923
      %v4925 = vpop.f32.mrf.mxu0
      %4926 = vmatprep.mubr.bf16.mxu0 0
      %4927 = vmatmul.mubr.bf16.gmra.mxu0 %v4824
      %v4928 = vpop.f32.mrf.mxu0
      %v4929 = vadd.f32 0.0, %v4928
      %v4930 = vpop.f32.mrf.mxu0
      %v4931 = vpop.f32.mrf.mxu0
      %v4932 = vadd.f32 0.0, %v4931
      %v4933 = vpop.f32.mrf.mxu0
      %4934 = vmatprep.mubr.bf16.mxu0 0
      %4935 = vmatmul.mubr.bf16.gmra.mxu0 %v4827
      %v4936 = vpop.f32.mrf.mxu0
      %v4937 = vadd.f32 0.0, %v4936
      %v4938 = vpop.f32.mrf.mxu0
      %v4939 = vpop.f32.mrf.mxu0
      %v4940 = vadd.f32 0.0, %v4939
      %v4941 = vpop.f32.mrf.mxu0
      %4942 = vmatprep.mubr.bf16.mxu0 0
      %4943 = vmatmul.mubr.bf16.gmra.mxu0 %v4830
      %v4944 = vpop.f32.mrf.mxu0
      %v4945 = vadd.f32 0.0, %v4944
      %v4946 = vpop.f32.mrf.mxu0
      %v4947 = vpop.f32.mrf.mxu0
      %v4948 = vadd.f32 0.0, %v4947
      %v4949 = vpop.f32.mrf.mxu0
      %4950 = vmatprep.mubr.bf16.mxu0 0
      %4951 = vmatmul.mubr.bf16.gmra.mxu0 %v4833
      %v4952 = vpop.f32.mrf.mxu0
      %v4953 = vadd.f32 0.0, %v4952
      %v4954 = vpop.f32.mrf.mxu0
      %v4955 = vpop.f32.mrf.mxu0
      %v4956 = vadd.f32 0.0, %v4955
      %v4957 = vpop.f32.mrf.mxu0
      %4958 = vmatprep.mubr.bf16.mxu0 0
      %4959 = vmatmul.mubr.bf16.gmra.mxu0 %v4836
      %v4960 = vpop.f32.mrf.mxu0
      %v4961 = vadd.f32 0.0, %v4960
      %v4962 = vpop.f32.mrf.mxu0
      %v4963 = vpop.f32.mrf.mxu0
      %v4964 = vadd.f32 0.0, %v4963
      %v4965 = vpop.f32.mrf.mxu0
      %4966 = vmatprep.mubr.bf16.mxu0 0
      %4967 = vmatmul.mubr.bf16.gmra.mxu0 %v4839
      %v4968 = vpop.f32.mrf.mxu0
      %v4969 = vadd.f32 0.0, %v4968
      %v4970 = vpop.f32.mrf.mxu0
      %v4971 = vpop.f32.mrf.mxu0
      %v4972 = vadd.f32 0.0, %v4971
      %v4973 = vpop.f32.mrf.mxu0
      %4974 = vmatprep.mubr.bf16.mxu0 0
      %4975 = vmatmul.mubr.bf16.gmra.mxu0 %v4842
      %v4976 = vpop.f32.mrf.mxu0
      %v4977 = vadd.f32 0.0, %v4976
      %v4978 = vpop.f32.mrf.mxu0
      %v4979 = vpop.f32.mrf.mxu0
      %v4980 = vadd.f32 0.0, %v4979
      %v4981 = vpop.f32.mrf.mxu0
      %4982 = vmatprep.mubr.bf16.mxu0 0
      %4983 = vmatmul.mubr.bf16.gmra.mxu0 %v4845
      %v4984 = vpop.f32.mrf.mxu0
      %v4985 = vadd.f32 0.0, %v4984
      %v4986 = vpop.f32.mrf.mxu0
      %v4987 = vpop.f32.mrf.mxu0
      %v4988 = vadd.f32 0.0, %v4987
      %v4989 = vpop.f32.mrf.mxu0
      %4990 = vmatprep.mubr.bf16.mxu0 0
      %4991 = vmatmul.mubr.bf16.gmra.mxu0 %v4848
      %v4992 = vpop.f32.mrf.mxu0
      %v4993 = vadd.f32 0.0, %v4992
      %v4994 = vpop.f32.mrf.mxu0
      %v4995 = vpop.f32.mrf.mxu0
      %v4996 = vadd.f32 0.0, %v4995
      %v4997 = vpop.f32.mrf.mxu0
      %4998 = vmatprep.mubr.bf16.mxu0 0
      %4999 = vmatmul.mubr.bf16.gmra.mxu0 %v4851
      %v5000 = vpop.f32.mrf.mxu0
      %v5001 = vadd.f32 0.0, %v5000
      %v5002 = vpop.f32.mrf.mxu0
      %v5003 = vpop.f32.mrf.mxu0
      %v5004 = vadd.f32 0.0, %v5003
      %v5005 = vpop.f32.mrf.mxu0
      %5006 = vmatprep.mubr.bf16.mxu0 0
      %5007 = vmatmul.mubr.bf16.gmra.mxu0 %v4854
      %v5008 = vpop.f32.mrf.mxu0
      %v5009 = vadd.f32 0.0, %v5008
      %v5010 = vpop.f32.mrf.mxu0
      %v5011 = vpop.f32.mrf.mxu0
      %v5012 = vadd.f32 0.0, %v5011
      %v5013 = vpop.f32.mrf.mxu0
      %5014 = vmatprep.mubr.bf16.mxu0 0
      %5015 = vmatmul.mubr.bf16.gmra.mxu0 %v4857
      %v5016 = vpop.f32.mrf.mxu0
      %v5017 = vadd.f32 0.0, %v5016
      %v5018 = vpop.f32.mrf.mxu0
      %v5019 = vpop.f32.mrf.mxu0
      %v5020 = vadd.f32 0.0, %v5019
      %v5021 = vpop.f32.mrf.mxu0
      %5022 = vdwg.mxu0
      %v5023 = vadd.f32 %v4635, %v4897
      %v5024 = vadd.f32 %v4638, %v4900
      %v5025 = vadd.f32 %v4643, %v4905
      %v5026 = vadd.f32 %v4646, %v4908
      %v5027 = vadd.f32 %v4651, %v4913
      %v5028 = vadd.f32 %v4654, %v4916
      %v5029 = vadd.f32 %v4659, %v4921
      %v5030 = vadd.f32 %v4662, %v4924
      %v5031 = vadd.f32 %v4667, %v4929
      %v5032 = vadd.f32 %v4670, %v4932
      %v5033 = vadd.f32 %v4675, %v4937
      %v5034 = vadd.f32 %v4678, %v4940
      %v5035 = vadd.f32 %v4683, %v4945
      %v5036 = vadd.f32 %v4686, %v4948
      %v5037 = vadd.f32 %v4691, %v4953
      %v5038 = vadd.f32 %v4694, %v4956
      %v5039 = vadd.f32 %v4699, %v4961
      %v5040 = vadd.f32 %v4702, %v4964
      %v5041 = vadd.f32 %v4707, %v4969
      %v5042 = vadd.f32 %v4710, %v4972
      %v5043 = vadd.f32 %v4715, %v4977
      %v5044 = vadd.f32 %v4718, %v4980
      %v5045 = vadd.f32 %v4723, %v4985
      %v5046 = vadd.f32 %v4726, %v4988
      %v5047 = vadd.f32 %v4731, %v4993
      %v5048 = vadd.f32 %v4734, %v4996
      %v5049 = vadd.f32 %v4739, %v5001
      %v5050 = vadd.f32 %v4742, %v5004
      %v5051 = vadd.f32 %v4747, %v5009
      %v5052 = vadd.f32 %v4750, %v5012
      %v5053 = vadd.f32 %v4755, %v5017
      %v5054 = vadd.f32 %v4758, %v5020
      %v5055 = vmul.f32 %v5023, %v2175
      %v5056 = vmul.f32 %v5024, %v2176
      %v5057 = vmul.f32 %v5025, %v2177
      %v5058 = vmul.f32 %v5026, %v2178
      %v5059 = vmul.f32 %v5027, %v2179
      %v5060 = vmul.f32 %v5028, %v2180
      %v5061 = vmul.f32 %v5029, %v2181
      %v5062 = vmul.f32 %v5030, %v2182
      %v5063 = vmul.f32 %v5031, %v2183
      %v5064 = vmul.f32 %v5032, %v2184
      %v5065 = vmul.f32 %v5033, %v2185
      %v5066 = vmul.f32 %v5034, %v2186
      %v5067 = vmul.f32 %v5035, %v2187
      %v5068 = vmul.f32 %v5036, %v2188
      %v5069 = vmul.f32 %v5037, %v2189
      %v5070 = vmul.f32 %v5038, %v2190
      %v5071 = vmul.f32 %v5039, %v2191
      %v5072 = vmul.f32 %v5040, %v2192
      %v5073 = vmul.f32 %v5041, %v2193
      %v5074 = vmul.f32 %v5042, %v2194
      %v5075 = vmul.f32 %v5043, %v2195
      %v5076 = vmul.f32 %v5044, %v2196
      %v5077 = vmul.f32 %v5045, %v2197
      %v5078 = vmul.f32 %v5046, %v2198
      %v5079 = vmul.f32 %v5047, %v2199
      %v5080 = vmul.f32 %v5048, %v2200
      %v5081 = vmul.f32 %v5049, %v2201
      %v5082 = vmul.f32 %v5050, %v2202
      %v5083 = vmul.f32 %v5051, %v2203
      %v5084 = vmul.f32 %v5052, %v2204
      %v5085 = vmul.f32 %v5053, %v2205
      %v5086 = vmul.f32 %v5054, %v2206
      %v5087 = vadd.f32 %v4295, %v5055
      %v5088 = vadd.f32 %v4296, %v5056
      %v5089 = vadd.f32 %v4297, %v5057
      %v5090 = vadd.f32 %v4298, %v5058
      %v5091 = vadd.f32 %v4299, %v5059
      %v5092 = vadd.f32 %v4300, %v5060
      %v5093 = vadd.f32 %v4301, %v5061
      %v5094 = vadd.f32 %v4302, %v5062
      %v5095 = vadd.f32 %v4303, %v5063
      %v5096 = vadd.f32 %v4304, %v5064
      %v5097 = vadd.f32 %v4305, %v5065
      %v5098 = vadd.f32 %v4306, %v5066
      %v5099 = vadd.f32 %v4307, %v5067
      %v5100 = vadd.f32 %v4308, %v5068
      %v5101 = vadd.f32 %v4309, %v5069
      %v5102 = vadd.f32 %v4310, %v5070
      %v5103 = vadd.f32 %v4311, %v5071
      %v5104 = vadd.f32 %v4312, %v5072
      %v5105 = vadd.f32 %v4313, %v5073
      %v5106 = vadd.f32 %v4314, %v5074
      %v5107 = vadd.f32 %v4315, %v5075
      %v5108 = vadd.f32 %v4316, %v5076
      %v5109 = vadd.f32 %v4317, %v5077
      %v5110 = vadd.f32 %v4318, %v5078
      %v5111 = vadd.f32 %v4319, %v5079
      %v5112 = vadd.f32 %v4320, %v5080
      %v5113 = vadd.f32 %v4321, %v5081
      %v5114 = vadd.f32 %v4322, %v5082
      %v5115 = vadd.f32 %v4323, %v5083
      %v5116 = vadd.f32 %v4324, %v5084
      %v5117 = vadd.f32 %v4325, %v5085
      %v5118 = vadd.f32 %v4326, %v5086
      %v5119 = vld [vmem:[%s11] sm:$0x1]
      %v5120 = vld [vmem:[%s12] sm:$0x1]
      %v5122 = vlaneseq
      %v5123 = vshrl.u32 %v5122, 7
      %v5124 = vsub.s32 0, %v5123
      %v5125 = vrot.slane %v5119, %v5124
      %v5127 = vmul.f32 %v5087, %v5125
      %v5128 = vmul.f32 %v5088, %v5125
      %v5129 = vmul.f32 %v5089, %v5125
      %v5130 = vmul.f32 %v5090, %v5125
      %v5131 = vmul.f32 %v5091, %v5125
      %v5132 = vmul.f32 %v5092, %v5125
      %v5133 = vmul.f32 %v5093, %v5125
      %v5134 = vmul.f32 %v5094, %v5125
      %v5135 = vmul.f32 %v5095, %v5125
      %v5136 = vmul.f32 %v5096, %v5125
      %v5137 = vmul.f32 %v5097, %v5125
      %v5138 = vmul.f32 %v5098, %v5125
      %v5139 = vmul.f32 %v5099, %v5125
      %v5140 = vmul.f32 %v5100, %v5125
      %v5141 = vmul.f32 %v5101, %v5125
      %v5142 = vmul.f32 %v5102, %v5125
      %v5143 = vmul.f32 %v5103, %v5125
      %v5144 = vmul.f32 %v5104, %v5125
      %v5145 = vmul.f32 %v5105, %v5125
      %v5146 = vmul.f32 %v5106, %v5125
      %v5147 = vmul.f32 %v5107, %v5125
      %v5148 = vmul.f32 %v5108, %v5125
      %v5149 = vmul.f32 %v5109, %v5125
      %v5150 = vmul.f32 %v5110, %v5125
      %v5151 = vmul.f32 %v5111, %v5125
      %v5152 = vmul.f32 %v5112, %v5125
      %v5153 = vmul.f32 %v5113, %v5125
      %v5154 = vmul.f32 %v5114, %v5125
      %v5155 = vmul.f32 %v5115, %v5125
      %v5156 = vmul.f32 %v5116, %v5125
      %v5157 = vmul.f32 %v5117, %v5125
      %v5158 = vmul.f32 %v5118, %v5125
      %v5160 = vlaneseq
      %v5161 = vshrl.u32 %v5160, 7
      %v5162 = vsub.s32 0, %v5161
      %v5163 = vrot.slane %v5120, %v5162
      %v5165 = vadd.f32 %v5127, %v5163
      %v5166 = vadd.f32 %v5128, %v5163
      %v5167 = vadd.f32 %v5129, %v5163
      %v5168 = vadd.f32 %v5130, %v5163
      %v5169 = vadd.f32 %v5131, %v5163
      %v5170 = vadd.f32 %v5132, %v5163
      %v5171 = vadd.f32 %v5133, %v5163
      %v5172 = vadd.f32 %v5134, %v5163
      %v5173 = vadd.f32 %v5135, %v5163
      %v5174 = vadd.f32 %v5136, %v5163
      %v5175 = vadd.f32 %v5137, %v5163
      %v5176 = vadd.f32 %v5138, %v5163
      %v5177 = vadd.f32 %v5139, %v5163
      %v5178 = vadd.f32 %v5140, %v5163
      %v5179 = vadd.f32 %v5141, %v5163
      %v5180 = vadd.f32 %v5142, %v5163
      %v5181 = vadd.f32 %v5143, %v5163
      %v5182 = vadd.f32 %v5144, %v5163
      %v5183 = vadd.f32 %v5145, %v5163
      %v5184 = vadd.f32 %v5146, %v5163
      %v5185 = vadd.f32 %v5147, %v5163
      %v5186 = vadd.f32 %v5148, %v5163
      %v5187 = vadd.f32 %v5149, %v5163
      %v5188 = vadd.f32 %v5150, %v5163
      %v5189 = vadd.f32 %v5151, %v5163
      %v5190 = vadd.f32 %v5152, %v5163
      %v5191 = vadd.f32 %v5153, %v5163
      %v5192 = vadd.f32 %v5154, %v5163
      %v5193 = vadd.f32 %v5155, %v5163
      %v5194 = vadd.f32 %v5156, %v5163
      %v5195 = vadd.f32 %v5157, %v5163
      %v5196 = vadd.f32 %v5158, %v5163
      %v5197 = vxor.u32 %v5165, 2147483648
      %v5198 = vxor.u32 %v5166, 2147483648
      %v5199 = vxor.u32 %v5167, 2147483648
      %v5200 = vxor.u32 %v5168, 2147483648
      %v5201 = vxor.u32 %v5169, 2147483648
      %v5202 = vxor.u32 %v5170, 2147483648
      %v5203 = vxor.u32 %v5171, 2147483648
      %v5204 = vxor.u32 %v5172, 2147483648
      %v5205 = vxor.u32 %v5173, 2147483648
      %v5206 = vxor.u32 %v5174, 2147483648
      %v5207 = vxor.u32 %v5175, 2147483648
      %v5208 = vxor.u32 %v5176, 2147483648
      %v5209 = vxor.u32 %v5177, 2147483648
      %v5210 = vxor.u32 %v5178, 2147483648
      %v5211 = vxor.u32 %v5179, 2147483648
      %v5212 = vxor.u32 %v5180, 2147483648
      %v5213 = vxor.u32 %v5181, 2147483648
      %v5214 = vxor.u32 %v5182, 2147483648
      %v5215 = vxor.u32 %v5183, 2147483648
      %v5216 = vxor.u32 %v5184, 2147483648
      %v5217 = vxor.u32 %v5185, 2147483648
      %v5218 = vxor.u32 %v5186, 2147483648
      %v5219 = vxor.u32 %v5187, 2147483648
      %v5220 = vxor.u32 %v5188, 2147483648
      %v5221 = vxor.u32 %v5189, 2147483648
      %v5222 = vxor.u32 %v5190, 2147483648
      %v5223 = vxor.u32 %v5191, 2147483648
      %v5224 = vxor.u32 %v5192, 2147483648
      %v5225 = vxor.u32 %v5193, 2147483648
      %v5226 = vxor.u32 %v5194, 2147483648
      %v5227 = vxor.u32 %v5195, 2147483648
      %v5228 = vxor.u32 %v5196, 2147483648
      %v5229 = vmul.f32 %v5197, 1.442695
      %v5230 = vpow.pop %v5229
      %v5231 = vmul.f32 %v5198, 1.442695
      %v5232 = vpow.pop %v5231
      %v5233 = vmul.f32 %v5199, 1.442695
      %v5234 = vpow.pop %v5233
      %v5235 = vmul.f32 %v5200, 1.442695
      %v5236 = vpow.pop %v5235
      %v5237 = vmul.f32 %v5201, 1.442695
      %v5238 = vpow.pop %v5237
      %v5239 = vmul.f32 %v5202, 1.442695
      %v5240 = vpow.pop %v5239
      %v5241 = vmul.f32 %v5203, 1.442695
      %v5242 = vpow.pop %v5241
      %v5243 = vmul.f32 %v5204, 1.442695
      %v5244 = vpow.pop %v5243
      %v5245 = vmul.f32 %v5205, 1.442695
      %v5246 = vpow.pop %v5245
      %v5247 = vmul.f32 %v5206, 1.442695
      %v5248 = vpow.pop %v5247
      %v5249 = vmul.f32 %v5207, 1.442695
      %v5250 = vpow.pop %v5249
      %v5251 = vmul.f32 %v5208, 1.442695
      %v5252 = vpow.pop %v5251
      %v5253 = vmul.f32 %v5209, 1.442695
      %v5254 = vpow.pop %v5253
      %v5255 = vmul.f32 %v5210, 1.442695
      %v5256 = vpow.pop %v5255
      %v5257 = vmul.f32 %v5211, 1.442695
      %v5258 = vpow.pop %v5257
      %v5259 = vmul.f32 %v5212, 1.442695
      %v5260 = vpow.pop %v5259
      %v5261 = vmul.f32 %v5213, 1.442695
      %v5262 = vpow.pop %v5261
      %v5263 = vmul.f32 %v5214, 1.442695
      %v5264 = vpow.pop %v5263
      %v5265 = vmul.f32 %v5215, 1.442695
      %v5266 = vpow.pop %v5265
      %v5267 = vmul.f32 %v5216, 1.442695
      %v5268 = vpow.pop %v5267
      %v5269 = vmul.f32 %v5217, 1.442695
      %v5270 = vpow.pop %v5269
      %v5271 = vmul.f32 %v5218, 1.442695
      %v5272 = vpow.pop %v5271
      %v5273 = vmul.f32 %v5219, 1.442695
      %v5274 = vpow.pop %v5273
      %v5275 = vmul.f32 %v5220, 1.442695
      %v5276 = vpow.pop %v5275
      %v5277 = vmul.f32 %v5221, 1.442695
      %v5278 = vpow.pop %v5277
      %v5279 = vmul.f32 %v5222, 1.442695
      %v5280 = vpow.pop %v5279
      %v5281 = vmul.f32 %v5223, 1.442695
      %v5282 = vpow.pop %v5281
      %v5283 = vmul.f32 %v5224, 1.442695
      %v5284 = vpow.pop %v5283
      %v5285 = vmul.f32 %v5225, 1.442695
      %v5286 = vpow.pop %v5285
      %v5287 = vmul.f32 %v5226, 1.442695
      %v5288 = vpow.pop %v5287
      %v5289 = vmul.f32 %v5227, 1.442695
      %v5290 = vpow.pop %v5289
      %v5291 = vmul.f32 %v5228, 1.442695
      %v5292 = vpow.pop %v5291
      %v5293 = vadd.f32 %v5230, 1.0
      %v5294 = vadd.f32 %v5232, 1.0
      %v5295 = vadd.f32 %v5234, 1.0
      %v5296 = vadd.f32 %v5236, 1.0
      %v5297 = vadd.f32 %v5238, 1.0
      %v5298 = vadd.f32 %v5240, 1.0
      %v5299 = vadd.f32 %v5242, 1.0
      %v5300 = vadd.f32 %v5244, 1.0
      %v5301 = vadd.f32 %v5246, 1.0
      %v5302 = vadd.f32 %v5248, 1.0
      %v5303 = vadd.f32 %v5250, 1.0
      %v5304 = vadd.f32 %v5252, 1.0
      %v5305 = vadd.f32 %v5254, 1.0
      %v5306 = vadd.f32 %v5256, 1.0
      %v5307 = vadd.f32 %v5258, 1.0
      %v5308 = vadd.f32 %v5260, 1.0
      %v5309 = vadd.f32 %v5262, 1.0
      %v5310 = vadd.f32 %v5264, 1.0
      %v5311 = vadd.f32 %v5266, 1.0
      %v5312 = vadd.f32 %v5268, 1.0
      %v5313 = vadd.f32 %v5270, 1.0
      %v5314 = vadd.f32 %v5272, 1.0
      %v5315 = vadd.f32 %v5274, 1.0
      %v5316 = vadd.f32 %v5276, 1.0
      %v5317 = vadd.f32 %v5278, 1.0
      %v5318 = vadd.f32 %v5280, 1.0
      %v5319 = vadd.f32 %v5282, 1.0
      %v5320 = vadd.f32 %v5284, 1.0
      %v5321 = vadd.f32 %v5286, 1.0
      %v5322 = vadd.f32 %v5288, 1.0
      %v5323 = vadd.f32 %v5290, 1.0
      %v5324 = vadd.f32 %v5292, 1.0
      %v5325 = vrcp.pop %v5293
      %v5326 = vmul.f32 1.0, %v5325
      %v5327 = vrcp.pop %v5294
      %v5328 = vmul.f32 1.0, %v5327
      %v5329 = vrcp.pop %v5295
      %v5330 = vmul.f32 1.0, %v5329
      %v5331 = vrcp.pop %v5296
      %v5332 = vmul.f32 1.0, %v5331
      %v5333 = vrcp.pop %v5297
      %v5334 = vmul.f32 1.0, %v5333
      %v5335 = vrcp.pop %v5298
      %v5336 = vmul.f32 1.0, %v5335
      %v5337 = vrcp.pop %v5299
      %v5338 = vmul.f32 1.0, %v5337
      %v5339 = vrcp.pop %v5300
      %v5340 = vmul.f32 1.0, %v5339
      %v5341 = vrcp.pop %v5301
      %v5342 = vmul.f32 1.0, %v5341
      %v5343 = vrcp.pop %v5302
      %v5344 = vmul.f32 1.0, %v5343
      %v5345 = vrcp.pop %v5303
      %v5346 = vmul.f32 1.0, %v5345
      %v5347 = vrcp.pop %v5304
      %v5348 = vmul.f32 1.0, %v5347
      %v5349 = vrcp.pop %v5305
      %v5350 = vmul.f32 1.0, %v5349
      %v5351 = vrcp.pop %v5306
      %v5352 = vmul.f32 1.0, %v5351
      %v5353 = vrcp.pop %v5307
      %v5354 = vmul.f32 1.0, %v5353
      %v5355 = vrcp.pop %v5308
      %v5356 = vmul.f32 1.0, %v5355
      %v5357 = vrcp.pop %v5309
      %v5358 = vmul.f32 1.0, %v5357
      %v5359 = vrcp.pop %v5310
      %v5360 = vmul.f32 1.0, %v5359
      %v5361 = vrcp.pop %v5311
      %v5362 = vmul.f32 1.0, %v5361
      %v5363 = vrcp.pop %v5312
      %v5364 = vmul.f32 1.0, %v5363
      %v5365 = vrcp.pop %v5313
      %v5366 = vmul.f32 1.0, %v5365
      %v5367 = vrcp.pop %v5314
      %v5368 = vmul.f32 1.0, %v5367
      %v5369 = vrcp.pop %v5315
      %v5370 = vmul.f32 1.0, %v5369
      %v5371 = vrcp.pop %v5316
      %v5372 = vmul.f32 1.0, %v5371
      %v5373 = vrcp.pop %v5317
      %v5374 = vmul.f32 1.0, %v5373
      %v5375 = vrcp.pop %v5318
      %v5376 = vmul.f32 1.0, %v5375
      %v5377 = vrcp.pop %v5319
      %v5378 = vmul.f32 1.0, %v5377
      %v5379 = vrcp.pop %v5320
      %v5380 = vmul.f32 1.0, %v5379
      %v5381 = vrcp.pop %v5321
      %v5382 = vmul.f32 1.0, %v5381
      %v5383 = vrcp.pop %v5322
      %v5384 = vmul.f32 1.0, %v5383
      %v5385 = vrcp.pop %v5323
      %v5386 = vmul.f32 1.0, %v5385
      %v5387 = vrcp.pop %v5324
      %v5388 = vmul.f32 1.0, %v5387
      %v5389 = vmul.f32 %v5165, %v5326
      %v5390 = vmul.f32 %v5166, %v5328
      %v5391 = vmul.f32 %v5167, %v5330
      %v5392 = vmul.f32 %v5168, %v5332
      %v5393 = vmul.f32 %v5169, %v5334
      %v5394 = vmul.f32 %v5170, %v5336
      %v5395 = vmul.f32 %v5171, %v5338
      %v5396 = vmul.f32 %v5172, %v5340
      %v5397 = vmul.f32 %v5173, %v5342
      %v5398 = vmul.f32 %v5174, %v5344
      %v5399 = vmul.f32 %v5175, %v5346
      %v5400 = vmul.f32 %v5176, %v5348
      %v5401 = vmul.f32 %v5177, %v5350
      %v5402 = vmul.f32 %v5178, %v5352
      %v5403 = vmul.f32 %v5179, %v5354
      %v5404 = vmul.f32 %v5180, %v5356
      %v5405 = vmul.f32 %v5181, %v5358
      %v5406 = vmul.f32 %v5182, %v5360
      %v5407 = vmul.f32 %v5183, %v5362
      %v5408 = vmul.f32 %v5184, %v5364
      %v5409 = vmul.f32 %v5185, %v5366
      %v5410 = vmul.f32 %v5186, %v5368
      %v5411 = vmul.f32 %v5187, %v5370
      %v5412 = vmul.f32 %v5188, %v5372
      %v5413 = vmul.f32 %v5189, %v5374
      %v5414 = vmul.f32 %v5190, %v5376
      %v5415 = vmul.f32 %v5191, %v5378
      %v5416 = vmul.f32 %v5192, %v5380
      %v5417 = vmul.f32 %v5193, %v5382
      %v5418 = vmul.f32 %v5194, %v5384
      %v5419 = vmul.f32 %v5195, %v5386
      %v5420 = vmul.f32 %v5196, %v5388
      %v5421 = vadd.f32 %v1083, %v5389
      %v5422 = vadd.f32 %v1084, %v5390
      %v5423 = vadd.f32 %v1085, %v5391
      %v5424 = vadd.f32 %v1086, %v5392
      %v5425 = vadd.f32 %v1087, %v5393
      %v5426 = vadd.f32 %v1088, %v5394
      %v5427 = vadd.f32 %v1089, %v5395
      %v5428 = vadd.f32 %v1090, %v5396
      %v5429 = vadd.f32 %v1091, %v5397
      %v5430 = vadd.f32 %v1092, %v5398
      %v5431 = vadd.f32 %v1093, %v5399
      %v5432 = vadd.f32 %v1094, %v5400
      %v5433 = vadd.f32 %v1095, %v5401
      %v5434 = vadd.f32 %v1096, %v5402
      %v5435 = vadd.f32 %v1097, %v5403
      %v5436 = vadd.f32 %v1098, %v5404
      %v5437 = vadd.f32 %v1099, %v5405
      %v5438 = vadd.f32 %v1100, %v5406
      %v5439 = vadd.f32 %v1101, %v5407
      %v5440 = vadd.f32 %v1102, %v5408
      %v5441 = vadd.f32 %v1103, %v5409
      %v5442 = vadd.f32 %v1104, %v5410
      %v5443 = vadd.f32 %v1105, %v5411
      %v5444 = vadd.f32 %v1106, %v5412
      %v5445 = vadd.f32 %v1107, %v5413
      %v5446 = vadd.f32 %v1108, %v5414
      %v5447 = vadd.f32 %v1109, %v5415
      %v5448 = vadd.f32 %v1110, %v5416
      %v5449 = vadd.f32 %v1111, %v5417
      %v5450 = vadd.f32 %v1112, %v5418
      %v5451 = vadd.f32 %v1113, %v5419
      %v5452 = vadd.f32 %v1114, %v5420
      %v5453 = vpack.c.bf16 %v5422, %v5421
      %v5454 = vpack.c.bf16 %v5424, %v5423
      %v5455 = vpack.c.bf16 %v5426, %v5425
      %v5456 = vpack.c.bf16 %v5428, %v5427
      %v5457 = vpack.c.bf16 %v5430, %v5429
      %v5458 = vpack.c.bf16 %v5432, %v5431
      %v5459 = vpack.c.bf16 %v5434, %v5433
      %v5460 = vpack.c.bf16 %v5436, %v5435
      %v5461 = vpack.c.bf16 %v5438, %v5437
      %v5462 = vpack.c.bf16 %v5440, %v5439
      %v5463 = vpack.c.bf16 %v5442, %v5441
      %v5464 = vpack.c.bf16 %v5444, %v5443
      %v5465 = vpack.c.bf16 %v5446, %v5445
      %v5466 = vpack.c.bf16 %v5448, %v5447
      %v5467 = vpack.c.bf16 %v5450, %v5449
      %v5468 = vpack.c.bf16 %v5452, %v5451
      %v5469 = vld [vmem:[%s13] sm:$0x3]
      %v5470 = vld [vmem:[%s14] sm:$0x3]
      %v5472 = vsel %vm599, %v1582, 0
      %v5475 = vsel %vm599, %v1583, 0
      %v5478 = vsel %vm599, %v1584, 0
      %v5481 = vsel %vm599, %v1585, 0
      %v5484 = vsel %vm599, %v1586, 0
      %v5487 = vsel %vm599, %v1587, 0
      %v5490 = vsel %vm599, %v1588, 0
      %v5493 = vsel %vm599, %v1589, 0
      %v5496 = vsel %vm599, %v1590, 0
      %v5499 = vsel %vm599, %v1591, 0
      %v5502 = vsel %vm599, %v1592, 0
      %v5505 = vsel %vm599, %v1593, 0
      %v5508 = vsel %vm599, %v1594, 0
      %v5511 = vsel %vm599, %v1595, 0
      %v5514 = vsel %vm599, %v1596, 0
      %v5517 = vsel %vm599, %v1597, 0
      %v5520 = vsel %vm648, %v5470, 0
      %5522 = vmatprep.subr.bf16.mxu0 0
      %5523 = vmatpush1.bf16.msra.mxu0 0
      %5524 = vmatprep.subr.bf16.mxu0 0
      %5525 = vmatpush1.bf16.msra.mxu0 0
      %5526 = vmatprep.subr.bf16.mxu0 0
      %5527 = vmatpush1.bf16.msra.mxu0 0
      %5528 = vmatprep.subr.bf16.mxu0 0
      %5529 = vmatpush1.bf16.msra.mxu0 0
      %5530 = vmatprep.subr.bf16.mxu0 0
      %5531 = vmatpush1.bf16.msra.mxu0 0
      %5532 = vmatprep.subr.bf16.mxu0 0
      %5533 = vmatpush1.bf16.msra.mxu0 0
      %5534 = vmatprep.subr.bf16.mxu0 0
      %5535 = vmatpush1.bf16.msra.mxu0 0
      %5536 = vmatprep.subr.bf16.mxu0 0
      %5537 = vmatpush1.bf16.msra.mxu0 %v5520
      %5538 = vmatprep.subr.bf16.mxu0 0
      %5539 = vmatpush2.bf16.msra.mxu0 0
      %5540 = vmatprep.subr.bf16.mxu0 0
      %5541 = vmatpush2.bf16.msra.mxu0 0
      %5542 = vmatprep.subr.bf16.mxu0 0
      %5543 = vmatpush2.bf16.msra.mxu0 0
      %5544 = vmatprep.subr.bf16.mxu0 0
      %5545 = vmatpush2.bf16.msra.mxu0 0
      %5546 = vmatprep.subr.bf16.mxu0 0
      %5547 = vmatpush2.bf16.msra.mxu0 0
      %5548 = vmatprep.subr.bf16.mxu0 0
      %5549 = vmatpush2.bf16.msra.mxu0 0
      %5550 = vmatprep.subr.bf16.mxu0 0
      %5551 = vmatpush2.bf16.msra.mxu0 0
      %5552 = vmatprep.subr.bf16.mxu0 0
      %5553 = vmatpush2.bf16.msra.mxu0 0
      %5554 = vmatprep.mubr.bf16.mxu0 0
      %5555 = vmatmul.mubr.bf16.gmra.mxu0 %v5472
      %v5556 = vpop.f32.mrf.mxu0
      %v5557 = vadd.f32 0.0, %v5556
      %v5558 = vpop.f32.mrf.mxu0
      %v5559 = vpop.f32.mrf.mxu0
      %v5560 = vadd.f32 0.0, %v5559
      %v5561 = vpop.f32.mrf.mxu0
      %5562 = vmatprep.mubr.bf16.mxu0 0
      %5563 = vmatmul.mubr.bf16.gmra.mxu0 %v5475
      %v5564 = vpop.f32.mrf.mxu0
      %v5565 = vadd.f32 0.0, %v5564
      %v5566 = vpop.f32.mrf.mxu0
      %v5567 = vpop.f32.mrf.mxu0
      %v5568 = vadd.f32 0.0, %v5567
      %v5569 = vpop.f32.mrf.mxu0
      %5570 = vmatprep.mubr.bf16.mxu0 0
      %5571 = vmatmul.mubr.bf16.gmra.mxu0 %v5478
      %v5572 = vpop.f32.mrf.mxu0
      %v5573 = vadd.f32 0.0, %v5572
      %v5574 = vpop.f32.mrf.mxu0
      %v5575 = vpop.f32.mrf.mxu0
      %v5576 = vadd.f32 0.0, %v5575
      %v5577 = vpop.f32.mrf.mxu0
      %5578 = vmatprep.mubr.bf16.mxu0 0
      %5579 = vmatmul.mubr.bf16.gmra.mxu0 %v5481
      %v5580 = vpop.f32.mrf.mxu0
      %v5581 = vadd.f32 0.0, %v5580
      %v5582 = vpop.f32.mrf.mxu0
      %v5583 = vpop.f32.mrf.mxu0
      %v5584 = vadd.f32 0.0, %v5583
      %v5585 = vpop.f32.mrf.mxu0
      %5586 = vmatprep.mubr.bf16.mxu0 0
      %5587 = vmatmul.mubr.bf16.gmra.mxu0 %v5484
      %v5588 = vpop.f32.mrf.mxu0
      %v5589 = vadd.f32 0.0, %v5588
      %v5590 = vpop.f32.mrf.mxu0
      %v5591 = vpop.f32.mrf.mxu0
      %v5592 = vadd.f32 0.0, %v5591
      %v5593 = vpop.f32.mrf.mxu0
      %5594 = vmatprep.mubr.bf16.mxu0 0
      %5595 = vmatmul.mubr.bf16.gmra.mxu0 %v5487
      %v5596 = vpop.f32.mrf.mxu0
      %v5597 = vadd.f32 0.0, %v5596
      %v5598 = vpop.f32.mrf.mxu0
      %v5599 = vpop.f32.mrf.mxu0
      %v5600 = vadd.f32 0.0, %v5599
      %v5601 = vpop.f32.mrf.mxu0
      %5602 = vmatprep.mubr.bf16.mxu0 0
      %5603 = vmatmul.mubr.bf16.gmra.mxu0 %v5490
      %v5604 = vpop.f32.mrf.mxu0
      %v5605 = vadd.f32 0.0, %v5604
      %v5606 = vpop.f32.mrf.mxu0
      %v5607 = vpop.f32.mrf.mxu0
      %v5608 = vadd.f32 0.0, %v5607
      %v5609 = vpop.f32.mrf.mxu0
      %5610 = vmatprep.mubr.bf16.mxu0 0
      %5611 = vmatmul.mubr.bf16.gmra.mxu0 %v5493
      %v5612 = vpop.f32.mrf.mxu0
      %v5613 = vadd.f32 0.0, %v5612
      %v5614 = vpop.f32.mrf.mxu0
      %v5615 = vpop.f32.mrf.mxu0
      %v5616 = vadd.f32 0.0, %v5615
      %v5617 = vpop.f32.mrf.mxu0
      %5618 = vmatprep.mubr.bf16.mxu0 0
      %5619 = vmatmul.mubr.bf16.gmra.mxu0 %v5496
      %v5620 = vpop.f32.mrf.mxu0
      %v5621 = vadd.f32 0.0, %v5620
      %v5622 = vpop.f32.mrf.mxu0
      %v5623 = vpop.f32.mrf.mxu0
      %v5624 = vadd.f32 0.0, %v5623
      %v5625 = vpop.f32.mrf.mxu0
      %5626 = vmatprep.mubr.bf16.mxu0 0
      %5627 = vmatmul.mubr.bf16.gmra.mxu0 %v5499
      %v5628 = vpop.f32.mrf.mxu0
      %v5629 = vadd.f32 0.0, %v5628
      %v5630 = vpop.f32.mrf.mxu0
      %v5631 = vpop.f32.mrf.mxu0
      %v5632 = vadd.f32 0.0, %v5631
      %v5633 = vpop.f32.mrf.mxu0
      %5634 = vmatprep.mubr.bf16.mxu0 0
      %5635 = vmatmul.mubr.bf16.gmra.mxu0 %v5502
      %v5636 = vpop.f32.mrf.mxu0
      %v5637 = vadd.f32 0.0, %v5636
      %v5638 = vpop.f32.mrf.mxu0
      %v5639 = vpop.f32.mrf.mxu0
      %v5640 = vadd.f32 0.0, %v5639
      %v5641 = vpop.f32.mrf.mxu0
      %5642 = vmatprep.mubr.bf16.mxu0 0
      %5643 = vmatmul.mubr.bf16.gmra.mxu0 %v5505
      %v5644 = vpop.f32.mrf.mxu0
      %v5645 = vadd.f32 0.0, %v5644
      %v5646 = vpop.f32.mrf.mxu0
      %v5647 = vpop.f32.mrf.mxu0
      %v5648 = vadd.f32 0.0, %v5647
      %v5649 = vpop.f32.mrf.mxu0
      %5650 = vmatprep.mubr.bf16.mxu0 0
      %5651 = vmatmul.mubr.bf16.gmra.mxu0 %v5508
      %v5652 = vpop.f32.mrf.mxu0
      %v5653 = vadd.f32 0.0, %v5652
      %v5654 = vpop.f32.mrf.mxu0
      %v5655 = vpop.f32.mrf.mxu0
      %v5656 = vadd.f32 0.0, %v5655
      %v5657 = vpop.f32.mrf.mxu0
      %5658 = vmatprep.mubr.bf16.mxu0 0
      %5659 = vmatmul.mubr.bf16.gmra.mxu0 %v5511
      %v5660 = vpop.f32.mrf.mxu0
      %v5661 = vadd.f32 0.0, %v5660
      %v5662 = vpop.f32.mrf.mxu0
      %v5663 = vpop.f32.mrf.mxu0
      %v5664 = vadd.f32 0.0, %v5663
      %v5665 = vpop.f32.mrf.mxu0
      %5666 = vmatprep.mubr.bf16.mxu0 0
      %5667 = vmatmul.mubr.bf16.gmra.mxu0 %v5514
      %v5668 = vpop.f32.mrf.mxu0
      %v5669 = vadd.f32 0.0, %v5668
      %v5670 = vpop.f32.mrf.mxu0
      %v5671 = vpop.f32.mrf.mxu0
      %v5672 = vadd.f32 0.0, %v5671
      %v5673 = vpop.f32.mrf.mxu0
      %5674 = vmatprep.mubr.bf16.mxu0 0
      %5675 = vmatmul.mubr.bf16.gmra.mxu0 %v5517
      %v5676 = vpop.f32.mrf.mxu0
      %v5677 = vadd.f32 0.0, %v5676
      %v5678 = vpop.f32.mrf.mxu0
      %v5679 = vpop.f32.mrf.mxu0
      %v5680 = vadd.f32 0.0, %v5679
      %v5681 = vpop.f32.mrf.mxu0
      %5682 = vdwg.mxu0
      %v5684 = vsel %vm599, %v5453, 0
      %v5687 = vsel %vm599, %v5454, 0
      %v5690 = vsel %vm599, %v5455, 0
      %v5693 = vsel %vm599, %v5456, 0
      %v5696 = vsel %vm599, %v5457, 0
      %v5699 = vsel %vm599, %v5458, 0
      %v5702 = vsel %vm599, %v5459, 0
      %v5705 = vsel %vm599, %v5460, 0
      %v5708 = vsel %vm599, %v5461, 0
      %v5711 = vsel %vm599, %v5462, 0
      %v5714 = vsel %vm599, %v5463, 0
      %v5717 = vsel %vm599, %v5464, 0
      %v5720 = vsel %vm599, %v5465, 0
      %v5723 = vsel %vm599, %v5466, 0
      %v5726 = vsel %vm599, %v5467, 0
      %v5729 = vsel %vm599, %v5468, 0
      %v5732 = vsel %vm648, %v5469, 0
      %5734 = vmatprep.subr.bf16.mxu0 0
      %5735 = vmatpush1.bf16.msra.mxu0 0
      %5736 = vmatprep.subr.bf16.mxu0 0
      %5737 = vmatpush1.bf16.msra.mxu0 0
      %5738 = vmatprep.subr.bf16.mxu0 0
      %5739 = vmatpush1.bf16.msra.mxu0 0
      %5740 = vmatprep.subr.bf16.mxu0 0
      %5741 = vmatpush1.bf16.msra.mxu0 0
      %5742 = vmatprep.subr.bf16.mxu0 0
      %5743 = vmatpush1.bf16.msra.mxu0 0
      %5744 = vmatprep.subr.bf16.mxu0 0
      %5745 = vmatpush1.bf16.msra.mxu0 0
      %5746 = vmatprep.subr.bf16.mxu0 0
      %5747 = vmatpush1.bf16.msra.mxu0 0
      %5748 = vmatprep.subr.bf16.mxu0 0
      %5749 = vmatpush1.bf16.msra.mxu0 %v5732
      %5750 = vmatprep.subr.bf16.mxu0 0
      %5751 = vmatpush2.bf16.msra.mxu0 0
      %5752 = vmatprep.subr.bf16.mxu0 0
      %5753 = vmatpush2.bf16.msra.mxu0 0
      %5754 = vmatprep.subr.bf16.mxu0 0
      %5755 = vmatpush2.bf16.msra.mxu0 0
      %5756 = vmatprep.subr.bf16.mxu0 0
      %5757 = vmatpush2.bf16.msra.mxu0 0
      %5758 = vmatprep.subr.bf16.mxu0 0
      %5759 = vmatpush2.bf16.msra.mxu0 0
      %5760 = vmatprep.subr.bf16.mxu0 0
      %5761 = vmatpush2.bf16.msra.mxu0 0
      %5762 = vmatprep.subr.bf16.mxu0 0
      %5763 = vmatpush2.bf16.msra.mxu0 0
      %5764 = vmatprep.subr.bf16.mxu0 0
      %5765 = vmatpush2.bf16.msra.mxu0 0
      %5766 = vmatprep.mubr.bf16.mxu0 0
      %5767 = vmatmul.mubr.bf16.gmra.mxu0 %v5684
      %v5768 = vpop.f32.mrf.mxu0
      %v5769 = vadd.f32 %v5557, %v5768
      %v5770 = vpop.f32.mrf.mxu0
      %v5771 = vpop.f32.mrf.mxu0
      %v5772 = vadd.f32 %v5560, %v5771
      %v5773 = vpop.f32.mrf.mxu0
      %5774 = vmatprep.mubr.bf16.mxu0 0
      %5775 = vmatmul.mubr.bf16.gmra.mxu0 %v5687
      %v5776 = vpop.f32.mrf.mxu0
      %v5777 = vadd.f32 %v5565, %v5776
      %v5778 = vpop.f32.mrf.mxu0
      %v5779 = vpop.f32.mrf.mxu0
      %v5780 = vadd.f32 %v5568, %v5779
      %v5781 = vpop.f32.mrf.mxu0
      %5782 = vmatprep.mubr.bf16.mxu0 0
      %5783 = vmatmul.mubr.bf16.gmra.mxu0 %v5690
      %v5784 = vpop.f32.mrf.mxu0
      %v5785 = vadd.f32 %v5573, %v5784
      %v5786 = vpop.f32.mrf.mxu0
      %v5787 = vpop.f32.mrf.mxu0
      %v5788 = vadd.f32 %v5576, %v5787
      %v5789 = vpop.f32.mrf.mxu0
      %5790 = vmatprep.mubr.bf16.mxu0 0
      %5791 = vmatmul.mubr.bf16.gmra.mxu0 %v5693
      %v5792 = vpop.f32.mrf.mxu0
      %v5793 = vadd.f32 %v5581, %v5792
      %v5794 = vpop.f32.mrf.mxu0
      %v5795 = vpop.f32.mrf.mxu0
      %v5796 = vadd.f32 %v5584, %v5795
      %v5797 = vpop.f32.mrf.mxu0
      %5798 = vmatprep.mubr.bf16.mxu0 0
      %5799 = vmatmul.mubr.bf16.gmra.mxu0 %v5696
      %v5800 = vpop.f32.mrf.mxu0
      %v5801 = vadd.f32 %v5589, %v5800
      %v5802 = vpop.f32.mrf.mxu0
      %v5803 = vpop.f32.mrf.mxu0
      %v5804 = vadd.f32 %v5592, %v5803
      %v5805 = vpop.f32.mrf.mxu0
      %5806 = vmatprep.mubr.bf16.mxu0 0
      %5807 = vmatmul.mubr.bf16.gmra.mxu0 %v5699
      %v5808 = vpop.f32.mrf.mxu0
      %v5809 = vadd.f32 %v5597, %v5808
      %v5810 = vpop.f32.mrf.mxu0
      %v5811 = vpop.f32.mrf.mxu0
      %v5812 = vadd.f32 %v5600, %v5811
      %v5813 = vpop.f32.mrf.mxu0
      %5814 = vmatprep.mubr.bf16.mxu0 0
      %5815 = vmatmul.mubr.bf16.gmra.mxu0 %v5702
      %v5816 = vpop.f32.mrf.mxu0
      %v5817 = vadd.f32 %v5605, %v5816
      %v5818 = vpop.f32.mrf.mxu0
      %v5819 = vpop.f32.mrf.mxu0
      %v5820 = vadd.f32 %v5608, %v5819
      %v5821 = vpop.f32.mrf.mxu0
      %5822 = vmatprep.mubr.bf16.mxu0 0
      %5823 = vmatmul.mubr.bf16.gmra.mxu0 %v5705
      %v5824 = vpop.f32.mrf.mxu0
      %v5825 = vadd.f32 %v5613, %v5824
      %v5826 = vpop.f32.mrf.mxu0
      %v5827 = vpop.f32.mrf.mxu0
      %v5828 = vadd.f32 %v5616, %v5827
      %v5829 = vpop.f32.mrf.mxu0
      %5830 = vmatprep.mubr.bf16.mxu0 0
      %5831 = vmatmul.mubr.bf16.gmra.mxu0 %v5708
      %v5832 = vpop.f32.mrf.mxu0
      %v5833 = vadd.f32 %v5621, %v5832
      %v5834 = vpop.f32.mrf.mxu0
      %v5835 = vpop.f32.mrf.mxu0
      %v5836 = vadd.f32 %v5624, %v5835
      %v5837 = vpop.f32.mrf.mxu0
      %5838 = vmatprep.mubr.bf16.mxu0 0
      %5839 = vmatmul.mubr.bf16.gmra.mxu0 %v5711
      %v5840 = vpop.f32.mrf.mxu0
      %v5841 = vadd.f32 %v5629, %v5840
      %v5842 = vpop.f32.mrf.mxu0
      %v5843 = vpop.f32.mrf.mxu0
      %v5844 = vadd.f32 %v5632, %v5843
      %v5845 = vpop.f32.mrf.mxu0
      %5846 = vmatprep.mubr.bf16.mxu0 0
      %5847 = vmatmul.mubr.bf16.gmra.mxu0 %v5714
      %v5848 = vpop.f32.mrf.mxu0
      %v5849 = vadd.f32 %v5637, %v5848
      %v5850 = vpop.f32.mrf.mxu0
      %v5851 = vpop.f32.mrf.mxu0
      %v5852 = vadd.f32 %v5640, %v5851
      %v5853 = vpop.f32.mrf.mxu0
      %5854 = vmatprep.mubr.bf16.mxu0 0
      %5855 = vmatmul.mubr.bf16.gmra.mxu0 %v5717
      %v5856 = vpop.f32.mrf.mxu0
      %v5857 = vadd.f32 %v5645, %v5856
      %v5858 = vpop.f32.mrf.mxu0
      %v5859 = vpop.f32.mrf.mxu0
      %v5860 = vadd.f32 %v5648, %v5859
      %v5861 = vpop.f32.mrf.mxu0
      %5862 = vmatprep.mubr.bf16.mxu0 0
      %5863 = vmatmul.mubr.bf16.gmra.mxu0 %v5720
      %v5864 = vpop.f32.mrf.mxu0
      %v5865 = vadd.f32 %v5653, %v5864
      %v5866 = vpop.f32.mrf.mxu0
      %v5867 = vpop.f32.mrf.mxu0
      %v5868 = vadd.f32 %v5656, %v5867
      %v5869 = vpop.f32.mrf.mxu0
      %5870 = vmatprep.mubr.bf16.mxu0 0
      %5871 = vmatmul.mubr.bf16.gmra.mxu0 %v5723
      %v5872 = vpop.f32.mrf.mxu0
      %v5873 = vadd.f32 %v5661, %v5872
      %v5874 = vpop.f32.mrf.mxu0
      %v5875 = vpop.f32.mrf.mxu0
      %v5876 = vadd.f32 %v5664, %v5875
      %v5877 = vpop.f32.mrf.mxu0
      %5878 = vmatprep.mubr.bf16.mxu0 0
      %5879 = vmatmul.mubr.bf16.gmra.mxu0 %v5726
      %v5880 = vpop.f32.mrf.mxu0
      %v5881 = vadd.f32 %v5669, %v5880
      %v5882 = vpop.f32.mrf.mxu0
      %v5883 = vpop.f32.mrf.mxu0
      %v5884 = vadd.f32 %v5672, %v5883
      %v5885 = vpop.f32.mrf.mxu0
      %5886 = vmatprep.mubr.bf16.mxu0 0
      %5887 = vmatmul.mubr.bf16.gmra.mxu0 %v5729
      %v5888 = vpop.f32.mrf.mxu0
      %v5889 = vadd.f32 %v5677, %v5888
      %v5890 = vpop.f32.mrf.mxu0
      %v5891 = vpop.f32.mrf.mxu0
      %v5892 = vadd.f32 %v5680, %v5891
      %v5893 = vpop.f32.mrf.mxu0
      %5894 = vdwg.mxu0
      %v5895 = vld [vmem:[%s15] sm:$0x1]
      %v5896 = vld [vmem:[%s16] sm:$0x1]
      %v5898 = vlaneseq
      %v5899 = vshrl.u32 %v5898, 7
      %v5900 = vsub.s32 0, %v5899
      %v5901 = vrot.slane %v5895, %v5900
      %v5903 = vmul.f32 %v5769, %v5901
      %v5904 = vmul.f32 %v5772, %v5901
      %v5905 = vmul.f32 %v5777, %v5901
      %v5906 = vmul.f32 %v5780, %v5901
      %v5907 = vmul.f32 %v5785, %v5901
      %v5908 = vmul.f32 %v5788, %v5901
      %v5909 = vmul.f32 %v5793, %v5901
      %v5910 = vmul.f32 %v5796, %v5901
      %v5911 = vmul.f32 %v5801, %v5901
      %v5912 = vmul.f32 %v5804, %v5901
      %v5913 = vmul.f32 %v5809, %v5901
      %v5914 = vmul.f32 %v5812, %v5901
      %v5915 = vmul.f32 %v5817, %v5901
      %v5916 = vmul.f32 %v5820, %v5901
      %v5917 = vmul.f32 %v5825, %v5901
      %v5918 = vmul.f32 %v5828, %v5901
      %v5919 = vmul.f32 %v5833, %v5901
      %v5920 = vmul.f32 %v5836, %v5901
      %v5921 = vmul.f32 %v5841, %v5901
      %v5922 = vmul.f32 %v5844, %v5901
      %v5923 = vmul.f32 %v5849, %v5901
      %v5924 = vmul.f32 %v5852, %v5901
      %v5925 = vmul.f32 %v5857, %v5901
      %v5926 = vmul.f32 %v5860, %v5901
      %v5927 = vmul.f32 %v5865, %v5901
      %v5928 = vmul.f32 %v5868, %v5901
      %v5929 = vmul.f32 %v5873, %v5901
      %v5930 = vmul.f32 %v5876, %v5901
      %v5931 = vmul.f32 %v5881, %v5901
      %v5932 = vmul.f32 %v5884, %v5901
      %v5933 = vmul.f32 %v5889, %v5901
      %v5934 = vmul.f32 %v5892, %v5901
      %v5936 = vlaneseq
      %v5937 = vshrl.u32 %v5936, 7
      %v5938 = vsub.s32 0, %v5937
      %v5939 = vrot.slane %v5896, %v5938
      %v5941 = vadd.f32 %v5903, %v5939
      %v5942 = vadd.f32 %v5904, %v5939
      %v5943 = vadd.f32 %v5905, %v5939
      %v5944 = vadd.f32 %v5906, %v5939
      %v5945 = vadd.f32 %v5907, %v5939
      %v5946 = vadd.f32 %v5908, %v5939
      %v5947 = vadd.f32 %v5909, %v5939
      %v5948 = vadd.f32 %v5910, %v5939
      %v5949 = vadd.f32 %v5911, %v5939
      %v5950 = vadd.f32 %v5912, %v5939
      %v5951 = vadd.f32 %v5913, %v5939
      %v5952 = vadd.f32 %v5914, %v5939
      %v5953 = vadd.f32 %v5915, %v5939
      %v5954 = vadd.f32 %v5916, %v5939
      %v5955 = vadd.f32 %v5917, %v5939
      %v5956 = vadd.f32 %v5918, %v5939
      %v5957 = vadd.f32 %v5919, %v5939
      %v5958 = vadd.f32 %v5920, %v5939
      %v5959 = vadd.f32 %v5921, %v5939
      %v5960 = vadd.f32 %v5922, %v5939
      %v5961 = vadd.f32 %v5923, %v5939
      %v5962 = vadd.f32 %v5924, %v5939
      %v5963 = vadd.f32 %v5925, %v5939
      %v5964 = vadd.f32 %v5926, %v5939
      %v5965 = vadd.f32 %v5927, %v5939
      %v5966 = vadd.f32 %v5928, %v5939
      %v5967 = vadd.f32 %v5929, %v5939
      %v5968 = vadd.f32 %v5930, %v5939
      %v5969 = vadd.f32 %v5931, %v5939
      %v5970 = vadd.f32 %v5932, %v5939
      %v5971 = vadd.f32 %v5933, %v5939
      %v5972 = vadd.f32 %v5934, %v5939
      %v5973 = vxor.u32 %v5941, 2147483648
      %v5974 = vxor.u32 %v5942, 2147483648
      %v5975 = vxor.u32 %v5943, 2147483648
      %v5976 = vxor.u32 %v5944, 2147483648
      %v5977 = vxor.u32 %v5945, 2147483648
      %v5978 = vxor.u32 %v5946, 2147483648
      %v5979 = vxor.u32 %v5947, 2147483648
      %v5980 = vxor.u32 %v5948, 2147483648
      %v5981 = vxor.u32 %v5949, 2147483648
      %v5982 = vxor.u32 %v5950, 2147483648
      %v5983 = vxor.u32 %v5951, 2147483648
      %v5984 = vxor.u32 %v5952, 2147483648
      %v5985 = vxor.u32 %v5953, 2147483648
      %v5986 = vxor.u32 %v5954, 2147483648
      %v5987 = vxor.u32 %v5955, 2147483648
      %v5988 = vxor.u32 %v5956, 2147483648
      %v5989 = vxor.u32 %v5957, 2147483648
      %v5990 = vxor.u32 %v5958, 2147483648
      %v5991 = vxor.u32 %v5959, 2147483648
      %v5992 = vxor.u32 %v5960, 2147483648
      %v5993 = vxor.u32 %v5961, 2147483648
      %v5994 = vxor.u32 %v5962, 2147483648
      %v5995 = vxor.u32 %v5963, 2147483648
      %v5996 = vxor.u32 %v5964, 2147483648
      %v5997 = vxor.u32 %v5965, 2147483648
      %v5998 = vxor.u32 %v5966, 2147483648
      %v5999 = vxor.u32 %v5967, 2147483648
      %v6000 = vxor.u32 %v5968, 2147483648
      %v6001 = vxor.u32 %v5969, 2147483648
      %v6002 = vxor.u32 %v5970, 2147483648
      %v6003 = vxor.u32 %v5971, 2147483648
      %v6004 = vxor.u32 %v5972, 2147483648
      %v6005 = vmul.f32 %v5973, 1.442695
      %v6006 = vpow.pop %v6005
      %v6007 = vmul.f32 %v5974, 1.442695
      %v6008 = vpow.pop %v6007
      %v6009 = vmul.f32 %v5975, 1.442695
      %v6010 = vpow.pop %v6009
      %v6011 = vmul.f32 %v5976, 1.442695
      %v6012 = vpow.pop %v6011
      %v6013 = vmul.f32 %v5977, 1.442695
      %v6014 = vpow.pop %v6013
      %v6015 = vmul.f32 %v5978, 1.442695
      %v6016 = vpow.pop %v6015
      %v6017 = vmul.f32 %v5979, 1.442695
      %v6018 = vpow.pop %v6017
      %v6019 = vmul.f32 %v5980, 1.442695
      %v6020 = vpow.pop %v6019
      %v6021 = vmul.f32 %v5981, 1.442695
      %v6022 = vpow.pop %v6021
      %v6023 = vmul.f32 %v5982, 1.442695
      %v6024 = vpow.pop %v6023
      %v6025 = vmul.f32 %v5983, 1.442695
      %v6026 = vpow.pop %v6025
      %v6027 = vmul.f32 %v5984, 1.442695
      %v6028 = vpow.pop %v6027
      %v6029 = vmul.f32 %v5985, 1.442695
      %v6030 = vpow.pop %v6029
      %v6031 = vmul.f32 %v5986, 1.442695
      %v6032 = vpow.pop %v6031
      %v6033 = vmul.f32 %v5987, 1.442695
      %v6034 = vpow.pop %v6033
      %v6035 = vmul.f32 %v5988, 1.442695
      %v6036 = vpow.pop %v6035
      %v6037 = vmul.f32 %v5989, 1.442695
      %v6038 = vpow.pop %v6037
      %v6039 = vmul.f32 %v5990, 1.442695
      %v6040 = vpow.pop %v6039
      %v6041 = vmul.f32 %v5991, 1.442695
      %v6042 = vpow.pop %v6041
      %v6043 = vmul.f32 %v5992, 1.442695
      %v6044 = vpow.pop %v6043
      %v6045 = vmul.f32 %v5993, 1.442695
      %v6046 = vpow.pop %v6045
      %v6047 = vmul.f32 %v5994, 1.442695
      %v6048 = vpow.pop %v6047
      %v6049 = vmul.f32 %v5995, 1.442695
      %v6050 = vpow.pop %v6049
      %v6051 = vmul.f32 %v5996, 1.442695
      %v6052 = vpow.pop %v6051
      %v6053 = vmul.f32 %v5997, 1.442695
      %v6054 = vpow.pop %v6053
      %v6055 = vmul.f32 %v5998, 1.442695
      %v6056 = vpow.pop %v6055
      %v6057 = vmul.f32 %v5999, 1.442695
      %v6058 = vpow.pop %v6057
      %v6059 = vmul.f32 %v6000, 1.442695
      %v6060 = vpow.pop %v6059
      %v6061 = vmul.f32 %v6001, 1.442695
      %v6062 = vpow.pop %v6061
      %v6063 = vmul.f32 %v6002, 1.442695
      %v6064 = vpow.pop %v6063
      %v6065 = vmul.f32 %v6003, 1.442695
      %v6066 = vpow.pop %v6065
      %v6067 = vmul.f32 %v6004, 1.442695
      %v6068 = vpow.pop %v6067
      %v6069 = vadd.f32 %v6006, 1.0
      %v6070 = vadd.f32 %v6008, 1.0
      %v6071 = vadd.f32 %v6010, 1.0
      %v6072 = vadd.f32 %v6012, 1.0
      %v6073 = vadd.f32 %v6014, 1.0
      %v6074 = vadd.f32 %v6016, 1.0
      %v6075 = vadd.f32 %v6018, 1.0
      %v6076 = vadd.f32 %v6020, 1.0
      %v6077 = vadd.f32 %v6022, 1.0
      %v6078 = vadd.f32 %v6024, 1.0
      %v6079 = vadd.f32 %v6026, 1.0
      %v6080 = vadd.f32 %v6028, 1.0
      %v6081 = vadd.f32 %v6030, 1.0
      %v6082 = vadd.f32 %v6032, 1.0
      %v6083 = vadd.f32 %v6034, 1.0
      %v6084 = vadd.f32 %v6036, 1.0
      %v6085 = vadd.f32 %v6038, 1.0
      %v6086 = vadd.f32 %v6040, 1.0
      %v6087 = vadd.f32 %v6042, 1.0
      %v6088 = vadd.f32 %v6044, 1.0
      %v6089 = vadd.f32 %v6046, 1.0
      %v6090 = vadd.f32 %v6048, 1.0
      %v6091 = vadd.f32 %v6050, 1.0
      %v6092 = vadd.f32 %v6052, 1.0
      %v6093 = vadd.f32 %v6054, 1.0
      %v6094 = vadd.f32 %v6056, 1.0
      %v6095 = vadd.f32 %v6058, 1.0
      %v6096 = vadd.f32 %v6060, 1.0
      %v6097 = vadd.f32 %v6062, 1.0
      %v6098 = vadd.f32 %v6064, 1.0
      %v6099 = vadd.f32 %v6066, 1.0
      %v6100 = vadd.f32 %v6068, 1.0
      %v6101 = vrcp.pop %v6069
      %v6102 = vmul.f32 1.0, %v6101
      %v6103 = vrcp.pop %v6070
      %v6104 = vmul.f32 1.0, %v6103
      %v6105 = vrcp.pop %v6071
      %v6106 = vmul.f32 1.0, %v6105
      %v6107 = vrcp.pop %v6072
      %v6108 = vmul.f32 1.0, %v6107
      %v6109 = vrcp.pop %v6073
      %v6110 = vmul.f32 1.0, %v6109
      %v6111 = vrcp.pop %v6074
      %v6112 = vmul.f32 1.0, %v6111
      %v6113 = vrcp.pop %v6075
      %v6114 = vmul.f32 1.0, %v6113
      %v6115 = vrcp.pop %v6076
      %v6116 = vmul.f32 1.0, %v6115
      %v6117 = vrcp.pop %v6077
      %v6118 = vmul.f32 1.0, %v6117
      %v6119 = vrcp.pop %v6078
      %v6120 = vmul.f32 1.0, %v6119
      %v6121 = vrcp.pop %v6079
      %v6122 = vmul.f32 1.0, %v6121
      %v6123 = vrcp.pop %v6080
      %v6124 = vmul.f32 1.0, %v6123
      %v6125 = vrcp.pop %v6081
      %v6126 = vmul.f32 1.0, %v6125
      %v6127 = vrcp.pop %v6082
      %v6128 = vmul.f32 1.0, %v6127
      %v6129 = vrcp.pop %v6083
      %v6130 = vmul.f32 1.0, %v6129
      %v6131 = vrcp.pop %v6084
      %v6132 = vmul.f32 1.0, %v6131
      %v6133 = vrcp.pop %v6085
      %v6134 = vmul.f32 1.0, %v6133
      %v6135 = vrcp.pop %v6086
      %v6136 = vmul.f32 1.0, %v6135
      %v6137 = vrcp.pop %v6087
      %v6138 = vmul.f32 1.0, %v6137
      %v6139 = vrcp.pop %v6088
      %v6140 = vmul.f32 1.0, %v6139
      %v6141 = vrcp.pop %v6089
      %v6142 = vmul.f32 1.0, %v6141
      %v6143 = vrcp.pop %v6090
      %v6144 = vmul.f32 1.0, %v6143
      %v6145 = vrcp.pop %v6091
      %v6146 = vmul.f32 1.0, %v6145
      %v6147 = vrcp.pop %v6092
      %v6148 = vmul.f32 1.0, %v6147
      %v6149 = vrcp.pop %v6093
      %v6150 = vmul.f32 1.0, %v6149
      %v6151 = vrcp.pop %v6094
      %v6152 = vmul.f32 1.0, %v6151
      %v6153 = vrcp.pop %v6095
      %v6154 = vmul.f32 1.0, %v6153
      %v6155 = vrcp.pop %v6096
      %v6156 = vmul.f32 1.0, %v6155
      %v6157 = vrcp.pop %v6097
      %v6158 = vmul.f32 1.0, %v6157
      %v6159 = vrcp.pop %v6098
      %v6160 = vmul.f32 1.0, %v6159
      %v6161 = vrcp.pop %v6099
      %v6162 = vmul.f32 1.0, %v6161
      %v6163 = vrcp.pop %v6100
      %v6164 = vmul.f32 1.0, %v6163
      %v6165 = vmul.f32 %v5941, %v6102
      %v6166 = vmul.f32 %v5942, %v6104
      %v6167 = vmul.f32 %v5943, %v6106
      %v6168 = vmul.f32 %v5944, %v6108
      %v6169 = vmul.f32 %v5945, %v6110
      %v6170 = vmul.f32 %v5946, %v6112
      %v6171 = vmul.f32 %v5947, %v6114
      %v6172 = vmul.f32 %v5948, %v6116
      %v6173 = vmul.f32 %v5949, %v6118
      %v6174 = vmul.f32 %v5950, %v6120
      %v6175 = vmul.f32 %v5951, %v6122
      %v6176 = vmul.f32 %v5952, %v6124
      %v6177 = vmul.f32 %v5953, %v6126
      %v6178 = vmul.f32 %v5954, %v6128
      %v6179 = vmul.f32 %v5955, %v6130
      %v6180 = vmul.f32 %v5956, %v6132
      %v6181 = vmul.f32 %v5957, %v6134
      %v6182 = vmul.f32 %v5958, %v6136
      %v6183 = vmul.f32 %v5959, %v6138
      %v6184 = vmul.f32 %v5960, %v6140
      %v6185 = vmul.f32 %v5961, %v6142
      %v6186 = vmul.f32 %v5962, %v6144
      %v6187 = vmul.f32 %v5963, %v6146
      %v6188 = vmul.f32 %v5964, %v6148
      %v6189 = vmul.f32 %v5965, %v6150
      %v6190 = vmul.f32 %v5966, %v6152
      %v6191 = vmul.f32 %v5967, %v6154
      %v6192 = vmul.f32 %v5968, %v6156
      %v6193 = vmul.f32 %v5969, %v6158
      %v6194 = vmul.f32 %v5970, %v6160
      %v6195 = vmul.f32 %v5971, %v6162
      %v6196 = vmul.f32 %v5972, %v6164
      %vm6197 = vcmask 64512
      %6198 = vst.msk [vmem:[%s548] sm:$0xff] %vm6197, %v6165
      %6199 = vst.msk [vmem:[%s548 + $0x8] sm:$0xff] %vm6197, %v6166
      %6200 = vst.msk [vmem:[%s548 + $0x10] sm:$0xff] %vm6197, %v6167
      %6201 = vst.msk [vmem:[%s548 + $0x18] sm:$0xff] %vm6197, %v6168
      %6202 = vst.msk [vmem:[%s548 + $0x20] sm:$0xff] %vm6197, %v6169
      %6203 = vst.msk [vmem:[%s548 + $0x28] sm:$0xff] %vm6197, %v6170
      %6204 = vst.msk [vmem:[%s548 + $0x30] sm:$0xff] %vm6197, %v6171
      %6205 = vst.msk [vmem:[%s548 + $0x38] sm:$0xff] %vm6197, %v6172
      %6206 = vst.msk [vmem:[%s548 + $0x40] sm:$0xff] %vm6197, %v6173
      %6207 = vst.msk [vmem:[%s548 + $0x48] sm:$0xff] %vm6197, %v6174
      %6208 = vst.msk [vmem:[%s548 + $0x50] sm:$0xff] %vm6197, %v6175
      %6209 = vst.msk [vmem:[%s548 + $0x58] sm:$0xff] %vm6197, %v6176
      %6210 = vst.msk [vmem:[%s548 + $0x60] sm:$0xff] %vm6197, %v6177
      %6211 = vst.msk [vmem:[%s548 + $0x68] sm:$0xff] %vm6197, %v6178
      %6212 = vst.msk [vmem:[%s548 + $0x70] sm:$0xff] %vm6197, %v6179
      %6213 = vst.msk [vmem:[%s548 + $0x78] sm:$0xff] %vm6197, %v6180
      %6214 = vst.msk [vmem:[%s548 + $0x80] sm:$0xff] %vm6197, %v6181
      %6215 = vst.msk [vmem:[%s548 + $0x88] sm:$0xff] %vm6197, %v6182
      %6216 = vst.msk [vmem:[%s548 + $0x90] sm:$0xff] %vm6197, %v6183
      %6217 = vst.msk [vmem:[%s548 + $0x98] sm:$0xff] %vm6197, %v6184
      %6218 = vst.msk [vmem:[%s548 + $0xa0] sm:$0xff] %vm6197, %v6185
      %6219 = vst.msk [vmem:[%s548 + $0xa8] sm:$0xff] %vm6197, %v6186
      %6220 = vst.msk [vmem:[%s548 + $0xb0] sm:$0xff] %vm6197, %v6187
      %6221 = vst.msk [vmem:[%s548 + $0xb8] sm:$0xff] %vm6197, %v6188
      %6222 = vst.msk [vmem:[%s548 + $0xc0] sm:$0xff] %vm6197, %v6189
      %6223 = vst.msk [vmem:[%s548 + $0xc8] sm:$0xff] %vm6197, %v6190
      %6224 = vst.msk [vmem:[%s548 + $0xd0] sm:$0xff] %vm6197, %v6191
      %6225 = vst.msk [vmem:[%s548 + $0xd8] sm:$0xff] %vm6197, %v6192
      %6226 = vst.msk [vmem:[%s548 + $0xe0] sm:$0xff] %vm6197, %v6193
      %6227 = vst.msk [vmem:[%s548 + $0xe8] sm:$0xff] %vm6197, %v6194
      %6228 = vst.msk [vmem:[%s548 + $0xf0] sm:$0xff] %vm6197, %v6195
      %6229 = vst.msk [vmem:[%s548 + $0xf8] sm:$0xff] %vm6197, %v6196
      %p6230 = scmp.lt.s32.totalorder %s28, 1
      %s6231 = scalar_select %p6230, %s28, 1
      %s6232 = smul.addr %s6231, 32
      %s6233 = smul.addr %s6232, 8
      %s6234 = scalar_lea.vmem %s17, %s6233
      // Predicated region
      $region89: #{c3_forward.1} parent=87 // pred_check
        %p6235 = pneg %p408
      $region90: #{c3_forward.1} parent=87 // pred_check_branch
        %6237 = sbr.rel (%p6235) target = $region92
      $region91: #{c3_forward.1} parent=87 // pred_region
        _
      $region92: #{c3_forward.1} parent=87 // pred_fallthru
        _
    $region88: #{c3_forward.1} parent=5 // pred_fallthru
      _
    %p6238 = scmp.le.s32.totalorder 2, %s23
    // Predicated region
    $region93: #{c3_forward.1} parent=5 // pred_check
      %p6239 = pneg %p6238
    $region94: #{c3_forward.1} parent=5 // pred_check_branch
      %6241 = sbr.rel (%p6239) target = $region96
    $region95: #{c3_forward.1} parent=5 // pred_region
      %s6242 = ssub.s32 %s23, 2
      // Predicated region
      $region97: #{c3_forward.1} parent=95 // pred_check
        %p6243 = pneg %p414
      $region98: #{c3_forward.1} parent=95 // pred_check_branch
        %6245 = sbr.rel (%p6243) target = $region100
      $region99: #{c3_forward.1} parent=95 // pred_region
        %p6246 = scmp.lt.s32.totalorder %s29, 1
        %s6247 = scalar_select %p6246, %s29, 1
        %s6248 = smul.addr %s6247, 32
        %s6249 = smul.addr %s6248, 8
        %s6250 = scalar_lea.vmem %s17, %s6249
      $region100: #{c3_forward.1} parent=95 // pred_fallthru
        _
    $region96: #{c3_forward.1} parent=5 // pred_fallthru
      _
  $region6: #{c3_forward.1} parent=0 // loop_footer
    %s27 = sadd.s32 1, %s23
  $region7: #{c3_forward.1} parent=0 // loop_footer_branch
    %22 = sbr.rel target = $region3
  $region8: #{c3_forward.1} parent=0 // loop_exit
    _

</llo_original>
